<compile_context>
chip_gen: v7x
topology: tpu7x:2x2x1
jax: 0.10.0
libtpu: 0.0.40
codegen_flags: <defaults>
</compile_context>

<pallas_src>
import functools
import math

import numpy as np
import jax
import jax.numpy as jnp
from jax.experimental import pallas as pl
from jax.experimental.pallas import tpu as pltpu

EPS = 1e-5
LANE = 128


def _round_up(x, m):
    return (x + m - 1) // m * m


# ----------------------------- Pallas kernel -------------------------------

def _basic_block_kernel(x_ref, w1_ref, sb1_ref, w2_ref, sb2_ref, *rest,
                        Ho, Wo, Cin, Cout, stride, has_proj):
    """Fused BasicBlock forward for one batch element.

    x_ref  : (1, Hs, Ws, s*s*Cin) bf16  zero-padded input; for stride>1 it is
             space-to-depth'd in the wrapper so every tap is a contiguous
             stride-1 slice whose phase is a lane-aligned channel offset.
    w1_ref : (9*Cin, Cout)  bf16   im2col weights of conv1
    sb1_ref: (2, Cout)      f32    folded BN1 (row0 = scale, row1 = bias)
    w2_ref : (9*Cout, Cout) bf16   im2col weights of conv2
    sb2_ref: (2, Cout)      f32    folded BN2
    [wsc_ref: (Cin, Cout) bf16, sbsc_ref: (2, Cout) f32]  only if has_proj
    o_ref  : (1, Ho, Wo, Cout) f32
    y_scr  : (Ho+2, Wo+2, Cout) bf16 VMEM scratch: stage-1 activation + halo
    """
    if has_proj:
        wsc_ref, sbsc_ref, o_ref, y_scr = rest
    else:
        o_ref, y_scr = rest
    s = stride

    # ---- stage 1: conv1 (stride s) + BN1 + ReLU, kept resident in VMEM ----
    taps = []
    for kh in range(3):
        for kw in range(3):
            ph = (kh % s) * s + (kw % s)          # spatial phase -> lane group
            taps.append(x_ref[0,
                              kh // s:kh // s + Ho,
                              kw // s:kw // s + Wo,
                              ph * Cin:(ph + 1) * Cin])
    patches1 = jnp.concatenate(taps, axis=-1).reshape(Ho * Wo, 9 * Cin)
    acc1 = jnp.dot(patches1, w1_ref[...], preferred_element_type=jnp.float32)
    out1 = jnp.maximum(acc1 * sb1_ref[0:1, :] + sb1_ref[1:2, :], 0.0)

    # write stage-1 activation with a zero halo into the VMEM scratch
    out1 = out1.reshape(Ho, Wo, Cout).astype(y_scr.dtype)
    zr = jnp.zeros((1, Wo, Cout), y_scr.dtype)
    zc = jnp.zeros((Ho + 2, 1, Cout), y_scr.dtype)
    y_scr[...] = jnp.concatenate(
        [zc, jnp.concatenate([zr, out1, zr], axis=0), zc], axis=1)

    # ---- stage 2: conv2 (stride 1) + BN2 ------------------------------------
    taps2 = [y_scr[kh:kh + Ho, kw:kw + Wo, :]
             for kh in range(3) for kw in range(3)]
    patches2 = jnp.concatenate(taps2, axis=-1).reshape(Ho * Wo, 9 * Cout)
    acc2 = jnp.dot(patches2, w2_ref[...], preferred_element_type=jnp.float32)
    out2 = acc2 * sb2_ref[0:1, :] + sb2_ref[1:2, :]

    # ---- shortcut (strided input pixel == spatial phase of tap (1, 1)) ------
    ph = (1 % s) * s + (1 % s)
    xs = x_ref[0,
               1 // s:1 // s + Ho,
               1 // s:1 // s + Wo,
               ph * Cin:(ph + 1) * Cin].reshape(Ho * Wo, Cin)
    if has_proj:
        sc = jnp.dot(xs, wsc_ref[...], preferred_element_type=jnp.float32)
        sc = sc * sbsc_ref[0:1, :] + sbsc_ref[1:2, :]
    else:
        sc = xs.astype(jnp.float32)               # identity (Cin == Cout here)

    out = jnp.maximum(out2 + sc, 0.0)
    o_ref[...] = out.reshape(1, Ho, Wo, Cout).astype(o_ref.dtype)


# ------------------------------ wrapper glue --------------------------------

def _fold_bn(bn):
    gamma, beta, mean, var = bn
    scale = gamma / jnp.sqrt(var + EPS)
    bias = beta - mean * scale
    return jnp.stack([scale, bias]).astype(jnp.float32)


def basic_block_forward(x_nchw, params, stride):
    """Pallas implementation of BasicBlock.forward. Input/output are NCHW f32."""
    x = jnp.transpose(x_nchw, (0, 2, 3, 1)).astype(jnp.float32)   # -> NHWC
    N, H, W, Cin = x.shape
    Cout = params["w1"].shape[0]
    Ho = (H - 1) // stride + 1
    Wo = (W - 1) // stride + 1
    Cin_p = _round_up(Cin, LANE)                  # lane-dense channel padding
    Cout_p = _round_up(Cout, LANE)
    has_proj = params["wsc"] is not None

    # --- weights: OIHW -> (kh, kw, ci, co), channel-padded, im2col-flattened,
    # cast to bf16 for the MXU (accumulation stays f32 in the kernel).
    def conv3_w(w, ci_p, co_p):
        w = jnp.transpose(w, (2, 3, 1, 0))                         # (3,3,ci,co)
        w = jnp.pad(w, ((0, 0), (0, 0),
                        (0, ci_p - w.shape[2]), (0, co_p - w.shape[3])))
        return w.reshape(9 * ci_p, co_p).astype(jnp.bfloat16)

    w1 = conv3_w(params["w1"], Cin_p, Cout_p)
    w2 = conv3_w(params["w2"], Cout_p, Cout_p)
    sb1 = jnp.pad(_fold_bn(params["bn1"]), ((0, 0), (0, Cout_p - Cout)))
    sb2 = jnp.pad(_fold_bn(params["bn2"]), ((0, 0), (0, Cout_p - Cout)))

    # --- input: zero halo + channel-lane padding; for stride>1 a single
    # space-to-depth so the kernel only does contiguous stride-1 reads.
    if stride == 1:
        x_in = jnp.pad(x, ((0, 0), (1, 1), (1, 1), (0, Cin_p - Cin)))
        x_in = x_in.astype(jnp.bfloat16)
    else:
        s = stride
        Hp = s * (Ho - 1) + s * math.ceil(3 / s)
        Wp = s * (Wo - 1) + s * math.ceil(3 / s)
        xp = jnp.pad(x, ((0, 0), (1, Hp - H - 1), (1, Wp - W - 1),
                         (0, Cin_p - Cin)))
        xp = xp.reshape(N, Hp // s, s, Wp // s, s, Cin_p)
        x_in = jnp.transpose(xp, (0, 1, 3, 2, 4, 5)).reshape(
            N, Hp // s, Wp // s, s * s * Cin_p).astype(jnp.bfloat16)

    inputs = [x_in, w1, sb1, w2, sb2]
    in_specs = [
        pl.BlockSpec((1,) + x_in.shape[1:], lambda n: (n, 0, 0, 0)),
        pl.BlockSpec(w1.shape, lambda n: (0, 0)),
        pl.BlockSpec(sb1.shape, lambda n: (0, 0)),
        pl.BlockSpec(w2.shape, lambda n: (0, 0)),
        pl.BlockSpec(sb2.shape, lambda n: (0, 0)),
    ]
    if has_proj:
        wsc = params["wsc"][:, :, 0, 0].T                          # (Cin, Cout)
        wsc = jnp.pad(wsc, ((0, Cin_p - Cin), (0, Cout_p - Cout)))
        wsc = wsc.astype(jnp.bfloat16)
        sbsc = jnp.pad(_fold_bn(params["bnsc"]), ((0, 0), (0, Cout_p - Cout)))
        inputs += [wsc, sbsc]
        in_specs += [pl.BlockSpec(wsc.shape, lambda n: (0, 0)),
                     pl.BlockSpec(sbsc.shape, lambda n: (0, 0))]

    kern = functools.partial(_basic_block_kernel, Ho=Ho, Wo=Wo, Cin=Cin_p,
                             Cout=Cout_p, stride=stride, has_proj=has_proj)
    out = pl.pallas_call(
        kern,
        out_shape=jax.ShapeDtypeStruct((N, Ho, Wo, Cout_p), jnp.float32),
        grid=(N,),
        in_specs=in_specs,
        out_specs=pl.BlockSpec((1, Ho, Wo, Cout_p), lambda n: (n, 0, 0, 0)),
        scratch_shapes=[pltpu.VMEM((Ho + 2, Wo + 2, Cout_p), jnp.bfloat16)],
        compiler_params=pltpu.CompilerParams(
            dimension_semantics=("parallel",)),
    )(*inputs)

    out = out[:, :, :, :Cout]                      # drop channel-lane padding
    # Kept f32 + NCHW for parity with the PyTorch module; a full network would
    # stay NHWC (and could emit bf16) across blocks.
    return jnp.transpose(out, (0, 3, 1, 2))


# --------------------- deterministic parameter creation ---------------------

def init_params(key, cin, cout, stride):
    ks = jax.random.split(key, 16)

    def conv_w(k, co, ci, kh, kw):
        return 0.1 * jax.random.normal(k, (co, ci, kh, kw), jnp.float32)

    def bn_p(k, c):
        k1, k2, k3, k4 = jax.random.split(k, 4)
        gamma = 1.0 + 0.1 * jax.random.normal(k1, (c,), jnp.float32)
        beta = 0.1 * jax.random.normal(k2, (c,), jnp.float32)
        mean = 0.1 * jax.random.normal(k3, (c,), jnp.float32)
        var = jnp.abs(jax.random.normal(k4, (c,), jnp.float32)) + 0.5
        return (gamma, beta, mean, var)

    params = {
        "w1": conv_w(ks[0], cout, cin, 3, 3),
        "bn1": bn_p(ks[1], cout),
        "w2": conv_w(ks[2], cout, cout, 3, 3),
        "bn2": bn_p(ks[3], cout),
        "wsc": None,
        "bnsc": None,
    }
    if stride != 1 or cin != cout:
        params["wsc"] = conv_w(ks[4], cout, cin, 1, 1)
        params["bnsc"] = bn_p(ks[5], cout)
    return params


# ---------------------------- pure-JAX reference ----------------------------

def ref_forward(x_nchw, p, stride):
    def bn(x, bnp):
        g, b, m, v = bnp
        s = (g / jnp.sqrt(v + EPS))[None, :, None, None]
        return (x - m[None, :, None, None]) * s + b[None, :, None, None]

    def conv(x, w, s, pad):
        return jax.lax.conv_general_dilated(
            x, w, (s, s), pad, dimension_numbers=("NCHW", "OIHW", "NCHW"))

    out = jax.nn.relu(bn(conv(x_nchw, p["w1"], stride, ((1, 1), (1, 1))), p["bn1"]))
    out = bn(conv(out, p["w2"], 1, ((1, 1), (1, 1))), p["bn2"])
    if p["wsc"] is not None:
        sc = bn(conv(x_nchw, p["wsc"], stride, ((0, 0), (0, 0))), p["bnsc"])
    else:
        sc = x_nchw
    return jax.nn.relu(out + sc)


# ---------------------------------- main -------------------------------------

if __name__ == "__main__":
    key = jax.random.PRNGKey(0)

    # (Cin, Cout, stride): projection shortcut, identity shortcut, strided block
    configs = [(4, 8, 1), (8, 8, 1), (4, 8, 2)]
    N, H, W = 2, 16, 16

    for i, (cin, cout, stride) in enumerate(configs):
        k_x, k_p = jax.random.split(jax.random.fold_in(key, i))
        x = jax.random.normal(k_x, (N, cin, H, W), jnp.float32)
        params = init_params(k_p, cin, cout, stride)

        out = jax.block_until_ready(basic_block_forward(x, params, stride))
        ref = jax.block_until_ready(ref_forward(x, params, stride))
        assert out.shape == ref.shape, (out.shape, ref.shape)
        # tolerance accounts for bf16 MXU operands (accumulation is f32)
        np.testing.assert_allclose(np.asarray(out), np.asarray(ref),
                                   rtol=5e-2, atol=5e-2)

    print("KERNEL_OK")
</pallas_src>

<mosaic_0001>
module attributes {stable_mosaic.version = 11 : i64} {
  func.func @_basic_block_kernel(%arg0: i32, %arg1: memref<1x18x18x128xbf16, #tpu.memory_space<vmem>>, %arg2: memref<1152x128xbf16, #tpu.memory_space<vmem>>, %arg3: memref<2x128xf32, #tpu.memory_space<vmem>>, %arg4: memref<1152x128xbf16, #tpu.memory_space<vmem>>, %arg5: memref<2x128xf32, #tpu.memory_space<vmem>>, %arg6: memref<128x128xbf16, #tpu.memory_space<vmem>>, %arg7: memref<2x128xf32, #tpu.memory_space<vmem>>, %arg8: memref<1x16x16x128xf32, #tpu.memory_space<vmem>>, %arg9: memref<18x18x128xbf16, #tpu.memory_space<vmem>>) attributes {dimension_semantics = [#tpu.dimension_semantics<parallel>], iteration_bounds = array<i64: 2>, scalar_prefetch = 0 : i64, scratch_operands = 1 : i64, tpu.core_type = #tpu.core_type<tc>, window_params = [{transform_indices = @transform_0, window_bounds = array<i64: 1, 18, 18, 128>}, {pipeline_mode = #tpu.pipeline_mode<synchronous>, transform_indices = @transform_1, window_bounds = array<i64: 1152, 128>}, {pipeline_mode = #tpu.pipeline_mode<synchronous>, transform_indices = @transform_2, window_bounds = array<i64: 2, 128>}, {pipeline_mode = #tpu.pipeline_mode<synchronous>, transform_indices = @transform_3, window_bounds = array<i64: 1152, 128>}, {pipeline_mode = #tpu.pipeline_mode<synchronous>, transform_indices = @transform_4, window_bounds = array<i64: 2, 128>}, {pipeline_mode = #tpu.pipeline_mode<synchronous>, transform_indices = @transform_5, window_bounds = array<i64: 128, 128>}, {pipeline_mode = #tpu.pipeline_mode<synchronous>, transform_indices = @transform_6, window_bounds = array<i64: 2, 128>}, {transform_indices = @transform_7, window_bounds = array<i64: 1, 16, 16, 128>}]} {
    %c0 = arith.constant 0 : index
    %c0_0 = arith.constant 0 : index
    %c0_1 = arith.constant 0 : index
    %c0_2 = arith.constant 0 : index
    %0 = vector.load %arg1[%c0, %c0_0, %c0_1, %c0_2] : memref<1x18x18x128xbf16, #tpu.memory_space<vmem>>, vector<1x16x16x128xbf16>
    %1 = vector.shape_cast %0 : vector<1x16x16x128xbf16> to vector<16x16x128xbf16>
    %c0_3 = arith.constant 0 : index
    %c0_4 = arith.constant 0 : index
    %c1 = arith.constant 1 : index
    %c0_5 = arith.constant 0 : index
    %2 = vector.load %arg1[%c0_3, %c0_4, %c1, %c0_5] : memref<1x18x18x128xbf16, #tpu.memory_space<vmem>>, vector<1x16x16x128xbf16>
    %3 = vector.shape_cast %2 : vector<1x16x16x128xbf16> to vector<16x16x128xbf16>
    %c0_6 = arith.constant 0 : index
    %c0_7 = arith.constant 0 : index
    %c2 = arith.constant 2 : index
    %c0_8 = arith.constant 0 : index
    %4 = vector.load %arg1[%c0_6, %c0_7, %c2, %c0_8] : memref<1x18x18x128xbf16, #tpu.memory_space<vmem>>, vector<1x16x16x128xbf16>
    %5 = vector.shape_cast %4 : vector<1x16x16x128xbf16> to vector<16x16x128xbf16>
    %c0_9 = arith.constant 0 : index
    %c1_10 = arith.constant 1 : index
    %c0_11 = arith.constant 0 : index
    %c0_12 = arith.constant 0 : index
    %6 = vector.load %arg1[%c0_9, %c1_10, %c0_11, %c0_12] : memref<1x18x18x128xbf16, #tpu.memory_space<vmem>>, vector<1x16x16x128xbf16>
    %7 = vector.shape_cast %6 : vector<1x16x16x128xbf16> to vector<16x16x128xbf16>
    %c0_13 = arith.constant 0 : index
    %c1_14 = arith.constant 1 : index
    %c1_15 = arith.constant 1 : index
    %c0_16 = arith.constant 0 : index
    %8 = vector.load %arg1[%c0_13, %c1_14, %c1_15, %c0_16] : memref<1x18x18x128xbf16, #tpu.memory_space<vmem>>, vector<1x16x16x128xbf16>
    %9 = vector.shape_cast %8 : vector<1x16x16x128xbf16> to vector<16x16x128xbf16>
    %c0_17 = arith.constant 0 : index
    %c1_18 = arith.constant 1 : index
    %c2_19 = arith.constant 2 : index
    %c0_20 = arith.constant 0 : index
    %10 = vector.load %arg1[%c0_17, %c1_18, %c2_19, %c0_20] : memref<1x18x18x128xbf16, #tpu.memory_space<vmem>>, vector<1x16x16x128xbf16>
    %11 = vector.shape_cast %10 : vector<1x16x16x128xbf16> to vector<16x16x128xbf16>
    %c0_21 = arith.constant 0 : index
    %c2_22 = arith.constant 2 : index
    %c0_23 = arith.constant 0 : index
    %c0_24 = arith.constant 0 : index
    %12 = vector.load %arg1[%c0_21, %c2_22, %c0_23, %c0_24] : memref<1x18x18x128xbf16, #tpu.memory_space<vmem>>, vector<1x16x16x128xbf16>
    %13 = vector.shape_cast %12 : vector<1x16x16x128xbf16> to vector<16x16x128xbf16>
    %c0_25 = arith.constant 0 : index
    %c2_26 = arith.constant 2 : index
    %c1_27 = arith.constant 1 : index
    %c0_28 = arith.constant 0 : index
    %14 = vector.load %arg1[%c0_25, %c2_26, %c1_27, %c0_28] : memref<1x18x18x128xbf16, #tpu.memory_space<vmem>>, vector<1x16x16x128xbf16>
    %15 = vector.shape_cast %14 : vector<1x16x16x128xbf16> to vector<16x16x128xbf16>
    %c0_29 = arith.constant 0 : index
    %c2_30 = arith.constant 2 : index
    %c2_31 = arith.constant 2 : index
    %c0_32 = arith.constant 0 : index
    %16 = vector.load %arg1[%c0_29, %c2_30, %c2_31, %c0_32] : memref<1x18x18x128xbf16, #tpu.memory_space<vmem>>, vector<1x16x16x128xbf16>
    %17 = vector.shape_cast %16 : vector<1x16x16x128xbf16> to vector<16x16x128xbf16>
    %18 = tpu.concatenate %1, %3, %5, %7, %9, %11, %13, %15, %17 in 2 : vector<16x16x128xbf16>, vector<16x16x128xbf16>, vector<16x16x128xbf16>, vector<16x16x128xbf16>, vector<16x16x128xbf16>, vector<16x16x128xbf16>, vector<16x16x128xbf16>, vector<16x16x128xbf16>, vector<16x16x128xbf16> -> vector<16x16x1152xbf16>
    %19 = vector.shape_cast %18 : vector<16x16x1152xbf16> to vector<256x1152xbf16>
    %c0_33 = arith.constant 0 : index
    %c0_34 = arith.constant 0 : index
    %20 = vector.load %arg2[%c0_33, %c0_34] : memref<1152x128xbf16, #tpu.memory_space<vmem>>, vector<1152x128xbf16>
    %cst = arith.constant dense<0.000000e+00> : vector<256x128xf32>
    %21 = tpu.matmul %19, %20, %cst {dimension_numbers = #tpu.dot_dimension_numbers<[1], [0], [0], [1], [0, 0, 1, 1], [], []>} : vector<256x1152xbf16>, vector<1152x128xbf16>, vector<256x128xf32> -> vector<256x128xf32>
    %c0_35 = arith.constant 0 : index
    %c0_36 = arith.constant 0 : index
    %22 = vector.load %arg3[%c0_35, %c0_36] : memref<2x128xf32, #tpu.memory_space<vmem>>, vector<1x128xf32>
    %23 = vector.broadcast %22 : vector<1x128xf32> to vector<256x128xf32>
    %24 = arith.mulf %21, %23 : vector<256x128xf32>
    %c1_37 = arith.constant 1 : index
    %c0_38 = arith.constant 0 : index
    %25 = vector.load %arg3[%c1_37, %c0_38] : memref<2x128xf32, #tpu.memory_space<vmem>>, vector<1x128xf32>
    %26 = vector.broadcast %25 : vector<1x128xf32> to vector<256x128xf32>
    %27 = arith.addf %24, %26 : vector<256x128xf32>
    %cst_39 = arith.constant 0.000000e+00 : f32
    %28 = vector.broadcast %cst_39 : f32 to vector<256x128xf32>
    %29 = arith.maximumf %27, %28 : vector<256x128xf32>
    %30 = vector.shape_cast %29 : vector<256x128xf32> to vector<16x16x128xf32>
    %31 = arith.truncf %30 : vector<16x16x128xf32> to vector<16x16x128xbf16>
    %cst_40 = arith.constant 0.000000e+00 : bf16
    %32 = vector.broadcast %cst_40 : bf16 to vector<1x16x128xbf16>
    %cst_41 = arith.constant 0.000000e+00 : bf16
    %33 = vector.broadcast %cst_41 : bf16 to vector<18x1x128xbf16>
    %34 = tpu.concatenate %32, %31, %32 in 0 : vector<1x16x128xbf16>, vector<16x16x128xbf16>, vector<1x16x128xbf16> -> vector<18x16x128xbf16>
    %35 = tpu.concatenate %33, %34, %33 in 1 : vector<18x1x128xbf16>, vector<18x16x128xbf16>, vector<18x1x128xbf16> -> vector<18x18x128xbf16>
    %c0_42 = arith.constant 0 : index
    %c0_43 = arith.constant 0 : index
    %c0_44 = arith.constant 0 : index
    %36 = vector.load %arg9[%c0_42, %c0_43, %c0_44] : memref<18x18x128xbf16, #tpu.memory_space<vmem>>, vector<18x18x128xbf16>
    tpu.vector_store %arg9[%c0_42, %c0_43, %c0_44], %35 {strides = array<i32>} : memref<18x18x128xbf16, #tpu.memory_space<vmem>>, vector<18x18x128xbf16>,
    %c0_45 = arith.constant 0 : index
    %c0_46 = arith.constant 0 : index
    %c0_47 = arith.constant 0 : index
    %37 = vector.load %arg9[%c0_45, %c0_46, %c0_47] : memref<18x18x128xbf16, #tpu.memory_space<vmem>>, vector<16x16x128xbf16>
    %c0_48 = arith.constant 0 : index
    %c1_49 = arith.constant 1 : index
    %c0_50 = arith.constant 0 : index
    %38 = vector.load %arg9[%c0_48, %c1_49, %c0_50] : memref<18x18x128xbf16, #tpu.memory_space<vmem>>, vector<16x16x128xbf16>
    %c0_51 = arith.constant 0 : index
    %c2_52 = arith.constant 2 : index
    %c0_53 = arith.constant 0 : index
    %39 = vector.load %arg9[%c0_51, %c2_52, %c0_53] : memref<18x18x128xbf16, #tpu.memory_space<vmem>>, vector<16x16x128xbf16>
    %c1_54 = arith.constant 1 : index
    %c0_55 = arith.constant 0 : index
    %c0_56 = arith.constant 0 : index
    %40 = vector.load %arg9[%c1_54, %c0_55, %c0_56] : memref<18x18x128xbf16, #tpu.memory_space<vmem>>, vector<16x16x128xbf16>
    %c1_57 = arith.constant 1 : index
    %c1_58 = arith.constant 1 : index
    %c0_59 = arith.constant 0 : index
    %41 = vector.load %arg9[%c1_57, %c1_58, %c0_59] : memref<18x18x128xbf16, #tpu.memory_space<vmem>>, vector<16x16x128xbf16>
    %c1_60 = arith.constant 1 : index
    %c2_61 = arith.constant 2 : index
    %c0_62 = arith.constant 0 : index
    %42 = vector.load %arg9[%c1_60, %c2_61, %c0_62] : memref<18x18x128xbf16, #tpu.memory_space<vmem>>, vector<16x16x128xbf16>
    %c2_63 = arith.constant 2 : index
    %c0_64 = arith.constant 0 : index
    %c0_65 = arith.constant 0 : index
    %43 = vector.load %arg9[%c2_63, %c0_64, %c0_65] : memref<18x18x128xbf16, #tpu.memory_space<vmem>>, vector<16x16x128xbf16>
    %c2_66 = arith.constant 2 : index
    %c1_67 = arith.constant 1 : index
    %c0_68 = arith.constant 0 : index
    %44 = vector.load %arg9[%c2_66, %c1_67, %c0_68] : memref<18x18x128xbf16, #tpu.memory_space<vmem>>, vector<16x16x128xbf16>
    %c2_69 = arith.constant 2 : index
    %c2_70 = arith.constant 2 : index
    %c0_71 = arith.constant 0 : index
    %45 = vector.load %arg9[%c2_69, %c2_70, %c0_71] : memref<18x18x128xbf16, #tpu.memory_space<vmem>>, vector<16x16x128xbf16>
    %46 = tpu.concatenate %37, %38, %39, %40, %41, %42, %43, %44, %45 in 2 : vector<16x16x128xbf16>, vector<16x16x128xbf16>, vector<16x16x128xbf16>, vector<16x16x128xbf16>, vector<16x16x128xbf16>, vector<16x16x128xbf16>, vector<16x16x128xbf16>, vector<16x16x128xbf16>, vector<16x16x128xbf16> -> vector<16x16x1152xbf16>
    %47 = vector.shape_cast %46 : vector<16x16x1152xbf16> to vector<256x1152xbf16>
    %c0_72 = arith.constant 0 : index
    %c0_73 = arith.constant 0 : index
    %48 = vector.load %arg4[%c0_72, %c0_73] : memref<1152x128xbf16, #tpu.memory_space<vmem>>, vector<1152x128xbf16>
    %cst_74 = arith.constant dense<0.000000e+00> : vector<256x128xf32>
    %49 = tpu.matmul %47, %48, %cst_74 {dimension_numbers = #tpu.dot_dimension_numbers<[1], [0], [0], [1], [0, 0, 1, 1], [], []>} : vector<256x1152xbf16>, vector<1152x128xbf16>, vector<256x128xf32> -> vector<256x128xf32>
    %c0_75 = arith.constant 0 : index
    %c0_76 = arith.constant 0 : index
    %50 = vector.load %arg5[%c0_75, %c0_76] : memref<2x128xf32, #tpu.memory_space<vmem>>, vector<1x128xf32>
    %51 = vector.broadcast %50 : vector<1x128xf32> to vector<256x128xf32>
    %52 = arith.mulf %49, %51 : vector<256x128xf32>
    %c1_77 = arith.constant 1 : index
    %c0_78 = arith.constant 0 : index
    %53 = vector.load %arg5[%c1_77, %c0_78] : memref<2x128xf32, #tpu.memory_space<vmem>>, vector<1x128xf32>
    %54 = vector.broadcast %53 : vector<1x128xf32> to vector<256x128xf32>
    %55 = arith.addf %52, %54 : vector<256x128xf32>
    %c0_79 = arith.constant 0 : index
    %c1_80 = arith.constant 1 : index
    %c1_81 = arith.constant 1 : index
    %c0_82 = arith.constant 0 : index
    %56 = vector.load %arg1[%c0_79, %c1_80, %c1_81, %c0_82] : memref<1x18x18x128xbf16, #tpu.memory_space<vmem>>, vector<1x16x16x128xbf16>
    %57 = vector.shape_cast %56 : vector<1x16x16x128xbf16> to vector<16x16x128xbf16>
    %58 = vector.shape_cast %57 : vector<16x16x128xbf16> to vector<256x128xbf16>
    %c0_83 = arith.constant 0 : index
    %c0_84 = arith.constant 0 : index
    %59 = vector.load %arg6[%c0_83, %c0_84] : memref<128x128xbf16, #tpu.memory_space<vmem>>, vector<128x128xbf16>
    %cst_85 = arith.constant dense<0.000000e+00> : vector<256x128xf32>
    %60 = tpu.matmul %58, %59, %cst_85 {dimension_numbers = #tpu.dot_dimension_numbers<[1], [0], [0], [1], [0, 0, 1, 1], [], []>} : vector<256x128xbf16>, vector<128x128xbf16>, vector<256x128xf32> -> vector<256x128xf32>
    %c0_86 = arith.constant 0 : index
    %c0_87 = arith.constant 0 : index
    %61 = vector.load %arg7[%c0_86, %c0_87] : memref<2x128xf32, #tpu.memory_space<vmem>>, vector<1x128xf32>
    %62 = vector.broadcast %61 : vector<1x128xf32> to vector<256x128xf32>
    %63 = arith.mulf %60, %62 : vector<256x128xf32>
    %c1_88 = arith.constant 1 : index
    %c0_89 = arith.constant 0 : index
    %64 = vector.load %arg7[%c1_88, %c0_89] : memref<2x128xf32, #tpu.memory_space<vmem>>, vector<1x128xf32>
    %65 = vector.broadcast %64 : vector<1x128xf32> to vector<256x128xf32>
    %66 = arith.addf %63, %65 : vector<256x128xf32>
    %67 = arith.addf %55, %66 : vector<256x128xf32>
    %cst_90 = arith.constant 0.000000e+00 : f32
    %68 = vector.broadcast %cst_90 : f32 to vector<256x128xf32>
    %69 = arith.maximumf %67, %68 : vector<256x128xf32>
    %70 = vector.shape_cast %69 : vector<256x128xf32> to vector<1x16x16x128xf32>
    %c0_91 = arith.constant 0 : index
    %c0_92 = arith.constant 0 : index
    %c0_93 = arith.constant 0 : index
    %c0_94 = arith.constant 0 : index
    %71 = vector.load %arg8[%c0_91, %c0_92, %c0_93, %c0_94] : memref<1x16x16x128xf32, #tpu.memory_space<vmem>>, vector<1x16x16x128xf32>
    tpu.vector_store %arg8[%c0_91, %c0_92, %c0_93, %c0_94], %70 {strides = array<i32>} : memref<1x16x16x128xf32, #tpu.memory_space<vmem>>, vector<1x16x16x128xf32>,
    return
  }
  func.func @transform_0(%arg0: i32) -> (i32, i32, i32, i32) {
    %c0_i32 = arith.constant 0 : i32
    %c0_i32_0 = arith.constant 0 : i32
    %c0_i32_1 = arith.constant 0 : i32
    %c0_i32_2 = arith.constant 0 : i32
    return %arg0, %c0_i32, %c0_i32_0, %c0_i32_1 : i32, i32, i32, i32
  }
  func.func @transform_1(%arg0: i32) -> (i32, i32) {
    %c0_i32 = arith.constant 0 : i32
    %c0_i32_0 = arith.constant 0 : i32
    %c0_i32_1 = arith.constant 0 : i32
    return %c0_i32, %c0_i32_0 : i32, i32
  }
  func.func @transform_2(%arg0: i32) -> (i32, i32) {
    %c0_i32 = arith.constant 0 : i32
    %c0_i32_0 = arith.constant 0 : i32
    %c0_i32_1 = arith.constant 0 : i32
    return %c0_i32, %c0_i32_0 : i32, i32
  }
  func.func @transform_3(%arg0: i32) -> (i32, i32) {
    %c0_i32 = arith.constant 0 : i32
    %c0_i32_0 = arith.constant 0 : i32
    %c0_i32_1 = arith.constant 0 : i32
    return %c0_i32, %c0_i32_0 : i32, i32
  }
  func.func @transform_4(%arg0: i32) -> (i32, i32) {
    %c0_i32 = arith.constant 0 : i32
    %c0_i32_0 = arith.constant 0 : i32
    %c0_i32_1 = arith.constant 0 : i32
    return %c0_i32, %c0_i32_0 : i32, i32
  }
  func.func @transform_5(%arg0: i32) -> (i32, i32) {
    %c0_i32 = arith.constant 0 : i32
    %c0_i32_0 = arith.constant 0 : i32
    %c0_i32_1 = arith.constant 0 : i32
    return %c0_i32, %c0_i32_0 : i32, i32
  }
  func.func @transform_6(%arg0: i32) -> (i32, i32) {
    %c0_i32 = arith.constant 0 : i32
    %c0_i32_0 = arith.constant 0 : i32
    %c0_i32_1 = arith.constant 0 : i32
    return %c0_i32, %c0_i32_0 : i32, i32
  }
  func.func @transform_7(%arg0: i32) -> (i32, i32, i32, i32) {
    %c0_i32 = arith.constant 0 : i32
    %c0_i32_0 = arith.constant 0 : i32
    %c0_i32_1 = arith.constant 0 : i32
    %c0_i32_2 = arith.constant 0 : i32
    return %arg0, %c0_i32, %c0_i32_0, %c0_i32_1 : i32, i32, i32, i32
  }
}

</mosaic_0001>

<llo_original>
// kernel: tpu_custom_call.1
$region0: #{tpu_custom_call.1}
  #allocation0 [shape = 'u32[]', space=smem, size = 0x4, offset = 0x4, fixed_abs, tag = 'smem constant byte address 0x4 - core index']
  #allocation1 [shape = 'u32[144,128]{1,0:T(1,128)}', space=vmem, size = 0x12000, scoped, tag = 'internal scratch']
  #allocation2 [shape = 'bf16[18,18,128]{2,1,0:T(8,128)(2,1)}', space=vmem, size = 0x1b000, scoped, tag = 'scratch operand']
  %s0 = inlined_call_operand.vmem [shape: bf16[2,18,18,128], index: 0, kind: input, shape index: {}]
  %s1 = inlined_call_operand.vmem [shape: bf16[1152,128], index: 1, kind: input, shape index: {}]
  %s2 = inlined_call_operand.vmem [shape: f32[2,128], index: 2, kind: input, shape index: {}]
  %s3 = inlined_call_operand.hbm [shape: bf16[1152,128], index: 3, kind: input, shape index: {}]
  %s4 = inlined_call_operand.vmem [shape: f32[2,128], index: 4, kind: input, shape index: {}]
  %s5 = inlined_call_operand.vmem [shape: bf16[128,128], index: 5, kind: input, shape index: {}]
  %s6 = inlined_call_operand.vmem [shape: f32[2,128], index: 6, kind: input, shape index: {}]
  %s7 = inlined_call_operand.hbm [shape: f32[2,16,16,128], index: 7, kind: output, shape index: {}]
  %s8 = sld [smem:[#allocation0]]
  $region65: #{tpu_custom_call.1} parent=0
    _
  %s10 = ssub.s32 1, %s8
  %s11 = scalar_select 0, %s10, %s8
  $region1: #{tpu_custom_call.1} parent=0
    #allocation3 [shape = 'u8[294912]{0}', space=vmem, size = 0x48000, scoped, tag = 'input window, operand 3, single buffered']
    #allocation4 [shape = 's32[2]{0}', space=sflag, size = 0x8, scoped, tag = 'scoped memory for tpu_custom_call.1']
    #allocation5 [shape = 's32[2]{0}', space=sflag, size = 0x8, scoped, tag = 'scoped memory for tpu_custom_call.1']
    #allocation6 [shape = 'u8[262144]{0}', space=vmem, size = 0x40000, scoped, tag = 'output window, operand 0']
    %12 = vsyncpa [#allocation4], 0
    %13 = vsyncpa [#allocation5], 0
    %s14 = scalar_lea.sflag [#allocation5], 1
    %15 = vsyncpa %s14, 0
    loop: start=0, step=1, limit=4
    $region2: #{tpu_custom_call.1} parent=1 // loop_pre_header
      _
    $region3: #{tpu_custom_call.1} parent=1 // loop_header
      %s17 = sphi 0, %s21
      %p18 = scmp.ge.s32.totalorder %s17, 4
      %s27 = sphi 0, %s29
      %s30 = sphi 0, %s27
      %s31 = sphi 0, %s30
      %s47 = sphi 0, %s31
      %s51 = sphi 0, %s51
      %s53 = sphi 0, %s51
      %s54 = sphi 0, %s53
      %s68 = sphi 0, %s54
      %s72 = sphi 0, %s72
      %s74 = sphi 0, %s72
      %s75 = sphi 0, %s74
      %s89 = sphi 0, %s75
      %s93 = sphi 0, %s93
      %s95 = sphi 0, %s93
      %s96 = sphi 0, %s95
      %s110 = sphi 0, %s96
      %s114 = sphi 0, %s114
      %s116 = sphi 0, %s114
      %s117 = sphi 0, %s116
      %s131 = sphi 0, %s117
      %s135 = sphi 0, %s135
      %s137 = sphi 0, %s135
      %s138 = sphi 0, %s137
      %s152 = sphi 0, %s138
      %s156 = sphi 0, %s156
      %s158 = sphi 0, %s156
      %s159 = sphi 0, %s158
      %s173 = sphi 0, %s159
      %s179 = sphi 0, %s181
      %s182 = sphi 0, %s179
      %s183 = sphi 0, %s182
      %s199 = sphi 0, %s183
    $region4: #{tpu_custom_call.1} parent=1 // loop_header_branch
      %20 = sbr.rel (%p18) target = $region8
    $region5: #{tpu_custom_call.1} parent=1 // loop_body
      %s22 = ssub.s32 %s17, 1
      %s23 = ssub.s32 %s17, 2
      %s24 = sadd.s32 %s17, 1
      %s25 = ssub.s32 %s17, %s24
      %p26 = scmp.eq.s32.totalorder %s25, 0
      %s28 = sadd.s32 %s27, 1
      %s29 = scalar_select %p26, %s27, %s28
      %p32 = pneg %p26
      %p33 = scmp.eq.s32.totalorder %s17, 1
      %p34 = por %p32, %p33
      %p35 = scmp.ne.s32.totalorder %s27, %s30
      %p36 = scmp.eq.s32.totalorder %s17, 0
      %p37 = por %p35, %p36
      %p38 = scmp.ne.s32.totalorder %s27, %s30
      %p39 = scmp.eq.s32.totalorder %s22, 1
      %p40 = por %p38, %p39
      %p41 = scmp.ne.s32.totalorder %s30, %s31
      %p42 = scmp.eq.s32.totalorder %s22, 0
      %p43 = por %p41, %p42
      %p44 = scmp.ne.s32.totalorder %s30, %s31
      %p45 = scmp.eq.s32.totalorder %s23, 1
      %p46 = por %p44, %p45
      %p48 = scmp.ne.s32.totalorder %s31, %s47
      %p49 = scmp.eq.s32.totalorder %s23, 0
      %p50 = por %p48, %p49
      %s52 = sadd.s32 %s51, 1
      %p55 = scmp.eq.s32.totalorder %s17, 1
      %p56 = scmp.ne.s32.totalorder %s51, %s53
      %p57 = scmp.eq.s32.totalorder %s17, 0
      %p58 = por %p56, %p57
      %p59 = scmp.ne.s32.totalorder %s51, %s53
      %p60 = scmp.eq.s32.totalorder %s22, 1
      %p61 = por %p59, %p60
      %p62 = scmp.ne.s32.totalorder %s53, %s54
      %p63 = scmp.eq.s32.totalorder %s22, 0
      %p64 = por %p62, %p63
      %p65 = scmp.ne.s32.totalorder %s53, %s54
      %p66 = scmp.eq.s32.totalorder %s23, 1
      %p67 = por %p65, %p66
      %p69 = scmp.ne.s32.totalorder %s54, %s68
      %p70 = scmp.eq.s32.totalorder %s23, 0
      %p71 = por %p69, %p70
      %s73 = sadd.s32 %s72, 1
      %p76 = scmp.eq.s32.totalorder %s17, 1
      %p77 = scmp.ne.s32.totalorder %s72, %s74
      %p78 = scmp.eq.s32.totalorder %s17, 0
      %p79 = por %p77, %p78
      %p80 = scmp.ne.s32.totalorder %s72, %s74
      %p81 = scmp.eq.s32.totalorder %s22, 1
      %p82 = por %p80, %p81
      %p83 = scmp.ne.s32.totalorder %s74, %s75
      %p84 = scmp.eq.s32.totalorder %s22, 0
      %p85 = por %p83, %p84
      %p86 = scmp.ne.s32.totalorder %s74, %s75
      %p87 = scmp.eq.s32.totalorder %s23, 1
      %p88 = por %p86, %p87
      %p90 = scmp.ne.s32.totalorder %s75, %s89
      %p91 = scmp.eq.s32.totalorder %s23, 0
      %p92 = por %p90, %p91
      %s94 = sadd.s32 %s93, 1
      %p97 = scmp.eq.s32.totalorder %s17, 1
      %p98 = scmp.ne.s32.totalorder %s93, %s95
      %p99 = scmp.eq.s32.totalorder %s17, 0
      %p100 = por %p98, %p99
      %p101 = scmp.ne.s32.totalorder %s93, %s95
      %p102 = scmp.eq.s32.totalorder %s22, 1
      %p103 = por %p101, %p102
      %p104 = scmp.ne.s32.totalorder %s95, %s96
      %p105 = scmp.eq.s32.totalorder %s22, 0
      %p106 = por %p104, %p105
      %p107 = scmp.ne.s32.totalorder %s95, %s96
      %p108 = scmp.eq.s32.totalorder %s23, 1
      %p109 = por %p107, %p108
      %p111 = scmp.ne.s32.totalorder %s96, %s110
      %p112 = scmp.eq.s32.totalorder %s23, 0
      %p113 = por %p111, %p112
      %s115 = sadd.s32 %s114, 1
      %p118 = scmp.eq.s32.totalorder %s17, 1
      %p119 = scmp.ne.s32.totalorder %s114, %s116
      %p120 = scmp.eq.s32.totalorder %s17, 0
      %p121 = por %p119, %p120
      %p122 = scmp.ne.s32.totalorder %s114, %s116
      %p123 = scmp.eq.s32.totalorder %s22, 1
      %p124 = por %p122, %p123
      %p125 = scmp.ne.s32.totalorder %s116, %s117
      %p126 = scmp.eq.s32.totalorder %s22, 0
      %p127 = por %p125, %p126
      %p128 = scmp.ne.s32.totalorder %s116, %s117
      %p129 = scmp.eq.s32.totalorder %s23, 1
      %p130 = por %p128, %p129
      %p132 = scmp.ne.s32.totalorder %s117, %s131
      %p133 = scmp.eq.s32.totalorder %s23, 0
      %p134 = por %p132, %p133
      %s136 = sadd.s32 %s135, 1
      %p139 = scmp.eq.s32.totalorder %s17, 1
      %p140 = scmp.ne.s32.totalorder %s135, %s137
      %p141 = scmp.eq.s32.totalorder %s17, 0
      %p142 = por %p140, %p141
      %p143 = scmp.ne.s32.totalorder %s135, %s137
      %p144 = scmp.eq.s32.totalorder %s22, 1
      %p145 = por %p143, %p144
      %p146 = scmp.ne.s32.totalorder %s137, %s138
      %p147 = scmp.eq.s32.totalorder %s22, 0
      %p148 = por %p146, %p147
      %p149 = scmp.ne.s32.totalorder %s137, %s138
      %p150 = scmp.eq.s32.totalorder %s23, 1
      %p151 = por %p149, %p150
      %p153 = scmp.ne.s32.totalorder %s138, %s152
      %p154 = scmp.eq.s32.totalorder %s23, 0
      %p155 = por %p153, %p154
      %s157 = sadd.s32 %s156, 1
      %p160 = scmp.eq.s32.totalorder %s17, 1
      %p161 = scmp.ne.s32.totalorder %s156, %s158
      %p162 = scmp.eq.s32.totalorder %s17, 0
      %p163 = por %p161, %p162
      %p164 = scmp.ne.s32.totalorder %s156, %s158
      %p165 = scmp.eq.s32.totalorder %s22, 1
      %p166 = por %p164, %p165
      %p167 = scmp.ne.s32.totalorder %s158, %s159
      %p168 = scmp.eq.s32.totalorder %s22, 0
      %p169 = por %p167, %p168
      %p170 = scmp.ne.s32.totalorder %s158, %s159
      %p171 = scmp.eq.s32.totalorder %s23, 1
      %p172 = por %p170, %p171
      %p174 = scmp.ne.s32.totalorder %s159, %s173
      %p175 = scmp.eq.s32.totalorder %s23, 0
      %p176 = por %p174, %p175
      %s177 = ssub.s32 %s17, %s24
      %p178 = scmp.eq.s32.totalorder %s177, 0
      %s180 = sadd.s32 %s179, 1
      %s181 = scalar_select %p178, %s179, %s180
      %p184 = pneg %p178
      %p185 = scmp.eq.s32.totalorder %s17, 1
      %p186 = por %p184, %p185
      %p187 = scmp.ne.s32.totalorder %s179, %s182
      %p188 = scmp.eq.s32.totalorder %s17, 0
      %p189 = por %p187, %p188
      %p190 = scmp.ne.s32.totalorder %s179, %s182
      %p191 = scmp.eq.s32.totalorder %s22, 1
      %p192 = por %p190, %p191
      %p193 = scmp.ne.s32.totalorder %s182, %s183
      %p194 = scmp.eq.s32.totalorder %s22, 0
      %p195 = por %p193, %p194
      %p196 = scmp.ne.s32.totalorder %s182, %s183
      %p197 = scmp.eq.s32.totalorder %s23, 1
      %p198 = por %p196, %p197
      %p200 = scmp.ne.s32.totalorder %s183, %s199
      %p201 = scmp.eq.s32.totalorder %s23, 0
      %p202 = por %p200, %p201
      %p203 = scmp.le.s32.totalorder 1, %s17
      %p204 = scmp.lt.s32.totalorder %s17, 3
      %p205 = pnand %p203, %p204
      %p206 = pneg %p205
      // Predicated region
      $region9: #{tpu_custom_call.1} parent=5 // pred_check
        _
      $region10: #{tpu_custom_call.1} parent=5 // pred_check_branch
        %208 = sbr.rel (%p205) target = $region12
      $region11: #{tpu_custom_call.1} parent=5 // pred_region
        %s209 = ssub.s32 %s17, 1
        // Predicated region
        $region13: #{tpu_custom_call.1} parent=11 // pred_check
          %p210 = pneg %p64
        $region14: #{tpu_custom_call.1} parent=11 // pred_check_branch
          %212 = sbr.rel (%p210) target = $region16
        $region15: #{tpu_custom_call.1} parent=11 // pred_region
          _
        $region16: #{tpu_custom_call.1} parent=11 // pred_fallthru
          _
        // Predicated region
        $region17: #{tpu_custom_call.1} parent=11 // pred_check
          %p213 = pneg %p85
        $region18: #{tpu_custom_call.1} parent=11 // pred_check_branch
          %215 = sbr.rel (%p213) target = $region20
        $region19: #{tpu_custom_call.1} parent=11 // pred_region
          _
        $region20: #{tpu_custom_call.1} parent=11 // pred_fallthru
          _
        // Predicated region
        $region21: #{tpu_custom_call.1} parent=11 // pred_check
          %p216 = pneg %p106
        $region22: #{tpu_custom_call.1} parent=11 // pred_check_branch
          %218 = sbr.rel (%p216) target = $region24
        $region23: #{tpu_custom_call.1} parent=11 // pred_region
          %s220 = ssub.s32 9216, 9216
          %221 = vsyncadd [#allocation4], %s220
          %s222 = sshll.u32 [#allocation3], 4
          %s223 = int_to_ptr.vmem [resolvable:$true] %s222
          %228 = dma.hbm_to_vmem [thread:$0]  %s3, 9216, %s223, [#allocation4], 64, 64, 4
        $region24: #{tpu_custom_call.1} parent=11 // pred_fallthru
          _
        // Predicated region
        $region25: #{tpu_custom_call.1} parent=11 // pred_check
          %p229 = pneg %p127
        $region26: #{tpu_custom_call.1} parent=11 // pred_check_branch
          %231 = sbr.rel (%p229) target = $region28
        $region27: #{tpu_custom_call.1} parent=11 // pred_region
          _
        $region28: #{tpu_custom_call.1} parent=11 // pred_fallthru
          _
        // Predicated region
        $region29: #{tpu_custom_call.1} parent=11 // pred_check
          %p232 = pneg %p148
        $region30: #{tpu_custom_call.1} parent=11 // pred_check_branch
          %234 = sbr.rel (%p232) target = $region32
        $region31: #{tpu_custom_call.1} parent=11 // pred_region
          _
        $region32: #{tpu_custom_call.1} parent=11 // pred_fallthru
          _
        // Predicated region
        $region33: #{tpu_custom_call.1} parent=11 // pred_check
          %p235 = pneg %p169
        $region34: #{tpu_custom_call.1} parent=11 // pred_check_branch
          %237 = sbr.rel (%p235) target = $region36
        $region35: #{tpu_custom_call.1} parent=11 // pred_region
          _
        $region36: #{tpu_custom_call.1} parent=11 // pred_fallthru
          _
      $region12: #{tpu_custom_call.1} parent=5 // pred_fallthru
        _
      %p238 = scmp.lt.s32.totalorder %s17, 2
      // Predicated region
      $region37: #{tpu_custom_call.1} parent=5 // pred_check
        %p239 = pneg %p238
      $region38: #{tpu_custom_call.1} parent=5 // pred_check_branch
        %241 = sbr.rel (%p239) target = $region40
      $region39: #{tpu_custom_call.1} parent=5 // pred_region
        // Predicated region
        $region41: #{tpu_custom_call.1} parent=39 // pred_check
          %p242 = pneg %p37
        $region42: #{tpu_custom_call.1} parent=39 // pred_check_branch
          %244 = sbr.rel (%p242) target = $region44
        $region43: #{tpu_custom_call.1} parent=39 // pred_region
          %p245 = scmp.lt.s32.totalorder %s17, 1
          %s246 = scalar_select %p245, %s17, 1
          %s247 = smul.addr %s246, 54
          %s248 = smul.addr %s247, 4
          %s249 = scalar_lea.vmem %s0, %s248
        $region44: #{tpu_custom_call.1} parent=39 // pred_fallthru
          _
      $region40: #{tpu_custom_call.1} parent=5 // pred_fallthru
        _
      %p250 = scmp.le.s32.totalorder 1, %s17
      %p251 = scmp.lt.s32.totalorder %s17, 3
      %p252 = pnand %p250, %p251
      %p253 = pneg %p252
      // Predicated region
      $region45: #{tpu_custom_call.1} parent=5 // pred_check
        _
      $region46: #{tpu_custom_call.1} parent=5 // pred_check_branch
        %255 = sbr.rel (%p252) target = $region48
      $region47: #{tpu_custom_call.1} parent=5 // pred_region
        %s256 = ssub.s32 %s17, 1
        // Predicated region
        $region49: #{tpu_custom_call.1} parent=47 // pred_check
          %p257 = pneg %p106
        $region50: #{tpu_custom_call.1} parent=47 // pred_check_branch
          %259 = sbr.rel (%p257) target = $region52
        $region51: #{tpu_custom_call.1} parent=47 // pred_region
          %260 = dma.done [#allocation4], 9216
        $region52: #{tpu_custom_call.1} parent=47 // pred_fallthru
          _
        %p261 = scmp.lt.s32.totalorder %s22, 1
        %s262 = scalar_select %p261, %s22, 1
        %s263 = smul.addr %s262, 54
        %s264 = smul.addr %s263, 4
        %s265 = scalar_lea.vmem %s0, %s264
        %p266 = pneg %p43
        %p267 = pneg %p40
        %p268 = pneg %p64
        %p269 = pneg %p61
        %p270 = pneg %p85
        %p271 = pneg %p82
        %p272 = pneg %p106
        %p273 = pneg %p103
        %p274 = pneg %p127
        %p275 = pneg %p124
        %p276 = pneg %p148
        %p277 = pneg %p145
        %p278 = pneg %p169
        %p279 = pneg %p166
        %p280 = pneg %p195
        %p281 = pneg %p192
        %s282 = sand.u32 %s182, 1
        %s283 = scalar_lea.sflag [#allocation5], %s282
        %s284 = sand.u32 %s182, 1
        %s285 = smul.addr %s284, 256
        %s286 = scalar_lea.vmem [#allocation6], %s285
        %p287 = scmp.lt.s32.totalorder %s22, 1
        %s288 = scalar_select %p287, %s22, 1
        %s289 = smul.addr %s288, 54
        %s290 = smul.addr %s289, 4
        %s291 = scalar_lea.vmem %s0, %s290
        %v293 = vld [vmem:[%s291] sm:$0xf]
        %v294 = vld [vmem:[%s291 + $0x4] sm:$0xf]
        %v295 = vld [vmem:[%s291 + $0xc] sm:$0xf]
        %v296 = vld [vmem:[%s291 + $0x10] sm:$0xf]
        %v297 = vld [vmem:[%s291 + $0x18] sm:$0xf]
        %v298 = vld [vmem:[%s291 + $0x1c] sm:$0xf]
        %v299 = vld [vmem:[%s291 + $0x24] sm:$0xf]
        %v300 = vld [vmem:[%s291 + $0x28] sm:$0xf]
        %v301 = vld [vmem:[%s291 + $0x30] sm:$0xf]
        %v302 = vld [vmem:[%s291 + $0x34] sm:$0xf]
        %v303 = vld [vmem:[%s291 + $0x3c] sm:$0xf]
        %v304 = vld [vmem:[%s291 + $0x40] sm:$0xf]
        %v305 = vld [vmem:[%s291 + $0x48] sm:$0xf]
        %v306 = vld [vmem:[%s291 + $0x4c] sm:$0xf]
        %v307 = vld [vmem:[%s291 + $0x54] sm:$0xf]
        %v308 = vld [vmem:[%s291 + $0x58] sm:$0xf]
        %v309 = vld [vmem:[%s291 + $0x60] sm:$0xf]
        %v310 = vld [vmem:[%s291 + $0x64] sm:$0xf]
        %v311 = vld [vmem:[%s291 + $0x6c] sm:$0xf]
        %v312 = vld [vmem:[%s291 + $0x70] sm:$0xf]
        %v313 = vld [vmem:[%s291 + $0x78] sm:$0xf]
        %v314 = vld [vmem:[%s291 + $0x7c] sm:$0xf]
        %v315 = vld [vmem:[%s291 + $0x84] sm:$0xf]
        %v316 = vld [vmem:[%s291 + $0x88] sm:$0xf]
        %v317 = vld [vmem:[%s291 + $0x90] sm:$0xf]
        %v318 = vld [vmem:[%s291 + $0x94] sm:$0xf]
        %v319 = vld [vmem:[%s291 + $0x9c] sm:$0xf]
        %v320 = vld [vmem:[%s291 + $0xa0] sm:$0xf]
        %v321 = vld [vmem:[%s291 + $0xa8] sm:$0xf]
        %v322 = vld [vmem:[%s291 + $0xac] sm:$0xf]
        %v323 = vld [vmem:[%s291 + $0xb4] sm:$0xf]
        %v324 = vld [vmem:[%s291 + $0xb8] sm:$0xf]
        %v325 = vld [vmem:[%s291 + $0x8] sm:$0x1]
        %v326 = vld [vmem:[%s291 + $0x14] sm:$0x1]
        %v327 = vld [vmem:[%s291 + $0x20] sm:$0x1]
        %v328 = vld [vmem:[%s291 + $0x2c] sm:$0x1]
        %v329 = vld [vmem:[%s291 + $0x38] sm:$0x1]
        %v330 = vld [vmem:[%s291 + $0x44] sm:$0x1]
        %v331 = vld [vmem:[%s291 + $0x50] sm:$0x1]
        %v332 = vld [vmem:[%s291 + $0x5c] sm:$0x1]
        %v333 = vld [vmem:[%s291 + $0x68] sm:$0x1]
        %v334 = vld [vmem:[%s291 + $0x74] sm:$0x1]
        %v335 = vld [vmem:[%s291 + $0x80] sm:$0x1]
        %v336 = vld [vmem:[%s291 + $0x8c] sm:$0x1]
        %v337 = vld [vmem:[%s291 + $0x98] sm:$0x1]
        %v338 = vld [vmem:[%s291 + $0xa4] sm:$0x1]
        %v339 = vld [vmem:[%s291 + $0xb0] sm:$0x1]
        %v340 = vld [vmem:[%s291 + $0xbc] sm:$0x1]
        %v341 = vld [vmem:[%s291] sm:$0xe]
        %v342 = vld [vmem:[%s291 + $0xc] sm:$0xe]
        %v343 = vld [vmem:[%s291 + $0x18] sm:$0xe]
        %v344 = vld [vmem:[%s291 + $0x24] sm:$0xe]
        %v345 = vld [vmem:[%s291 + $0x30] sm:$0xe]
        %v346 = vld [vmem:[%s291 + $0x3c] sm:$0xe]
        %v347 = vld [vmem:[%s291 + $0x48] sm:$0xe]
        %v348 = vld [vmem:[%s291 + $0x54] sm:$0xe]
        %v349 = vld [vmem:[%s291 + $0x60] sm:$0xe]
        %v350 = vld [vmem:[%s291 + $0x6c] sm:$0xe]
        %v351 = vld [vmem:[%s291 + $0x78] sm:$0xe]
        %v352 = vld [vmem:[%s291 + $0x84] sm:$0xe]
        %v353 = vld [vmem:[%s291 + $0x90] sm:$0xe]
        %v354 = vld [vmem:[%s291 + $0x9c] sm:$0xe]
        %v355 = vld [vmem:[%s291 + $0xa8] sm:$0xe]
        %v356 = vld [vmem:[%s291 + $0xb4] sm:$0xe]
        %s357 = scalar_lea.vmem %s291, 12
        %v358 = vld [vmem:[%s357] sm:$0xf]
        %v359 = vld [vmem:[%s357 + $0x4] sm:$0xf]
        %v360 = vld [vmem:[%s357 + $0xc] sm:$0xf]
        %v361 = vld [vmem:[%s357 + $0x10] sm:$0xf]
        %v362 = vld [vmem:[%s357 + $0x18] sm:$0xf]
        %v363 = vld [vmem:[%s357 + $0x1c] sm:$0xf]
        %v364 = vld [vmem:[%s357 + $0x24] sm:$0xf]
        %v365 = vld [vmem:[%s357 + $0x28] sm:$0xf]
        %v366 = vld [vmem:[%s357 + $0x30] sm:$0xf]
        %v367 = vld [vmem:[%s357 + $0x34] sm:$0xf]
        %v368 = vld [vmem:[%s357 + $0x3c] sm:$0xf]
        %v369 = vld [vmem:[%s357 + $0x40] sm:$0xf]
        %v370 = vld [vmem:[%s357 + $0x48] sm:$0xf]
        %v371 = vld [vmem:[%s357 + $0x4c] sm:$0xf]
        %v372 = vld [vmem:[%s357 + $0x54] sm:$0xf]
        %v373 = vld [vmem:[%s357 + $0x58] sm:$0xf]
        %v374 = vld [vmem:[%s357 + $0x60] sm:$0xf]
        %v375 = vld [vmem:[%s357 + $0x64] sm:$0xf]
        %v376 = vld [vmem:[%s357 + $0x6c] sm:$0xf]
        %v377 = vld [vmem:[%s357 + $0x70] sm:$0xf]
        %v378 = vld [vmem:[%s357 + $0x78] sm:$0xf]
        %v379 = vld [vmem:[%s357 + $0x7c] sm:$0xf]
        %v380 = vld [vmem:[%s357 + $0x84] sm:$0xf]
        %v381 = vld [vmem:[%s357 + $0x88] sm:$0xf]
        %v382 = vld [vmem:[%s357 + $0x90] sm:$0xf]
        %v383 = vld [vmem:[%s357 + $0x94] sm:$0xf]
        %v384 = vld [vmem:[%s357 + $0x9c] sm:$0xf]
        %v385 = vld [vmem:[%s357 + $0xa0] sm:$0xf]
        %v386 = vld [vmem:[%s357 + $0xa8] sm:$0xf]
        %v387 = vld [vmem:[%s357 + $0xac] sm:$0xf]
        %v388 = vld [vmem:[%s357 + $0xb4] sm:$0xf]
        %v389 = vld [vmem:[%s357 + $0xb8] sm:$0xf]
        %v390 = vld [vmem:[%s357 + $0x8] sm:$0x1]
        %v391 = vld [vmem:[%s357 + $0x14] sm:$0x1]
        %v392 = vld [vmem:[%s357 + $0x20] sm:$0x1]
        %v393 = vld [vmem:[%s357 + $0x2c] sm:$0x1]
        %v394 = vld [vmem:[%s357 + $0x38] sm:$0x1]
        %v395 = vld [vmem:[%s357 + $0x44] sm:$0x1]
        %v396 = vld [vmem:[%s357 + $0x50] sm:$0x1]
        %v397 = vld [vmem:[%s357 + $0x5c] sm:$0x1]
        %v398 = vld [vmem:[%s357 + $0x68] sm:$0x1]
        %v399 = vld [vmem:[%s357 + $0x74] sm:$0x1]
        %v400 = vld [vmem:[%s357 + $0x80] sm:$0x1]
        %v401 = vld [vmem:[%s357 + $0x8c] sm:$0x1]
        %v402 = vld [vmem:[%s357 + $0x98] sm:$0x1]
        %v403 = vld [vmem:[%s357 + $0xa4] sm:$0x1]
        %v404 = vld [vmem:[%s357 + $0xb0] sm:$0x1]
        %v405 = vld [vmem:[%s357 + $0xbc] sm:$0x1]
        %v406 = vld [vmem:[%s357] sm:$0xe]
        %v407 = vld [vmem:[%s357 + $0xc] sm:$0xe]
        %v408 = vld [vmem:[%s357 + $0x18] sm:$0xe]
        %v409 = vld [vmem:[%s357 + $0x24] sm:$0xe]
        %v410 = vld [vmem:[%s357 + $0x30] sm:$0xe]
        %v411 = vld [vmem:[%s357 + $0x3c] sm:$0xe]
        %v412 = vld [vmem:[%s357 + $0x48] sm:$0xe]
        %v413 = vld [vmem:[%s357 + $0x54] sm:$0xe]
        %v414 = vld [vmem:[%s357 + $0x60] sm:$0xe]
        %v415 = vld [vmem:[%s357 + $0x6c] sm:$0xe]
        %v416 = vld [vmem:[%s357 + $0x78] sm:$0xe]
        %v417 = vld [vmem:[%s357 + $0x84] sm:$0xe]
        %v418 = vld [vmem:[%s357 + $0x90] sm:$0xe]
        %v419 = vld [vmem:[%s357 + $0x9c] sm:$0xe]
        %v420 = vld [vmem:[%s357 + $0xa8] sm:$0xe]
        %v421 = vld [vmem:[%s357 + $0xb4] sm:$0xe]
        %s422 = scalar_lea.vmem %s291, 24
        %v423 = vld [vmem:[%s422] sm:$0xf]
        %v424 = vld [vmem:[%s422 + $0x4] sm:$0xf]
        %v425 = vld [vmem:[%s422 + $0xc] sm:$0xf]
        %v426 = vld [vmem:[%s422 + $0x10] sm:$0xf]
        %v427 = vld [vmem:[%s422 + $0x18] sm:$0xf]
        %v428 = vld [vmem:[%s422 + $0x1c] sm:$0xf]
        %v429 = vld [vmem:[%s422 + $0x24] sm:$0xf]
        %v430 = vld [vmem:[%s422 + $0x28] sm:$0xf]
        %v431 = vld [vmem:[%s422 + $0x30] sm:$0xf]
        %v432 = vld [vmem:[%s422 + $0x34] sm:$0xf]
        %v433 = vld [vmem:[%s422 + $0x3c] sm:$0xf]
        %v434 = vld [vmem:[%s422 + $0x40] sm:$0xf]
        %v435 = vld [vmem:[%s422 + $0x48] sm:$0xf]
        %v436 = vld [vmem:[%s422 + $0x4c] sm:$0xf]
        %v437 = vld [vmem:[%s422 + $0x54] sm:$0xf]
        %v438 = vld [vmem:[%s422 + $0x58] sm:$0xf]
        %v439 = vld [vmem:[%s422 + $0x60] sm:$0xf]
        %v440 = vld [vmem:[%s422 + $0x64] sm:$0xf]
        %v441 = vld [vmem:[%s422 + $0x6c] sm:$0xf]
        %v442 = vld [vmem:[%s422 + $0x70] sm:$0xf]
        %v443 = vld [vmem:[%s422 + $0x78] sm:$0xf]
        %v444 = vld [vmem:[%s422 + $0x7c] sm:$0xf]
        %v445 = vld [vmem:[%s422 + $0x84] sm:$0xf]
        %v446 = vld [vmem:[%s422 + $0x88] sm:$0xf]
        %v447 = vld [vmem:[%s422 + $0x90] sm:$0xf]
        %v448 = vld [vmem:[%s422 + $0x94] sm:$0xf]
        %v449 = vld [vmem:[%s422 + $0x9c] sm:$0xf]
        %v450 = vld [vmem:[%s422 + $0xa0] sm:$0xf]
        %v451 = vld [vmem:[%s422 + $0xa8] sm:$0xf]
        %v452 = vld [vmem:[%s422 + $0xac] sm:$0xf]
        %v453 = vld [vmem:[%s422 + $0xb4] sm:$0xf]
        %v454 = vld [vmem:[%s422 + $0xb8] sm:$0xf]
        %v455 = vld [vmem:[%s422 + $0x8] sm:$0x1]
        %v456 = vld [vmem:[%s422 + $0x14] sm:$0x1]
        %v457 = vld [vmem:[%s422 + $0x20] sm:$0x1]
        %v458 = vld [vmem:[%s422 + $0x2c] sm:$0x1]
        %v459 = vld [vmem:[%s422 + $0x38] sm:$0x1]
        %v460 = vld [vmem:[%s422 + $0x44] sm:$0x1]
        %v461 = vld [vmem:[%s422 + $0x50] sm:$0x1]
        %v462 = vld [vmem:[%s422 + $0x5c] sm:$0x1]
        %v463 = vld [vmem:[%s422 + $0x68] sm:$0x1]
        %v464 = vld [vmem:[%s422 + $0x74] sm:$0x1]
        %v465 = vld [vmem:[%s422 + $0x80] sm:$0x1]
        %v466 = vld [vmem:[%s422 + $0x8c] sm:$0x1]
        %v467 = vld [vmem:[%s422 + $0x98] sm:$0x1]
        %v468 = vld [vmem:[%s422 + $0xa4] sm:$0x1]
        %v469 = vld [vmem:[%s422 + $0xb0] sm:$0x1]
        %v470 = vld [vmem:[%s422 + $0xbc] sm:$0x1]
        %v471 = vld [vmem:[%s422] sm:$0xe]
        %v472 = vld [vmem:[%s422 + $0xc] sm:$0xe]
        %v473 = vld [vmem:[%s422 + $0x18] sm:$0xe]
        %v474 = vld [vmem:[%s422 + $0x24] sm:$0xe]
        %v475 = vld [vmem:[%s422 + $0x30] sm:$0xe]
        %v476 = vld [vmem:[%s422 + $0x3c] sm:$0xe]
        %v477 = vld [vmem:[%s422 + $0x48] sm:$0xe]
        %v478 = vld [vmem:[%s422 + $0x54] sm:$0xe]
        %v479 = vld [vmem:[%s422 + $0x60] sm:$0xe]
        %v480 = vld [vmem:[%s422 + $0x6c] sm:$0xe]
        %v481 = vld [vmem:[%s422 + $0x78] sm:$0xe]
        %v482 = vld [vmem:[%s422 + $0x84] sm:$0xe]
        %v483 = vld [vmem:[%s422 + $0x90] sm:$0xe]
        %v484 = vld [vmem:[%s422 + $0x9c] sm:$0xe]
        %v485 = vld [vmem:[%s422 + $0xa8] sm:$0xe]
        %v486 = vld [vmem:[%s422 + $0xb4] sm:$0xe]
        %v519 = vunpack.c.l.b16 %v293
        %v520 = vunpack.c.l.b16 %v294
        %v521 = vunpack.c.l.b16 %v295
        %v522 = vunpack.c.l.b16 %v296
        %v523 = vunpack.c.l.b16 %v297
        %v524 = vunpack.c.l.b16 %v298
        %v525 = vunpack.c.l.b16 %v299
        %v526 = vunpack.c.l.b16 %v300
        %v527 = vunpack.c.l.b16 %v301
        %v528 = vunpack.c.l.b16 %v302
        %v529 = vunpack.c.l.b16 %v303
        %v530 = vunpack.c.l.b16 %v304
        %v531 = vunpack.c.l.b16 %v305
        %v532 = vunpack.c.l.b16 %v306
        %v533 = vunpack.c.l.b16 %v307
        %v534 = vunpack.c.l.b16 %v308
        %v535 = vunpack.c.l.b16 %v309
        %v536 = vunpack.c.l.b16 %v310
        %v537 = vunpack.c.l.b16 %v311
        %v538 = vunpack.c.l.b16 %v312
        %v539 = vunpack.c.l.b16 %v313
        %v540 = vunpack.c.l.b16 %v314
        %v541 = vunpack.c.l.b16 %v315
        %v542 = vunpack.c.l.b16 %v316
        %v543 = vunpack.c.l.b16 %v317
        %v544 = vunpack.c.l.b16 %v318
        %v545 = vunpack.c.l.b16 %v319
        %v546 = vunpack.c.l.b16 %v320
        %v547 = vunpack.c.l.b16 %v321
        %v548 = vunpack.c.l.b16 %v322
        %v549 = vunpack.c.l.b16 %v323
        %v550 = vunpack.c.l.b16 %v324
        %v551 = vpack.c.b16 %v520, %v519
        %v552 = vpack.c.b16 %v522, %v521
        %v553 = vpack.c.b16 %v524, %v523
        %v554 = vpack.c.b16 %v526, %v525
        %v555 = vpack.c.b16 %v528, %v527
        %v556 = vpack.c.b16 %v530, %v529
        %v557 = vpack.c.b16 %v532, %v531
        %v558 = vpack.c.b16 %v534, %v533
        %v559 = vpack.c.b16 %v536, %v535
        %v560 = vpack.c.b16 %v538, %v537
        %v561 = vpack.c.b16 %v540, %v539
        %v562 = vpack.c.b16 %v542, %v541
        %v563 = vpack.c.b16 %v544, %v543
        %v564 = vpack.c.b16 %v546, %v545
        %v565 = vpack.c.b16 %v548, %v547
        %v566 = vpack.c.b16 %v550, %v549
        %v599 = vunpack.c.l.b16 %v325
        %v600 = vunpack.c.l.b16 %v326
        %v601 = vunpack.c.l.b16 %v327
        %v602 = vunpack.c.l.b16 %v328
        %v603 = vunpack.c.l.b16 %v329
        %v604 = vunpack.c.l.b16 %v330
        %v605 = vunpack.c.l.b16 %v331
        %v606 = vunpack.c.l.b16 %v332
        %v607 = vunpack.c.l.b16 %v333
        %v608 = vunpack.c.l.b16 %v334
        %v609 = vunpack.c.l.b16 %v335
        %v610 = vunpack.c.l.b16 %v336
        %v611 = vunpack.c.l.b16 %v337
        %v612 = vunpack.c.l.b16 %v338
        %v613 = vunpack.c.l.b16 %v339
        %v614 = vunpack.c.l.b16 %v340
        %v615 = vpack.c.b16 %v599, %v599
        %v616 = vpack.c.b16 %v600, %v600
        %v617 = vpack.c.b16 %v601, %v601
        %v618 = vpack.c.b16 %v602, %v602
        %v619 = vpack.c.b16 %v603, %v603
        %v620 = vpack.c.b16 %v604, %v604
        %v621 = vpack.c.b16 %v605, %v605
        %v622 = vpack.c.b16 %v606, %v606
        %v623 = vpack.c.b16 %v607, %v607
        %v624 = vpack.c.b16 %v608, %v608
        %v625 = vpack.c.b16 %v609, %v609
        %v626 = vpack.c.b16 %v610, %v610
        %v627 = vpack.c.b16 %v611, %v611
        %v628 = vpack.c.b16 %v612, %v612
        %v629 = vpack.c.b16 %v613, %v613
        %v630 = vpack.c.b16 %v614, %v614
        %vm631 = vsmask.f32 7424
        %v633 = vshrl.u32 %v551, 16
        %v635 = vshll.u32 %v551, 16
        %v637 = vrot.slane %v635, 1
        %v638 = vor.u32 %v633, %v637
        %v640 = vshll.u32 %v615, 16
        %v642 = vrot.slane %v640, 1
        %v643 = vsel %vm631, %v638, %v642
        %v645 = vshrl.u32 %v552, 16
        %v647 = vshll.u32 %v552, 16
        %v649 = vrot.slane %v647, 1
        %v650 = vor.u32 %v645, %v649
        %v652 = vshll.u32 %v616, 16
        %v654 = vrot.slane %v652, 1
        %v655 = vsel %vm631, %v650, %v654
        %v657 = vshrl.u32 %v553, 16
        %v659 = vshll.u32 %v553, 16
        %v661 = vrot.slane %v659, 1
        %v662 = vor.u32 %v657, %v661
        %v664 = vshll.u32 %v617, 16
        %v666 = vrot.slane %v664, 1
        %v667 = vsel %vm631, %v662, %v666
        %v669 = vshrl.u32 %v554, 16
        %v671 = vshll.u32 %v554, 16
        %v673 = vrot.slane %v671, 1
        %v674 = vor.u32 %v669, %v673
        %v676 = vshll.u32 %v618, 16
        %v678 = vrot.slane %v676, 1
        %v679 = vsel %vm631, %v674, %v678
        %v681 = vshrl.u32 %v555, 16
        %v683 = vshll.u32 %v555, 16
        %v685 = vrot.slane %v683, 1
        %v686 = vor.u32 %v681, %v685
        %v688 = vshll.u32 %v619, 16
        %v690 = vrot.slane %v688, 1
        %v691 = vsel %vm631, %v686, %v690
        %v693 = vshrl.u32 %v556, 16
        %v695 = vshll.u32 %v556, 16
        %v697 = vrot.slane %v695, 1
        %v698 = vor.u32 %v693, %v697
        %v700 = vshll.u32 %v620, 16
        %v702 = vrot.slane %v700, 1
        %v703 = vsel %vm631, %v698, %v702
        %v705 = vshrl.u32 %v557, 16
        %v707 = vshll.u32 %v557, 16
        %v709 = vrot.slane %v707, 1
        %v710 = vor.u32 %v705, %v709
        %v712 = vshll.u32 %v621, 16
        %v714 = vrot.slane %v712, 1
        %v715 = vsel %vm631, %v710, %v714
        %v717 = vshrl.u32 %v558, 16
        %v719 = vshll.u32 %v558, 16
        %v721 = vrot.slane %v719, 1
        %v722 = vor.u32 %v717, %v721
        %v724 = vshll.u32 %v622, 16
        %v726 = vrot.slane %v724, 1
        %v727 = vsel %vm631, %v722, %v726
        %v729 = vshrl.u32 %v559, 16
        %v731 = vshll.u32 %v559, 16
        %v733 = vrot.slane %v731, 1
        %v734 = vor.u32 %v729, %v733
        %v736 = vshll.u32 %v623, 16
        %v738 = vrot.slane %v736, 1
        %v739 = vsel %vm631, %v734, %v738
        %v741 = vshrl.u32 %v560, 16
        %v743 = vshll.u32 %v560, 16
        %v745 = vrot.slane %v743, 1
        %v746 = vor.u32 %v741, %v745
        %v748 = vshll.u32 %v624, 16
        %v750 = vrot.slane %v748, 1
        %v751 = vsel %vm631, %v746, %v750
        %v753 = vshrl.u32 %v561, 16
        %v755 = vshll.u32 %v561, 16
        %v757 = vrot.slane %v755, 1
        %v758 = vor.u32 %v753, %v757
        %v760 = vshll.u32 %v625, 16
        %v762 = vrot.slane %v760, 1
        %v763 = vsel %vm631, %v758, %v762
        %v765 = vshrl.u32 %v562, 16
        %v767 = vshll.u32 %v562, 16
        %v769 = vrot.slane %v767, 1
        %v770 = vor.u32 %v765, %v769
        %v772 = vshll.u32 %v626, 16
        %v774 = vrot.slane %v772, 1
        %v775 = vsel %vm631, %v770, %v774
        %v777 = vshrl.u32 %v563, 16
        %v779 = vshll.u32 %v563, 16
        %v781 = vrot.slane %v779, 1
        %v782 = vor.u32 %v777, %v781
        %v784 = vshll.u32 %v627, 16
        %v786 = vrot.slane %v784, 1
        %v787 = vsel %vm631, %v782, %v786
        %v789 = vshrl.u32 %v564, 16
        %v791 = vshll.u32 %v564, 16
        %v793 = vrot.slane %v791, 1
        %v794 = vor.u32 %v789, %v793
        %v796 = vshll.u32 %v628, 16
        %v798 = vrot.slane %v796, 1
        %v799 = vsel %vm631, %v794, %v798
        %v801 = vshrl.u32 %v565, 16
        %v803 = vshll.u32 %v565, 16
        %v805 = vrot.slane %v803, 1
        %v806 = vor.u32 %v801, %v805
        %v808 = vshll.u32 %v629, 16
        %v810 = vrot.slane %v808, 1
        %v811 = vsel %vm631, %v806, %v810
        %v813 = vshrl.u32 %v566, 16
        %v815 = vshll.u32 %v566, 16
        %v817 = vrot.slane %v815, 1
        %v818 = vor.u32 %v813, %v817
        %v820 = vshll.u32 %v630, 16
        %v822 = vrot.slane %v820, 1
        %v823 = vsel %vm631, %v818, %v822
        %v856 = vunpack.c.l.b16 %v341
        %v857 = vunpack.c.l.b16 %v342
        %v858 = vunpack.c.l.b16 %v343
        %v859 = vunpack.c.l.b16 %v344
        %v860 = vunpack.c.l.b16 %v345
        %v861 = vunpack.c.l.b16 %v346
        %v862 = vunpack.c.l.b16 %v347
        %v863 = vunpack.c.l.b16 %v348
        %v864 = vunpack.c.l.b16 %v349
        %v865 = vunpack.c.l.b16 %v350
        %v866 = vunpack.c.l.b16 %v351
        %v867 = vunpack.c.l.b16 %v352
        %v868 = vunpack.c.l.b16 %v353
        %v869 = vunpack.c.l.b16 %v354
        %v870 = vunpack.c.l.b16 %v355
        %v871 = vunpack.c.l.b16 %v356
        %v872 = vpack.c.b16 %v520, %v856
        %v873 = vpack.c.b16 %v522, %v857
        %v874 = vpack.c.b16 %v524, %v858
        %v875 = vpack.c.b16 %v526, %v859
        %v876 = vpack.c.b16 %v528, %v860
        %v877 = vpack.c.b16 %v530, %v861
        %v878 = vpack.c.b16 %v532, %v862
        %v879 = vpack.c.b16 %v534, %v863
        %v880 = vpack.c.b16 %v536, %v864
        %v881 = vpack.c.b16 %v538, %v865
        %v882 = vpack.c.b16 %v540, %v866
        %v883 = vpack.c.b16 %v542, %v867
        %v884 = vpack.c.b16 %v544, %v868
        %v885 = vpack.c.b16 %v546, %v869
        %v886 = vpack.c.b16 %v548, %v870
        %v887 = vpack.c.b16 %v550, %v871
        %vm888 = vcmask 1046528
        %v889 = vrot.slane %v872, 1
        %v890 = vrot.slane %v615, 1
        %v891 = vsel %vm888, %v889, %v890
        %v892 = vrot.slane %v873, 1
        %v893 = vrot.slane %v616, 1
        %v894 = vsel %vm888, %v892, %v893
        %v895 = vrot.slane %v874, 1
        %v896 = vrot.slane %v617, 1
        %v897 = vsel %vm888, %v895, %v896
        %v898 = vrot.slane %v875, 1
        %v899 = vrot.slane %v618, 1
        %v900 = vsel %vm888, %v898, %v899
        %v901 = vrot.slane %v876, 1
        %v902 = vrot.slane %v619, 1
        %v903 = vsel %vm888, %v901, %v902
        %v904 = vrot.slane %v877, 1
        %v905 = vrot.slane %v620, 1
        %v906 = vsel %vm888, %v904, %v905
        %v907 = vrot.slane %v878, 1
        %v908 = vrot.slane %v621, 1
        %v909 = vsel %vm888, %v907, %v908
        %v910 = vrot.slane %v879, 1
        %v911 = vrot.slane %v622, 1
        %v912 = vsel %vm888, %v910, %v911
        %v913 = vrot.slane %v880, 1
        %v914 = vrot.slane %v623, 1
        %v915 = vsel %vm888, %v913, %v914
        %v916 = vrot.slane %v881, 1
        %v917 = vrot.slane %v624, 1
        %v918 = vsel %vm888, %v916, %v917
        %v919 = vrot.slane %v882, 1
        %v920 = vrot.slane %v625, 1
        %v921 = vsel %vm888, %v919, %v920
        %v922 = vrot.slane %v883, 1
        %v923 = vrot.slane %v626, 1
        %v924 = vsel %vm888, %v922, %v923
        %v925 = vrot.slane %v884, 1
        %v926 = vrot.slane %v627, 1
        %v927 = vsel %vm888, %v925, %v926
        %v928 = vrot.slane %v885, 1
        %v929 = vrot.slane %v628, 1
        %v930 = vsel %vm888, %v928, %v929
        %v931 = vrot.slane %v886, 1
        %v932 = vrot.slane %v629, 1
        %v933 = vsel %vm888, %v931, %v932
        %v934 = vrot.slane %v887, 1
        %v935 = vrot.slane %v630, 1
        %v936 = vsel %vm888, %v934, %v935
        %v985 = vunpack.c.l.b16 %v358
        %v986 = vunpack.c.l.b16 %v359
        %v987 = vunpack.c.l.b16 %v360
        %v988 = vunpack.c.l.b16 %v361
        %v989 = vunpack.c.l.b16 %v362
        %v990 = vunpack.c.l.b16 %v363
        %v991 = vunpack.c.l.b16 %v364
        %v992 = vunpack.c.l.b16 %v365
        %v993 = vunpack.c.l.b16 %v366
        %v994 = vunpack.c.l.b16 %v367
        %v995 = vunpack.c.l.b16 %v368
        %v996 = vunpack.c.l.b16 %v369
        %v997 = vunpack.c.l.b16 %v370
        %v998 = vunpack.c.l.b16 %v371
        %v999 = vunpack.c.l.b16 %v372
        %v1000 = vunpack.c.l.b16 %v373
        %v1001 = vunpack.c.l.b16 %v374
        %v1002 = vunpack.c.l.b16 %v375
        %v1003 = vunpack.c.l.b16 %v376
        %v1004 = vunpack.c.l.b16 %v377
        %v1005 = vunpack.c.l.b16 %v378
        %v1006 = vunpack.c.l.b16 %v379
        %v1007 = vunpack.c.l.b16 %v380
        %v1008 = vunpack.c.l.b16 %v381
        %v1009 = vunpack.c.l.b16 %v382
        %v1010 = vunpack.c.l.b16 %v383
        %v1011 = vunpack.c.l.b16 %v384
        %v1012 = vunpack.c.l.b16 %v385
        %v1013 = vunpack.c.l.b16 %v386
        %v1014 = vunpack.c.l.b16 %v387
        %v1015 = vunpack.c.l.b16 %v388
        %v1016 = vunpack.c.l.b16 %v389
        %v1017 = vpack.c.b16 %v986, %v985
        %v1018 = vpack.c.b16 %v988, %v987
        %v1019 = vpack.c.b16 %v990, %v989
        %v1020 = vpack.c.b16 %v992, %v991
        %v1021 = vpack.c.b16 %v994, %v993
        %v1022 = vpack.c.b16 %v996, %v995
        %v1023 = vpack.c.b16 %v998, %v997
        %v1024 = vpack.c.b16 %v1000, %v999
        %v1025 = vpack.c.b16 %v1002, %v1001
        %v1026 = vpack.c.b16 %v1004, %v1003
        %v1027 = vpack.c.b16 %v1006, %v1005
        %v1028 = vpack.c.b16 %v1008, %v1007
        %v1029 = vpack.c.b16 %v1010, %v1009
        %v1030 = vpack.c.b16 %v1012, %v1011
        %v1031 = vpack.c.b16 %v1014, %v1013
        %v1032 = vpack.c.b16 %v1016, %v1015
        %v1065 = vunpack.c.l.b16 %v390
        %v1066 = vunpack.c.l.b16 %v391
        %v1067 = vunpack.c.l.b16 %v392
        %v1068 = vunpack.c.l.b16 %v393
        %v1069 = vunpack.c.l.b16 %v394
        %v1070 = vunpack.c.l.b16 %v395
        %v1071 = vunpack.c.l.b16 %v396
        %v1072 = vunpack.c.l.b16 %v397
        %v1073 = vunpack.c.l.b16 %v398
        %v1074 = vunpack.c.l.b16 %v399
        %v1075 = vunpack.c.l.b16 %v400
        %v1076 = vunpack.c.l.b16 %v401
        %v1077 = vunpack.c.l.b16 %v402
        %v1078 = vunpack.c.l.b16 %v403
        %v1079 = vunpack.c.l.b16 %v404
        %v1080 = vunpack.c.l.b16 %v405
        %v1081 = vpack.c.b16 %v1065, %v1065
        %v1082 = vpack.c.b16 %v1066, %v1066
        %v1083 = vpack.c.b16 %v1067, %v1067
        %v1084 = vpack.c.b16 %v1068, %v1068
        %v1085 = vpack.c.b16 %v1069, %v1069
        %v1086 = vpack.c.b16 %v1070, %v1070
        %v1087 = vpack.c.b16 %v1071, %v1071
        %v1088 = vpack.c.b16 %v1072, %v1072
        %v1089 = vpack.c.b16 %v1073, %v1073
        %v1090 = vpack.c.b16 %v1074, %v1074
        %v1091 = vpack.c.b16 %v1075, %v1075
        %v1092 = vpack.c.b16 %v1076, %v1076
        %v1093 = vpack.c.b16 %v1077, %v1077
        %v1094 = vpack.c.b16 %v1078, %v1078
        %v1095 = vpack.c.b16 %v1079, %v1079
        %v1096 = vpack.c.b16 %v1080, %v1080
        %v1098 = vshrl.u32 %v1017, 16
        %v1100 = vshll.u32 %v1017, 16
        %v1102 = vrot.slane %v1100, 1
        %v1103 = vor.u32 %v1098, %v1102
        %v1105 = vshll.u32 %v1081, 16
        %v1107 = vrot.slane %v1105, 1
        %v1108 = vsel %vm631, %v1103, %v1107
        %v1110 = vshrl.u32 %v1018, 16
        %v1112 = vshll.u32 %v1018, 16
        %v1114 = vrot.slane %v1112, 1
        %v1115 = vor.u32 %v1110, %v1114
        %v1117 = vshll.u32 %v1082, 16
        %v1119 = vrot.slane %v1117, 1
        %v1120 = vsel %vm631, %v1115, %v1119
        %v1122 = vshrl.u32 %v1019, 16
        %v1124 = vshll.u32 %v1019, 16
        %v1126 = vrot.slane %v1124, 1
        %v1127 = vor.u32 %v1122, %v1126
        %v1129 = vshll.u32 %v1083, 16
        %v1131 = vrot.slane %v1129, 1
        %v1132 = vsel %vm631, %v1127, %v1131
        %v1134 = vshrl.u32 %v1020, 16
        %v1136 = vshll.u32 %v1020, 16
        %v1138 = vrot.slane %v1136, 1
        %v1139 = vor.u32 %v1134, %v1138
        %v1141 = vshll.u32 %v1084, 16
        %v1143 = vrot.slane %v1141, 1
        %v1144 = vsel %vm631, %v1139, %v1143
        %v1146 = vshrl.u32 %v1021, 16
        %v1148 = vshll.u32 %v1021, 16
        %v1150 = vrot.slane %v1148, 1
        %v1151 = vor.u32 %v1146, %v1150
        %v1153 = vshll.u32 %v1085, 16
        %v1155 = vrot.slane %v1153, 1
        %v1156 = vsel %vm631, %v1151, %v1155
        %v1158 = vshrl.u32 %v1022, 16
        %v1160 = vshll.u32 %v1022, 16
        %v1162 = vrot.slane %v1160, 1
        %v1163 = vor.u32 %v1158, %v1162
        %v1165 = vshll.u32 %v1086, 16
        %v1167 = vrot.slane %v1165, 1
        %v1168 = vsel %vm631, %v1163, %v1167
        %v1170 = vshrl.u32 %v1023, 16
        %v1172 = vshll.u32 %v1023, 16
        %v1174 = vrot.slane %v1172, 1
        %v1175 = vor.u32 %v1170, %v1174
        %v1177 = vshll.u32 %v1087, 16
        %v1179 = vrot.slane %v1177, 1
        %v1180 = vsel %vm631, %v1175, %v1179
        %v1182 = vshrl.u32 %v1024, 16
        %v1184 = vshll.u32 %v1024, 16
        %v1186 = vrot.slane %v1184, 1
        %v1187 = vor.u32 %v1182, %v1186
        %v1189 = vshll.u32 %v1088, 16
        %v1191 = vrot.slane %v1189, 1
        %v1192 = vsel %vm631, %v1187, %v1191
        %v1194 = vshrl.u32 %v1025, 16
        %v1196 = vshll.u32 %v1025, 16
        %v1198 = vrot.slane %v1196, 1
        %v1199 = vor.u32 %v1194, %v1198
        %v1201 = vshll.u32 %v1089, 16
        %v1203 = vrot.slane %v1201, 1
        %v1204 = vsel %vm631, %v1199, %v1203
        %v1206 = vshrl.u32 %v1026, 16
        %v1208 = vshll.u32 %v1026, 16
        %v1210 = vrot.slane %v1208, 1
        %v1211 = vor.u32 %v1206, %v1210
        %v1213 = vshll.u32 %v1090, 16
        %v1215 = vrot.slane %v1213, 1
        %v1216 = vsel %vm631, %v1211, %v1215
        %v1218 = vshrl.u32 %v1027, 16
        %v1220 = vshll.u32 %v1027, 16
        %v1222 = vrot.slane %v1220, 1
        %v1223 = vor.u32 %v1218, %v1222
        %v1225 = vshll.u32 %v1091, 16
        %v1227 = vrot.slane %v1225, 1
        %v1228 = vsel %vm631, %v1223, %v1227
        %v1230 = vshrl.u32 %v1028, 16
        %v1232 = vshll.u32 %v1028, 16
        %v1234 = vrot.slane %v1232, 1
        %v1235 = vor.u32 %v1230, %v1234
        %v1237 = vshll.u32 %v1092, 16
        %v1239 = vrot.slane %v1237, 1
        %v1240 = vsel %vm631, %v1235, %v1239
        %v1242 = vshrl.u32 %v1029, 16
        %v1244 = vshll.u32 %v1029, 16
        %v1246 = vrot.slane %v1244, 1
        %v1247 = vor.u32 %v1242, %v1246
        %v1249 = vshll.u32 %v1093, 16
        %v1251 = vrot.slane %v1249, 1
        %v1252 = vsel %vm631, %v1247, %v1251
        %v1254 = vshrl.u32 %v1030, 16
        %v1256 = vshll.u32 %v1030, 16
        %v1258 = vrot.slane %v1256, 1
        %v1259 = vor.u32 %v1254, %v1258
        %v1261 = vshll.u32 %v1094, 16
        %v1263 = vrot.slane %v1261, 1
        %v1264 = vsel %vm631, %v1259, %v1263
        %v1266 = vshrl.u32 %v1031, 16
        %v1268 = vshll.u32 %v1031, 16
        %v1270 = vrot.slane %v1268, 1
        %v1271 = vor.u32 %v1266, %v1270
        %v1273 = vshll.u32 %v1095, 16
        %v1275 = vrot.slane %v1273, 1
        %v1276 = vsel %vm631, %v1271, %v1275
        %v1278 = vshrl.u32 %v1032, 16
        %v1280 = vshll.u32 %v1032, 16
        %v1282 = vrot.slane %v1280, 1
        %v1283 = vor.u32 %v1278, %v1282
        %v1285 = vshll.u32 %v1096, 16
        %v1287 = vrot.slane %v1285, 1
        %v1288 = vsel %vm631, %v1283, %v1287
        %v1321 = vunpack.c.l.b16 %v406
        %v1322 = vunpack.c.l.b16 %v407
        %v1323 = vunpack.c.l.b16 %v408
        %v1324 = vunpack.c.l.b16 %v409
        %v1325 = vunpack.c.l.b16 %v410
        %v1326 = vunpack.c.l.b16 %v411
        %v1327 = vunpack.c.l.b16 %v412
        %v1328 = vunpack.c.l.b16 %v413
        %v1329 = vunpack.c.l.b16 %v414
        %v1330 = vunpack.c.l.b16 %v415
        %v1331 = vunpack.c.l.b16 %v416
        %v1332 = vunpack.c.l.b16 %v417
        %v1333 = vunpack.c.l.b16 %v418
        %v1334 = vunpack.c.l.b16 %v419
        %v1335 = vunpack.c.l.b16 %v420
        %v1336 = vunpack.c.l.b16 %v421
        %v1337 = vpack.c.b16 %v986, %v1321
        %v1338 = vpack.c.b16 %v988, %v1322
        %v1339 = vpack.c.b16 %v990, %v1323
        %v1340 = vpack.c.b16 %v992, %v1324
        %v1341 = vpack.c.b16 %v994, %v1325
        %v1342 = vpack.c.b16 %v996, %v1326
        %v1343 = vpack.c.b16 %v998, %v1327
        %v1344 = vpack.c.b16 %v1000, %v1328
        %v1345 = vpack.c.b16 %v1002, %v1329
        %v1346 = vpack.c.b16 %v1004, %v1330
        %v1347 = vpack.c.b16 %v1006, %v1331
        %v1348 = vpack.c.b16 %v1008, %v1332
        %v1349 = vpack.c.b16 %v1010, %v1333
        %v1350 = vpack.c.b16 %v1012, %v1334
        %v1351 = vpack.c.b16 %v1014, %v1335
        %v1352 = vpack.c.b16 %v1016, %v1336
        %v1353 = vrot.slane %v1337, 1
        %v1354 = vrot.slane %v1081, 1
        %v1355 = vsel %vm888, %v1353, %v1354
        %v1356 = vrot.slane %v1338, 1
        %v1357 = vrot.slane %v1082, 1
        %v1358 = vsel %vm888, %v1356, %v1357
        %v1359 = vrot.slane %v1339, 1
        %v1360 = vrot.slane %v1083, 1
        %v1361 = vsel %vm888, %v1359, %v1360
        %v1362 = vrot.slane %v1340, 1
        %v1363 = vrot.slane %v1084, 1
        %v1364 = vsel %vm888, %v1362, %v1363
        %v1365 = vrot.slane %v1341, 1
        %v1366 = vrot.slane %v1085, 1
        %v1367 = vsel %vm888, %v1365, %v1366
        %v1368 = vrot.slane %v1342, 1
        %v1369 = vrot.slane %v1086, 1
        %v1370 = vsel %vm888, %v1368, %v1369
        %v1371 = vrot.slane %v1343, 1
        %v1372 = vrot.slane %v1087, 1
        %v1373 = vsel %vm888, %v1371, %v1372
        %v1374 = vrot.slane %v1344, 1
        %v1375 = vrot.slane %v1088, 1
        %v1376 = vsel %vm888, %v1374, %v1375
        %v1377 = vrot.slane %v1345, 1
        %v1378 = vrot.slane %v1089, 1
        %v1379 = vsel %vm888, %v1377, %v1378
        %v1380 = vrot.slane %v1346, 1
        %v1381 = vrot.slane %v1090, 1
        %v1382 = vsel %vm888, %v1380, %v1381
        %v1383 = vrot.slane %v1347, 1
        %v1384 = vrot.slane %v1091, 1
        %v1385 = vsel %vm888, %v1383, %v1384
        %v1386 = vrot.slane %v1348, 1
        %v1387 = vrot.slane %v1092, 1
        %v1388 = vsel %vm888, %v1386, %v1387
        %v1389 = vrot.slane %v1349, 1
        %v1390 = vrot.slane %v1093, 1
        %v1391 = vsel %vm888, %v1389, %v1390
        %v1392 = vrot.slane %v1350, 1
        %v1393 = vrot.slane %v1094, 1
        %v1394 = vsel %vm888, %v1392, %v1393
        %v1395 = vrot.slane %v1351, 1
        %v1396 = vrot.slane %v1095, 1
        %v1397 = vsel %vm888, %v1395, %v1396
        %v1398 = vrot.slane %v1352, 1
        %v1399 = vrot.slane %v1096, 1
        %v1400 = vsel %vm888, %v1398, %v1399
        %v1449 = vunpack.c.l.b16 %v423
        %v1450 = vunpack.c.l.b16 %v424
        %v1451 = vunpack.c.l.b16 %v425
        %v1452 = vunpack.c.l.b16 %v426
        %v1453 = vunpack.c.l.b16 %v427
        %v1454 = vunpack.c.l.b16 %v428
        %v1455 = vunpack.c.l.b16 %v429
        %v1456 = vunpack.c.l.b16 %v430
        %v1457 = vunpack.c.l.b16 %v431
        %v1458 = vunpack.c.l.b16 %v432
        %v1459 = vunpack.c.l.b16 %v433
        %v1460 = vunpack.c.l.b16 %v434
        %v1461 = vunpack.c.l.b16 %v435
        %v1462 = vunpack.c.l.b16 %v436
        %v1463 = vunpack.c.l.b16 %v437
        %v1464 = vunpack.c.l.b16 %v438
        %v1465 = vunpack.c.l.b16 %v439
        %v1466 = vunpack.c.l.b16 %v440
        %v1467 = vunpack.c.l.b16 %v441
        %v1468 = vunpack.c.l.b16 %v442
        %v1469 = vunpack.c.l.b16 %v443
        %v1470 = vunpack.c.l.b16 %v444
        %v1471 = vunpack.c.l.b16 %v445
        %v1472 = vunpack.c.l.b16 %v446
        %v1473 = vunpack.c.l.b16 %v447
        %v1474 = vunpack.c.l.b16 %v448
        %v1475 = vunpack.c.l.b16 %v449
        %v1476 = vunpack.c.l.b16 %v450
        %v1477 = vunpack.c.l.b16 %v451
        %v1478 = vunpack.c.l.b16 %v452
        %v1479 = vunpack.c.l.b16 %v453
        %v1480 = vunpack.c.l.b16 %v454
        %v1481 = vpack.c.b16 %v1450, %v1449
        %v1482 = vpack.c.b16 %v1452, %v1451
        %v1483 = vpack.c.b16 %v1454, %v1453
        %v1484 = vpack.c.b16 %v1456, %v1455
        %v1485 = vpack.c.b16 %v1458, %v1457
        %v1486 = vpack.c.b16 %v1460, %v1459
        %v1487 = vpack.c.b16 %v1462, %v1461
        %v1488 = vpack.c.b16 %v1464, %v1463
        %v1489 = vpack.c.b16 %v1466, %v1465
        %v1490 = vpack.c.b16 %v1468, %v1467
        %v1491 = vpack.c.b16 %v1470, %v1469
        %v1492 = vpack.c.b16 %v1472, %v1471
        %v1493 = vpack.c.b16 %v1474, %v1473
        %v1494 = vpack.c.b16 %v1476, %v1475
        %v1495 = vpack.c.b16 %v1478, %v1477
        %v1496 = vpack.c.b16 %v1480, %v1479
        %v1529 = vunpack.c.l.b16 %v455
        %v1530 = vunpack.c.l.b16 %v456
        %v1531 = vunpack.c.l.b16 %v457
        %v1532 = vunpack.c.l.b16 %v458
        %v1533 = vunpack.c.l.b16 %v459
        %v1534 = vunpack.c.l.b16 %v460
        %v1535 = vunpack.c.l.b16 %v461
        %v1536 = vunpack.c.l.b16 %v462
        %v1537 = vunpack.c.l.b16 %v463
        %v1538 = vunpack.c.l.b16 %v464
        %v1539 = vunpack.c.l.b16 %v465
        %v1540 = vunpack.c.l.b16 %v466
        %v1541 = vunpack.c.l.b16 %v467
        %v1542 = vunpack.c.l.b16 %v468
        %v1543 = vunpack.c.l.b16 %v469
        %v1544 = vunpack.c.l.b16 %v470
        %v1545 = vpack.c.b16 %v1529, %v1529
        %v1546 = vpack.c.b16 %v1530, %v1530
        %v1547 = vpack.c.b16 %v1531, %v1531
        %v1548 = vpack.c.b16 %v1532, %v1532
        %v1549 = vpack.c.b16 %v1533, %v1533
        %v1550 = vpack.c.b16 %v1534, %v1534
        %v1551 = vpack.c.b16 %v1535, %v1535
        %v1552 = vpack.c.b16 %v1536, %v1536
        %v1553 = vpack.c.b16 %v1537, %v1537
        %v1554 = vpack.c.b16 %v1538, %v1538
        %v1555 = vpack.c.b16 %v1539, %v1539
        %v1556 = vpack.c.b16 %v1540, %v1540
        %v1557 = vpack.c.b16 %v1541, %v1541
        %v1558 = vpack.c.b16 %v1542, %v1542
        %v1559 = vpack.c.b16 %v1543, %v1543
        %v1560 = vpack.c.b16 %v1544, %v1544
        %v1562 = vshrl.u32 %v1481, 16
        %v1564 = vshll.u32 %v1481, 16
        %v1566 = vrot.slane %v1564, 1
        %v1567 = vor.u32 %v1562, %v1566
        %v1569 = vshll.u32 %v1545, 16
        %v1571 = vrot.slane %v1569, 1
        %v1572 = vsel %vm631, %v1567, %v1571
        %v1574 = vshrl.u32 %v1482, 16
        %v1576 = vshll.u32 %v1482, 16
        %v1578 = vrot.slane %v1576, 1
        %v1579 = vor.u32 %v1574, %v1578
        %v1581 = vshll.u32 %v1546, 16
        %v1583 = vrot.slane %v1581, 1
        %v1584 = vsel %vm631, %v1579, %v1583
        %v1586 = vshrl.u32 %v1483, 16
        %v1588 = vshll.u32 %v1483, 16
        %v1590 = vrot.slane %v1588, 1
        %v1591 = vor.u32 %v1586, %v1590
        %v1593 = vshll.u32 %v1547, 16
        %v1595 = vrot.slane %v1593, 1
        %v1596 = vsel %vm631, %v1591, %v1595
        %v1598 = vshrl.u32 %v1484, 16
        %v1600 = vshll.u32 %v1484, 16
        %v1602 = vrot.slane %v1600, 1
        %v1603 = vor.u32 %v1598, %v1602
        %v1605 = vshll.u32 %v1548, 16
        %v1607 = vrot.slane %v1605, 1
        %v1608 = vsel %vm631, %v1603, %v1607
        %v1610 = vshrl.u32 %v1485, 16
        %v1612 = vshll.u32 %v1485, 16
        %v1614 = vrot.slane %v1612, 1
        %v1615 = vor.u32 %v1610, %v1614
        %v1617 = vshll.u32 %v1549, 16
        %v1619 = vrot.slane %v1617, 1
        %v1620 = vsel %vm631, %v1615, %v1619
        %v1622 = vshrl.u32 %v1486, 16
        %v1624 = vshll.u32 %v1486, 16
        %v1626 = vrot.slane %v1624, 1
        %v1627 = vor.u32 %v1622, %v1626
        %v1629 = vshll.u32 %v1550, 16
        %v1631 = vrot.slane %v1629, 1
        %v1632 = vsel %vm631, %v1627, %v1631
        %v1634 = vshrl.u32 %v1487, 16
        %v1636 = vshll.u32 %v1487, 16
        %v1638 = vrot.slane %v1636, 1
        %v1639 = vor.u32 %v1634, %v1638
        %v1641 = vshll.u32 %v1551, 16
        %v1643 = vrot.slane %v1641, 1
        %v1644 = vsel %vm631, %v1639, %v1643
        %v1646 = vshrl.u32 %v1488, 16
        %v1648 = vshll.u32 %v1488, 16
        %v1650 = vrot.slane %v1648, 1
        %v1651 = vor.u32 %v1646, %v1650
        %v1653 = vshll.u32 %v1552, 16
        %v1655 = vrot.slane %v1653, 1
        %v1656 = vsel %vm631, %v1651, %v1655
        %v1658 = vshrl.u32 %v1489, 16
        %v1660 = vshll.u32 %v1489, 16
        %v1662 = vrot.slane %v1660, 1
        %v1663 = vor.u32 %v1658, %v1662
        %v1665 = vshll.u32 %v1553, 16
        %v1667 = vrot.slane %v1665, 1
        %v1668 = vsel %vm631, %v1663, %v1667
        %v1670 = vshrl.u32 %v1490, 16
        %v1672 = vshll.u32 %v1490, 16
        %v1674 = vrot.slane %v1672, 1
        %v1675 = vor.u32 %v1670, %v1674
        %v1677 = vshll.u32 %v1554, 16
        %v1679 = vrot.slane %v1677, 1
        %v1680 = vsel %vm631, %v1675, %v1679
        %v1682 = vshrl.u32 %v1491, 16
        %v1684 = vshll.u32 %v1491, 16
        %v1686 = vrot.slane %v1684, 1
        %v1687 = vor.u32 %v1682, %v1686
        %v1689 = vshll.u32 %v1555, 16
        %v1691 = vrot.slane %v1689, 1
        %v1692 = vsel %vm631, %v1687, %v1691
        %v1694 = vshrl.u32 %v1492, 16
        %v1696 = vshll.u32 %v1492, 16
        %v1698 = vrot.slane %v1696, 1
        %v1699 = vor.u32 %v1694, %v1698
        %v1701 = vshll.u32 %v1556, 16
        %v1703 = vrot.slane %v1701, 1
        %v1704 = vsel %vm631, %v1699, %v1703
        %v1706 = vshrl.u32 %v1493, 16
        %v1708 = vshll.u32 %v1493, 16
        %v1710 = vrot.slane %v1708, 1
        %v1711 = vor.u32 %v1706, %v1710
        %v1713 = vshll.u32 %v1557, 16
        %v1715 = vrot.slane %v1713, 1
        %v1716 = vsel %vm631, %v1711, %v1715
        %v1718 = vshrl.u32 %v1494, 16
        %v1720 = vshll.u32 %v1494, 16
        %v1722 = vrot.slane %v1720, 1
        %v1723 = vor.u32 %v1718, %v1722
        %v1725 = vshll.u32 %v1558, 16
        %v1727 = vrot.slane %v1725, 1
        %v1728 = vsel %vm631, %v1723, %v1727
        %v1730 = vshrl.u32 %v1495, 16
        %v1732 = vshll.u32 %v1495, 16
        %v1734 = vrot.slane %v1732, 1
        %v1735 = vor.u32 %v1730, %v1734
        %v1737 = vshll.u32 %v1559, 16
        %v1739 = vrot.slane %v1737, 1
        %v1740 = vsel %vm631, %v1735, %v1739
        %v1742 = vshrl.u32 %v1496, 16
        %v1744 = vshll.u32 %v1496, 16
        %v1746 = vrot.slane %v1744, 1
        %v1747 = vor.u32 %v1742, %v1746
        %v1749 = vshll.u32 %v1560, 16
        %v1751 = vrot.slane %v1749, 1
        %v1752 = vsel %vm631, %v1747, %v1751
        %v1785 = vunpack.c.l.b16 %v471
        %v1786 = vunpack.c.l.b16 %v472
        %v1787 = vunpack.c.l.b16 %v473
        %v1788 = vunpack.c.l.b16 %v474
        %v1789 = vunpack.c.l.b16 %v475
        %v1790 = vunpack.c.l.b16 %v476
        %v1791 = vunpack.c.l.b16 %v477
        %v1792 = vunpack.c.l.b16 %v478
        %v1793 = vunpack.c.l.b16 %v479
        %v1794 = vunpack.c.l.b16 %v480
        %v1795 = vunpack.c.l.b16 %v481
        %v1796 = vunpack.c.l.b16 %v482
        %v1797 = vunpack.c.l.b16 %v483
        %v1798 = vunpack.c.l.b16 %v484
        %v1799 = vunpack.c.l.b16 %v485
        %v1800 = vunpack.c.l.b16 %v486
        %v1801 = vpack.c.b16 %v1450, %v1785
        %v1802 = vpack.c.b16 %v1452, %v1786
        %v1803 = vpack.c.b16 %v1454, %v1787
        %v1804 = vpack.c.b16 %v1456, %v1788
        %v1805 = vpack.c.b16 %v1458, %v1789
        %v1806 = vpack.c.b16 %v1460, %v1790
        %v1807 = vpack.c.b16 %v1462, %v1791
        %v1808 = vpack.c.b16 %v1464, %v1792
        %v1809 = vpack.c.b16 %v1466, %v1793
        %v1810 = vpack.c.b16 %v1468, %v1794
        %v1811 = vpack.c.b16 %v1470, %v1795
        %v1812 = vpack.c.b16 %v1472, %v1796
        %v1813 = vpack.c.b16 %v1474, %v1797
        %v1814 = vpack.c.b16 %v1476, %v1798
        %v1815 = vpack.c.b16 %v1478, %v1799
        %v1816 = vpack.c.b16 %v1480, %v1800
        %v1817 = vrot.slane %v1801, 1
        %v1818 = vrot.slane %v1545, 1
        %v1819 = vsel %vm888, %v1817, %v1818
        %v1820 = vrot.slane %v1802, 1
        %v1821 = vrot.slane %v1546, 1
        %v1822 = vsel %vm888, %v1820, %v1821
        %v1823 = vrot.slane %v1803, 1
        %v1824 = vrot.slane %v1547, 1
        %v1825 = vsel %vm888, %v1823, %v1824
        %v1826 = vrot.slane %v1804, 1
        %v1827 = vrot.slane %v1548, 1
        %v1828 = vsel %vm888, %v1826, %v1827
        %v1829 = vrot.slane %v1805, 1
        %v1830 = vrot.slane %v1549, 1
        %v1831 = vsel %vm888, %v1829, %v1830
        %v1832 = vrot.slane %v1806, 1
        %v1833 = vrot.slane %v1550, 1
        %v1834 = vsel %vm888, %v1832, %v1833
        %v1835 = vrot.slane %v1807, 1
        %v1836 = vrot.slane %v1551, 1
        %v1837 = vsel %vm888, %v1835, %v1836
        %v1838 = vrot.slane %v1808, 1
        %v1839 = vrot.slane %v1552, 1
        %v1840 = vsel %vm888, %v1838, %v1839
        %v1841 = vrot.slane %v1809, 1
        %v1842 = vrot.slane %v1553, 1
        %v1843 = vsel %vm888, %v1841, %v1842
        %v1844 = vrot.slane %v1810, 1
        %v1845 = vrot.slane %v1554, 1
        %v1846 = vsel %vm888, %v1844, %v1845
        %v1847 = vrot.slane %v1811, 1
        %v1848 = vrot.slane %v1555, 1
        %v1849 = vsel %vm888, %v1847, %v1848
        %v1850 = vrot.slane %v1812, 1
        %v1851 = vrot.slane %v1556, 1
        %v1852 = vsel %vm888, %v1850, %v1851
        %v1853 = vrot.slane %v1813, 1
        %v1854 = vrot.slane %v1557, 1
        %v1855 = vsel %vm888, %v1853, %v1854
        %v1856 = vrot.slane %v1814, 1
        %v1857 = vrot.slane %v1558, 1
        %v1858 = vsel %vm888, %v1856, %v1857
        %v1859 = vrot.slane %v1815, 1
        %v1860 = vrot.slane %v1559, 1
        %v1861 = vsel %vm888, %v1859, %v1860
        %v1862 = vrot.slane %v1816, 1
        %v1863 = vrot.slane %v1560, 1
        %v1864 = vsel %vm888, %v1862, %v1863
        %v1881 = vld [vmem:[%s1] sm:$0xf]
        %v1882 = vld [vmem:[%s1 + $0x4] sm:$0xf]
        %v1883 = vld [vmem:[%s1 + $0x8] sm:$0xf]
        %v1884 = vld [vmem:[%s1 + $0xc] sm:$0xf]
        %v1885 = vld [vmem:[%s1 + $0x10] sm:$0xf]
        %v1886 = vld [vmem:[%s1 + $0x14] sm:$0xf]
        %v1887 = vld [vmem:[%s1 + $0x18] sm:$0xf]
        %v1888 = vld [vmem:[%s1 + $0x1c] sm:$0xf]
        %v1889 = vld [vmem:[%s1 + $0x20] sm:$0xf]
        %v1890 = vld [vmem:[%s1 + $0x24] sm:$0xf]
        %v1891 = vld [vmem:[%s1 + $0x28] sm:$0xf]
        %v1892 = vld [vmem:[%s1 + $0x2c] sm:$0xf]
        %v1893 = vld [vmem:[%s1 + $0x30] sm:$0xf]
        %v1894 = vld [vmem:[%s1 + $0x34] sm:$0xf]
        %v1895 = vld [vmem:[%s1 + $0x38] sm:$0xf]
        %v1896 = vld [vmem:[%s1 + $0x3c] sm:$0xf]
        %v1897 = vld [vmem:[%s1 + $0x40] sm:$0xf]
        %v1898 = vld [vmem:[%s1 + $0x44] sm:$0xf]
        %v1899 = vld [vmem:[%s1 + $0x48] sm:$0xf]
        %v1900 = vld [vmem:[%s1 + $0x4c] sm:$0xf]
        %v1901 = vld [vmem:[%s1 + $0x50] sm:$0xf]
        %v1902 = vld [vmem:[%s1 + $0x54] sm:$0xf]
        %v1903 = vld [vmem:[%s1 + $0x58] sm:$0xf]
        %v1904 = vld [vmem:[%s1 + $0x5c] sm:$0xf]
        %v1905 = vld [vmem:[%s1 + $0x60] sm:$0xf]
        %v1906 = vld [vmem:[%s1 + $0x64] sm:$0xf]
        %v1907 = vld [vmem:[%s1 + $0x68] sm:$0xf]
        %v1908 = vld [vmem:[%s1 + $0x6c] sm:$0xf]
        %v1909 = vld [vmem:[%s1 + $0x70] sm:$0xf]
        %v1910 = vld [vmem:[%s1 + $0x74] sm:$0xf]
        %v1911 = vld [vmem:[%s1 + $0x78] sm:$0xf]
        %v1912 = vld [vmem:[%s1 + $0x7c] sm:$0xf]
        %v1913 = vld [vmem:[%s1 + $0x80] sm:$0xf]
        %v1914 = vld [vmem:[%s1 + $0x84] sm:$0xf]
        %v1915 = vld [vmem:[%s1 + $0x88] sm:$0xf]
        %v1916 = vld [vmem:[%s1 + $0x8c] sm:$0xf]
        %v1917 = vld [vmem:[%s1 + $0x90] sm:$0xf]
        %v1918 = vld [vmem:[%s1 + $0x94] sm:$0xf]
        %v1919 = vld [vmem:[%s1 + $0x98] sm:$0xf]
        %v1920 = vld [vmem:[%s1 + $0x9c] sm:$0xf]
        %v1921 = vld [vmem:[%s1 + $0xa0] sm:$0xf]
        %v1922 = vld [vmem:[%s1 + $0xa4] sm:$0xf]
        %v1923 = vld [vmem:[%s1 + $0xa8] sm:$0xf]
        %v1924 = vld [vmem:[%s1 + $0xac] sm:$0xf]
        %v1925 = vld [vmem:[%s1 + $0xb0] sm:$0xf]
        %v1926 = vld [vmem:[%s1 + $0xb4] sm:$0xf]
        %v1927 = vld [vmem:[%s1 + $0xb8] sm:$0xf]
        %v1928 = vld [vmem:[%s1 + $0xbc] sm:$0xf]
        %v1929 = vld [vmem:[%s1 + $0xc0] sm:$0xf]
        %v1930 = vld [vmem:[%s1 + $0xc4] sm:$0xf]
        %v1931 = vld [vmem:[%s1 + $0xc8] sm:$0xf]
        %v1932 = vld [vmem:[%s1 + $0xcc] sm:$0xf]
        %v1933 = vld [vmem:[%s1 + $0xd0] sm:$0xf]
        %v1934 = vld [vmem:[%s1 + $0xd4] sm:$0xf]
        %v1935 = vld [vmem:[%s1 + $0xd8] sm:$0xf]
        %v1936 = vld [vmem:[%s1 + $0xdc] sm:$0xf]
        %v1937 = vld [vmem:[%s1 + $0xe0] sm:$0xf]
        %v1938 = vld [vmem:[%s1 + $0xe4] sm:$0xf]
        %v1939 = vld [vmem:[%s1 + $0xe8] sm:$0xf]
        %v1940 = vld [vmem:[%s1 + $0xec] sm:$0xf]
        %v1941 = vld [vmem:[%s1 + $0xf0] sm:$0xf]
        %v1942 = vld [vmem:[%s1 + $0xf4] sm:$0xf]
        %v1943 = vld [vmem:[%s1 + $0xf8] sm:$0xf]
        %v1944 = vld [vmem:[%s1 + $0xfc] sm:$0xf]
        %v1945 = vld [vmem:[%s1 + $0x100] sm:$0xf]
        %v1946 = vld [vmem:[%s1 + $0x104] sm:$0xf]
        %v1947 = vld [vmem:[%s1 + $0x108] sm:$0xf]
        %v1948 = vld [vmem:[%s1 + $0x10c] sm:$0xf]
        %v1949 = vld [vmem:[%s1 + $0x110] sm:$0xf]
        %v1950 = vld [vmem:[%s1 + $0x114] sm:$0xf]
        %v1951 = vld [vmem:[%s1 + $0x118] sm:$0xf]
        %v1952 = vld [vmem:[%s1 + $0x11c] sm:$0xf]
        %v1953 = vld [vmem:[%s1 + $0x120] sm:$0xf]
        %v1954 = vld [vmem:[%s1 + $0x124] sm:$0xf]
        %v1955 = vld [vmem:[%s1 + $0x128] sm:$0xf]
        %v1956 = vld [vmem:[%s1 + $0x12c] sm:$0xf]
        %v1957 = vld [vmem:[%s1 + $0x130] sm:$0xf]
        %v1958 = vld [vmem:[%s1 + $0x134] sm:$0xf]
        %v1959 = vld [vmem:[%s1 + $0x138] sm:$0xf]
        %v1960 = vld [vmem:[%s1 + $0x13c] sm:$0xf]
        %v1961 = vld [vmem:[%s1 + $0x140] sm:$0xf]
        %v1962 = vld [vmem:[%s1 + $0x144] sm:$0xf]
        %v1963 = vld [vmem:[%s1 + $0x148] sm:$0xf]
        %v1964 = vld [vmem:[%s1 + $0x14c] sm:$0xf]
        %v1965 = vld [vmem:[%s1 + $0x150] sm:$0xf]
        %v1966 = vld [vmem:[%s1 + $0x154] sm:$0xf]
        %v1967 = vld [vmem:[%s1 + $0x158] sm:$0xf]
        %v1968 = vld [vmem:[%s1 + $0x15c] sm:$0xf]
        %v1969 = vld [vmem:[%s1 + $0x160] sm:$0xf]
        %v1970 = vld [vmem:[%s1 + $0x164] sm:$0xf]
        %v1971 = vld [vmem:[%s1 + $0x168] sm:$0xf]
        %v1972 = vld [vmem:[%s1 + $0x16c] sm:$0xf]
        %v1973 = vld [vmem:[%s1 + $0x170] sm:$0xf]
        %v1974 = vld [vmem:[%s1 + $0x174] sm:$0xf]
        %v1975 = vld [vmem:[%s1 + $0x178] sm:$0xf]
        %v1976 = vld [vmem:[%s1 + $0x17c] sm:$0xf]
        %v1977 = vld [vmem:[%s1 + $0x180] sm:$0xf]
        %v1978 = vld [vmem:[%s1 + $0x184] sm:$0xf]
        %v1979 = vld [vmem:[%s1 + $0x188] sm:$0xf]
        %v1980 = vld [vmem:[%s1 + $0x18c] sm:$0xf]
        %v1981 = vld [vmem:[%s1 + $0x190] sm:$0xf]
        %v1982 = vld [vmem:[%s1 + $0x194] sm:$0xf]
        %v1983 = vld [vmem:[%s1 + $0x198] sm:$0xf]
        %v1984 = vld [vmem:[%s1 + $0x19c] sm:$0xf]
        %v1985 = vld [vmem:[%s1 + $0x1a0] sm:$0xf]
        %v1986 = vld [vmem:[%s1 + $0x1a4] sm:$0xf]
        %v1987 = vld [vmem:[%s1 + $0x1a8] sm:$0xf]
        %v1988 = vld [vmem:[%s1 + $0x1ac] sm:$0xf]
        %v1989 = vld [vmem:[%s1 + $0x1b0] sm:$0xf]
        %v1990 = vld [vmem:[%s1 + $0x1b4] sm:$0xf]
        %v1991 = vld [vmem:[%s1 + $0x1b8] sm:$0xf]
        %v1992 = vld [vmem:[%s1 + $0x1bc] sm:$0xf]
        %v1993 = vld [vmem:[%s1 + $0x1c0] sm:$0xf]
        %v1994 = vld [vmem:[%s1 + $0x1c4] sm:$0xf]
        %v1995 = vld [vmem:[%s1 + $0x1c8] sm:$0xf]
        %v1996 = vld [vmem:[%s1 + $0x1cc] sm:$0xf]
        %v1997 = vld [vmem:[%s1 + $0x1d0] sm:$0xf]
        %v1998 = vld [vmem:[%s1 + $0x1d4] sm:$0xf]
        %v1999 = vld [vmem:[%s1 + $0x1d8] sm:$0xf]
        %v2000 = vld [vmem:[%s1 + $0x1dc] sm:$0xf]
        %v2001 = vld [vmem:[%s1 + $0x1e0] sm:$0xf]
        %v2002 = vld [vmem:[%s1 + $0x1e4] sm:$0xf]
        %v2003 = vld [vmem:[%s1 + $0x1e8] sm:$0xf]
        %v2004 = vld [vmem:[%s1 + $0x1ec] sm:$0xf]
        %v2005 = vld [vmem:[%s1 + $0x1f0] sm:$0xf]
        %v2006 = vld [vmem:[%s1 + $0x1f4] sm:$0xf]
        %v2007 = vld [vmem:[%s1 + $0x1f8] sm:$0xf]
        %v2008 = vld [vmem:[%s1 + $0x1fc] sm:$0xf]
        %v2009 = vld [vmem:[%s1 + $0x200] sm:$0xf]
        %v2010 = vld [vmem:[%s1 + $0x204] sm:$0xf]
        %v2011 = vld [vmem:[%s1 + $0x208] sm:$0xf]
        %v2012 = vld [vmem:[%s1 + $0x20c] sm:$0xf]
        %v2013 = vld [vmem:[%s1 + $0x210] sm:$0xf]
        %v2014 = vld [vmem:[%s1 + $0x214] sm:$0xf]
        %v2015 = vld [vmem:[%s1 + $0x218] sm:$0xf]
        %v2016 = vld [vmem:[%s1 + $0x21c] sm:$0xf]
        %v2017 = vld [vmem:[%s1 + $0x220] sm:$0xf]
        %v2018 = vld [vmem:[%s1 + $0x224] sm:$0xf]
        %v2019 = vld [vmem:[%s1 + $0x228] sm:$0xf]
        %v2020 = vld [vmem:[%s1 + $0x22c] sm:$0xf]
        %v2021 = vld [vmem:[%s1 + $0x230] sm:$0xf]
        %v2022 = vld [vmem:[%s1 + $0x234] sm:$0xf]
        %v2023 = vld [vmem:[%s1 + $0x238] sm:$0xf]
        %v2024 = vld [vmem:[%s1 + $0x23c] sm:$0xf]
        %v2169 = vunpack.c.l.b16 %v1881
        %v2170 = vunpack.c.l.b16 %v1882
        %v2171 = vunpack.c.l.b16 %v1883
        %v2172 = vunpack.c.l.b16 %v1884
        %v2173 = vunpack.c.l.b16 %v1885
        %v2174 = vunpack.c.l.b16 %v1886
        %v2175 = vunpack.c.l.b16 %v1887
        %v2176 = vunpack.c.l.b16 %v1888
        %v2177 = vunpack.c.l.b16 %v1889
        %v2178 = vunpack.c.l.b16 %v1890
        %v2179 = vunpack.c.l.b16 %v1891
        %v2180 = vunpack.c.l.b16 %v1892
        %v2181 = vunpack.c.l.b16 %v1893
        %v2182 = vunpack.c.l.b16 %v1894
        %v2183 = vunpack.c.l.b16 %v1895
        %v2184 = vunpack.c.l.b16 %v1896
        %v2185 = vunpack.c.l.b16 %v1897
        %v2186 = vunpack.c.l.b16 %v1898
        %v2187 = vunpack.c.l.b16 %v1899
        %v2188 = vunpack.c.l.b16 %v1900
        %v2189 = vunpack.c.l.b16 %v1901
        %v2190 = vunpack.c.l.b16 %v1902
        %v2191 = vunpack.c.l.b16 %v1903
        %v2192 = vunpack.c.l.b16 %v1904
        %v2193 = vunpack.c.l.b16 %v1905
        %v2194 = vunpack.c.l.b16 %v1906
        %v2195 = vunpack.c.l.b16 %v1907
        %v2196 = vunpack.c.l.b16 %v1908
        %v2197 = vunpack.c.l.b16 %v1909
        %v2198 = vunpack.c.l.b16 %v1910
        %v2199 = vunpack.c.l.b16 %v1911
        %v2200 = vunpack.c.l.b16 %v1912
        %v2201 = vunpack.c.l.b16 %v1913
        %v2202 = vunpack.c.l.b16 %v1914
        %v2203 = vunpack.c.l.b16 %v1915
        %v2204 = vunpack.c.l.b16 %v1916
        %v2205 = vunpack.c.l.b16 %v1917
        %v2206 = vunpack.c.l.b16 %v1918
        %v2207 = vunpack.c.l.b16 %v1919
        %v2208 = vunpack.c.l.b16 %v1920
        %v2209 = vunpack.c.l.b16 %v1921
        %v2210 = vunpack.c.l.b16 %v1922
        %v2211 = vunpack.c.l.b16 %v1923
        %v2212 = vunpack.c.l.b16 %v1924
        %v2213 = vunpack.c.l.b16 %v1925
        %v2214 = vunpack.c.l.b16 %v1926
        %v2215 = vunpack.c.l.b16 %v1927
        %v2216 = vunpack.c.l.b16 %v1928
        %v2217 = vunpack.c.l.b16 %v1929
        %v2218 = vunpack.c.l.b16 %v1930
        %v2219 = vunpack.c.l.b16 %v1931
        %v2220 = vunpack.c.l.b16 %v1932
        %v2221 = vunpack.c.l.b16 %v1933
        %v2222 = vunpack.c.l.b16 %v1934
        %v2223 = vunpack.c.l.b16 %v1935
        %v2224 = vunpack.c.l.b16 %v1936
        %v2225 = vunpack.c.l.b16 %v1937
        %v2226 = vunpack.c.l.b16 %v1938
        %v2227 = vunpack.c.l.b16 %v1939
        %v2228 = vunpack.c.l.b16 %v1940
        %v2229 = vunpack.c.l.b16 %v1941
        %v2230 = vunpack.c.l.b16 %v1942
        %v2231 = vunpack.c.l.b16 %v1943
        %v2232 = vunpack.c.l.b16 %v1944
        %v2233 = vunpack.c.l.b16 %v1945
        %v2234 = vunpack.c.l.b16 %v1946
        %v2235 = vunpack.c.l.b16 %v1947
        %v2236 = vunpack.c.l.b16 %v1948
        %v2237 = vunpack.c.l.b16 %v1949
        %v2238 = vunpack.c.l.b16 %v1950
        %v2239 = vunpack.c.l.b16 %v1951
        %v2240 = vunpack.c.l.b16 %v1952
        %v2241 = vunpack.c.l.b16 %v1953
        %v2242 = vunpack.c.l.b16 %v1954
        %v2243 = vunpack.c.l.b16 %v1955
        %v2244 = vunpack.c.l.b16 %v1956
        %v2245 = vunpack.c.l.b16 %v1957
        %v2246 = vunpack.c.l.b16 %v1958
        %v2247 = vunpack.c.l.b16 %v1959
        %v2248 = vunpack.c.l.b16 %v1960
        %v2249 = vunpack.c.l.b16 %v1961
        %v2250 = vunpack.c.l.b16 %v1962
        %v2251 = vunpack.c.l.b16 %v1963
        %v2252 = vunpack.c.l.b16 %v1964
        %v2253 = vunpack.c.l.b16 %v1965
        %v2254 = vunpack.c.l.b16 %v1966
        %v2255 = vunpack.c.l.b16 %v1967
        %v2256 = vunpack.c.l.b16 %v1968
        %v2257 = vunpack.c.l.b16 %v1969
        %v2258 = vunpack.c.l.b16 %v1970
        %v2259 = vunpack.c.l.b16 %v1971
        %v2260 = vunpack.c.l.b16 %v1972
        %v2261 = vunpack.c.l.b16 %v1973
        %v2262 = vunpack.c.l.b16 %v1974
        %v2263 = vunpack.c.l.b16 %v1975
        %v2264 = vunpack.c.l.b16 %v1976
        %v2265 = vunpack.c.l.b16 %v1977
        %v2266 = vunpack.c.l.b16 %v1978
        %v2267 = vunpack.c.l.b16 %v1979
        %v2268 = vunpack.c.l.b16 %v1980
        %v2269 = vunpack.c.l.b16 %v1981
        %v2270 = vunpack.c.l.b16 %v1982
        %v2271 = vunpack.c.l.b16 %v1983
        %v2272 = vunpack.c.l.b16 %v1984
        %v2273 = vunpack.c.l.b16 %v1985
        %v2274 = vunpack.c.l.b16 %v1986
        %v2275 = vunpack.c.l.b16 %v1987
        %v2276 = vunpack.c.l.b16 %v1988
        %v2277 = vunpack.c.l.b16 %v1989
        %v2278 = vunpack.c.l.b16 %v1990
        %v2279 = vunpack.c.l.b16 %v1991
        %v2280 = vunpack.c.l.b16 %v1992
        %v2281 = vunpack.c.l.b16 %v1993
        %v2282 = vunpack.c.l.b16 %v1994
        %v2283 = vunpack.c.l.b16 %v1995
        %v2284 = vunpack.c.l.b16 %v1996
        %v2285 = vunpack.c.l.b16 %v1997
        %v2286 = vunpack.c.l.b16 %v1998
        %v2287 = vunpack.c.l.b16 %v1999
        %v2288 = vunpack.c.l.b16 %v2000
        %v2289 = vunpack.c.l.b16 %v2001
        %v2290 = vunpack.c.l.b16 %v2002
        %v2291 = vunpack.c.l.b16 %v2003
        %v2292 = vunpack.c.l.b16 %v2004
        %v2293 = vunpack.c.l.b16 %v2005
        %v2294 = vunpack.c.l.b16 %v2006
        %v2295 = vunpack.c.l.b16 %v2007
        %v2296 = vunpack.c.l.b16 %v2008
        %v2297 = vunpack.c.l.b16 %v2009
        %v2298 = vunpack.c.l.b16 %v2010
        %v2299 = vunpack.c.l.b16 %v2011
        %v2300 = vunpack.c.l.b16 %v2012
        %v2301 = vunpack.c.l.b16 %v2013
        %v2302 = vunpack.c.l.b16 %v2014
        %v2303 = vunpack.c.l.b16 %v2015
        %v2304 = vunpack.c.l.b16 %v2016
        %v2305 = vunpack.c.l.b16 %v2017
        %v2306 = vunpack.c.l.b16 %v2018
        %v2307 = vunpack.c.l.b16 %v2019
        %v2308 = vunpack.c.l.b16 %v2020
        %v2309 = vunpack.c.l.b16 %v2021
        %v2310 = vunpack.c.l.b16 %v2022
        %v2311 = vunpack.c.l.b16 %v2023
        %v2312 = vunpack.c.l.b16 %v2024
        %v2313 = vpack.c.b16 %v2170, %v2169
        %v2314 = vpack.c.b16 %v2172, %v2171
        %v2315 = vpack.c.b16 %v2174, %v2173
        %v2316 = vpack.c.b16 %v2176, %v2175
        %v2317 = vpack.c.b16 %v2178, %v2177
        %v2318 = vpack.c.b16 %v2180, %v2179
        %v2319 = vpack.c.b16 %v2182, %v2181
        %v2320 = vpack.c.b16 %v2184, %v2183
        %v2321 = vpack.c.b16 %v2186, %v2185
        %v2322 = vpack.c.b16 %v2188, %v2187
        %v2323 = vpack.c.b16 %v2190, %v2189
        %v2324 = vpack.c.b16 %v2192, %v2191
        %v2325 = vpack.c.b16 %v2194, %v2193
        %v2326 = vpack.c.b16 %v2196, %v2195
        %v2327 = vpack.c.b16 %v2198, %v2197
        %v2328 = vpack.c.b16 %v2200, %v2199
        %v2329 = vpack.c.b16 %v2202, %v2201
        %v2330 = vpack.c.b16 %v2204, %v2203
        %v2331 = vpack.c.b16 %v2206, %v2205
        %v2332 = vpack.c.b16 %v2208, %v2207
        %v2333 = vpack.c.b16 %v2210, %v2209
        %v2334 = vpack.c.b16 %v2212, %v2211
        %v2335 = vpack.c.b16 %v2214, %v2213
        %v2336 = vpack.c.b16 %v2216, %v2215
        %v2337 = vpack.c.b16 %v2218, %v2217
        %v2338 = vpack.c.b16 %v2220, %v2219
        %v2339 = vpack.c.b16 %v2222, %v2221
        %v2340 = vpack.c.b16 %v2224, %v2223
        %v2341 = vpack.c.b16 %v2226, %v2225
        %v2342 = vpack.c.b16 %v2228, %v2227
        %v2343 = vpack.c.b16 %v2230, %v2229
        %v2344 = vpack.c.b16 %v2232, %v2231
        %v2345 = vpack.c.b16 %v2234, %v2233
        %v2346 = vpack.c.b16 %v2236, %v2235
        %v2347 = vpack.c.b16 %v2238, %v2237
        %v2348 = vpack.c.b16 %v2240, %v2239
        %v2349 = vpack.c.b16 %v2242, %v2241
        %v2350 = vpack.c.b16 %v2244, %v2243
        %v2351 = vpack.c.b16 %v2246, %v2245
        %v2352 = vpack.c.b16 %v2248, %v2247
        %v2353 = vpack.c.b16 %v2250, %v2249
        %v2354 = vpack.c.b16 %v2252, %v2251
        %v2355 = vpack.c.b16 %v2254, %v2253
        %v2356 = vpack.c.b16 %v2256, %v2255
        %v2357 = vpack.c.b16 %v2258, %v2257
        %v2358 = vpack.c.b16 %v2260, %v2259
        %v2359 = vpack.c.b16 %v2262, %v2261
        %v2360 = vpack.c.b16 %v2264, %v2263
        %v2361 = vpack.c.b16 %v2266, %v2265
        %v2362 = vpack.c.b16 %v2268, %v2267
        %v2363 = vpack.c.b16 %v2270, %v2269
        %v2364 = vpack.c.b16 %v2272, %v2271
        %v2365 = vpack.c.b16 %v2274, %v2273
        %v2366 = vpack.c.b16 %v2276, %v2275
        %v2367 = vpack.c.b16 %v2278, %v2277
        %v2368 = vpack.c.b16 %v2280, %v2279
        %v2369 = vpack.c.b16 %v2282, %v2281
        %v2370 = vpack.c.b16 %v2284, %v2283
        %v2371 = vpack.c.b16 %v2286, %v2285
        %v2372 = vpack.c.b16 %v2288, %v2287
        %v2373 = vpack.c.b16 %v2290, %v2289
        %v2374 = vpack.c.b16 %v2292, %v2291
        %v2375 = vpack.c.b16 %v2294, %v2293
        %v2376 = vpack.c.b16 %v2296, %v2295
        %v2377 = vpack.c.b16 %v2298, %v2297
        %v2378 = vpack.c.b16 %v2300, %v2299
        %v2379 = vpack.c.b16 %v2302, %v2301
        %v2380 = vpack.c.b16 %v2304, %v2303
        %v2381 = vpack.c.b16 %v2306, %v2305
        %v2382 = vpack.c.b16 %v2308, %v2307
        %v2383 = vpack.c.b16 %v2310, %v2309
        %v2384 = vpack.c.b16 %v2312, %v2311
        %2457 = vmatprep.subr.bf16.mxu0 0
        %2458 = vmatpush1.bf16.msra.mxu0 %v2313
        %2459 = vmatprep.subr.bf16.mxu0 0
        %2460 = vmatpush1.bf16.msra.mxu0 %v2314
        %2461 = vmatprep.subr.bf16.mxu0 0
        %2462 = vmatpush1.bf16.msra.mxu0 %v2315
        %2463 = vmatprep.subr.bf16.mxu0 0
        %2464 = vmatpush1.bf16.msra.mxu0 %v2316
        %2465 = vmatprep.subr.bf16.mxu0 0
        %2466 = vmatpush1.bf16.msra.mxu0 %v2317
        %2467 = vmatprep.subr.bf16.mxu0 0
        %2468 = vmatpush1.bf16.msra.mxu0 %v2318
        %2469 = vmatprep.subr.bf16.mxu0 0
        %2470 = vmatpush1.bf16.msra.mxu0 %v2319
        %2471 = vmatprep.subr.bf16.mxu0 0
        %2472 = vmatpush1.bf16.msra.mxu0 %v2320
        %2473 = vmatprep.subr.bf16.mxu0 0
        %2474 = vmatpush1.bf16.msra.mxu0 %v2321
        %2475 = vmatprep.subr.bf16.mxu0 0
        %2476 = vmatpush1.bf16.msra.mxu0 %v2322
        %2477 = vmatprep.subr.bf16.mxu0 0
        %2478 = vmatpush1.bf16.msra.mxu0 %v2323
        %2479 = vmatprep.subr.bf16.mxu0 0
        %2480 = vmatpush1.bf16.msra.mxu0 %v2324
        %2481 = vmatprep.subr.bf16.mxu0 0
        %2482 = vmatpush1.bf16.msra.mxu0 %v2325
        %2483 = vmatprep.subr.bf16.mxu0 0
        %2484 = vmatpush1.bf16.msra.mxu0 %v2326
        %2485 = vmatprep.subr.bf16.mxu0 0
        %2486 = vmatpush1.bf16.msra.mxu0 %v2327
        %2487 = vmatprep.subr.bf16.mxu0 0
        %2488 = vmatpush1.bf16.msra.mxu0 %v2328
        %2489 = vmatprep.mubr.bf16.mxu0 %v643
        %2490 = vmatmul.mubr.bf16.gmra.mrb[0].mxu0 %v551
        %v2491 = vpop.f32.mrb[0].mxu0
        %v2492 = vadd.f32 0.0, %v2491
        %v2493 = vpop.f32.mrb[0].mxu0
        %v2494 = vpop.f32.mrb[0].mxu0
        %v2495 = vadd.f32 0.0, %v2494
        %v2496 = vpop.f32.mrb[0].mxu0
        %2497 = vmatprep.mubr.bf16.mxu0 %v655
        %2498 = vmatmul.mubr.bf16.gmra.mrb[0].mxu0 %v552
        %v2499 = vpop.f32.mrb[0].mxu0
        %v2500 = vadd.f32 0.0, %v2499
        %v2501 = vpop.f32.mrb[0].mxu0
        %v2502 = vpop.f32.mrb[0].mxu0
        %v2503 = vadd.f32 0.0, %v2502
        %v2504 = vpop.f32.mrb[0].mxu0
        %2505 = vmatprep.mubr.bf16.mxu0 %v667
        %2506 = vmatmul.mubr.bf16.gmra.mrb[0].mxu0 %v553
        %v2507 = vpop.f32.mrb[0].mxu0
        %v2508 = vadd.f32 0.0, %v2507
        %v2509 = vpop.f32.mrb[0].mxu0
        %v2510 = vpop.f32.mrb[0].mxu0
        %v2511 = vadd.f32 0.0, %v2510
        %v2512 = vpop.f32.mrb[0].mxu0
        %2513 = vmatprep.mubr.bf16.mxu0 %v679
        %2514 = vmatmul.mubr.bf16.gmra.mrb[0].mxu0 %v554
        %v2515 = vpop.f32.mrb[0].mxu0
        %v2516 = vadd.f32 0.0, %v2515
        %v2517 = vpop.f32.mrb[0].mxu0
        %v2518 = vpop.f32.mrb[0].mxu0
        %v2519 = vadd.f32 0.0, %v2518
        %v2520 = vpop.f32.mrb[0].mxu0
        %2521 = vmatprep.mubr.bf16.mxu0 %v691
        %2522 = vmatmul.mubr.bf16.gmra.mrb[0].mxu0 %v555
        %v2523 = vpop.f32.mrb[0].mxu0
        %v2524 = vadd.f32 0.0, %v2523
        %v2525 = vpop.f32.mrb[0].mxu0
        %v2526 = vpop.f32.mrb[0].mxu0
        %v2527 = vadd.f32 0.0, %v2526
        %v2528 = vpop.f32.mrb[0].mxu0
        %2529 = vmatprep.mubr.bf16.mxu0 %v703
        %2530 = vmatmul.mubr.bf16.gmra.mrb[0].mxu0 %v556
        %v2531 = vpop.f32.mrb[0].mxu0
        %v2532 = vadd.f32 0.0, %v2531
        %v2533 = vpop.f32.mrb[0].mxu0
        %v2534 = vpop.f32.mrb[0].mxu0
        %v2535 = vadd.f32 0.0, %v2534
        %v2536 = vpop.f32.mrb[0].mxu0
        %2537 = vmatprep.mubr.bf16.mxu0 %v715
        %2538 = vmatmul.mubr.bf16.gmra.mrb[0].mxu0 %v557
        %v2539 = vpop.f32.mrb[0].mxu0
        %v2540 = vadd.f32 0.0, %v2539
        %v2541 = vpop.f32.mrb[0].mxu0
        %v2542 = vpop.f32.mrb[0].mxu0
        %v2543 = vadd.f32 0.0, %v2542
        %v2544 = vpop.f32.mrb[0].mxu0
        %2545 = vmatprep.mubr.bf16.mxu0 %v727
        %2546 = vmatmul.mubr.bf16.gmra.mrb[0].mxu0 %v558
        %v2547 = vpop.f32.mrb[0].mxu0
        %v2548 = vadd.f32 0.0, %v2547
        %v2549 = vpop.f32.mrb[0].mxu0
        %v2550 = vpop.f32.mrb[0].mxu0
        %v2551 = vadd.f32 0.0, %v2550
        %v2552 = vpop.f32.mrb[0].mxu0
        %2553 = vmatprep.mubr.bf16.mxu0 %v739
        %2554 = vmatmul.mubr.bf16.gmra.mrb[0].mxu0 %v559
        %v2555 = vpop.f32.mrb[0].mxu0
        %v2556 = vadd.f32 0.0, %v2555
        %v2557 = vpop.f32.mrb[0].mxu0
        %v2558 = vpop.f32.mrb[0].mxu0
        %v2559 = vadd.f32 0.0, %v2558
        %v2560 = vpop.f32.mrb[0].mxu0
        %2561 = vmatprep.mubr.bf16.mxu0 %v751
        %2562 = vmatmul.mubr.bf16.gmra.mrb[0].mxu0 %v560
        %v2563 = vpop.f32.mrb[0].mxu0
        %v2564 = vadd.f32 0.0, %v2563
        %v2565 = vpop.f32.mrb[0].mxu0
        %v2566 = vpop.f32.mrb[0].mxu0
        %v2567 = vadd.f32 0.0, %v2566
        %v2568 = vpop.f32.mrb[0].mxu0
        %2569 = vmatprep.mubr.bf16.mxu0 %v763
        %2570 = vmatmul.mubr.bf16.gmra.mrb[0].mxu0 %v561
        %v2571 = vpop.f32.mrb[0].mxu0
        %v2572 = vadd.f32 0.0, %v2571
        %v2573 = vpop.f32.mrb[0].mxu0
        %v2574 = vpop.f32.mrb[0].mxu0
        %v2575 = vadd.f32 0.0, %v2574
        %v2576 = vpop.f32.mrb[0].mxu0
        %2577 = vmatprep.mubr.bf16.mxu0 %v775
        %2578 = vmatmul.mubr.bf16.gmra.mrb[0].mxu0 %v562
        %v2579 = vpop.f32.mrb[0].mxu0
        %v2580 = vadd.f32 0.0, %v2579
        %v2581 = vpop.f32.mrb[0].mxu0
        %v2582 = vpop.f32.mrb[0].mxu0
        %v2583 = vadd.f32 0.0, %v2582
        %v2584 = vpop.f32.mrb[0].mxu0
        %2585 = vmatprep.mubr.bf16.mxu0 %v787
        %2586 = vmatmul.mubr.bf16.gmra.mrb[0].mxu0 %v563
        %v2587 = vpop.f32.mrb[0].mxu0
        %v2588 = vadd.f32 0.0, %v2587
        %v2589 = vpop.f32.mrb[0].mxu0
        %v2590 = vpop.f32.mrb[0].mxu0
        %v2591 = vadd.f32 0.0, %v2590
        %v2592 = vpop.f32.mrb[0].mxu0
        %2593 = vmatprep.mubr.bf16.mxu0 %v799
        %2594 = vmatmul.mubr.bf16.gmra.mrb[0].mxu0 %v564
        %v2595 = vpop.f32.mrb[0].mxu0
        %v2596 = vadd.f32 0.0, %v2595
        %v2597 = vpop.f32.mrb[0].mxu0
        %v2598 = vpop.f32.mrb[0].mxu0
        %v2599 = vadd.f32 0.0, %v2598
        %v2600 = vpop.f32.mrb[0].mxu0
        %2601 = vmatprep.mubr.bf16.mxu0 %v811
        %2602 = vmatmul.mubr.bf16.gmra.mrb[0].mxu0 %v565
        %v2603 = vpop.f32.mrb[0].mxu0
        %v2604 = vadd.f32 0.0, %v2603
        %v2605 = vpop.f32.mrb[0].mxu0
        %v2606 = vpop.f32.mrb[0].mxu0
        %v2607 = vadd.f32 0.0, %v2606
        %v2608 = vpop.f32.mrb[0].mxu0
        %2609 = vmatprep.mubr.bf16.mxu0 %v823
        %2610 = vmatmul.mubr.bf16.gmra.mrb[0].mxu0 %v566
        %v2611 = vpop.f32.mrb[0].mxu0
        %v2612 = vadd.f32 0.0, %v2611
        %v2613 = vpop.f32.mrb[0].mxu0
        %v2614 = vpop.f32.mrb[0].mxu0
        %v2615 = vadd.f32 0.0, %v2614
        %v2616 = vpop.f32.mrb[0].mxu0
        %2617 = vdwg.mxu0
        %2618 = vmatprep.subr.bf16.mxu0 0
        %2619 = vmatpush1.bf16.msra.mxu0 %v2329
        %2620 = vmatprep.subr.bf16.mxu0 0
        %2621 = vmatpush1.bf16.msra.mxu0 %v2330
        %2622 = vmatprep.subr.bf16.mxu0 0
        %2623 = vmatpush1.bf16.msra.mxu0 %v2331
        %2624 = vmatprep.subr.bf16.mxu0 0
        %2625 = vmatpush1.bf16.msra.mxu0 %v2332
        %2626 = vmatprep.subr.bf16.mxu0 0
        %2627 = vmatpush1.bf16.msra.mxu0 %v2333
        %2628 = vmatprep.subr.bf16.mxu0 0
        %2629 = vmatpush1.bf16.msra.mxu0 %v2334
        %2630 = vmatprep.subr.bf16.mxu0 0
        %2631 = vmatpush1.bf16.msra.mxu0 %v2335
        %2632 = vmatprep.subr.bf16.mxu0 0
        %2633 = vmatpush1.bf16.msra.mxu0 %v2336
        %2634 = vmatprep.subr.bf16.mxu0 0
        %2635 = vmatpush1.bf16.msra.mxu0 %v2337
        %2636 = vmatprep.subr.bf16.mxu0 0
        %2637 = vmatpush1.bf16.msra.mxu0 %v2338
        %2638 = vmatprep.subr.bf16.mxu0 0
        %2639 = vmatpush1.bf16.msra.mxu0 %v2339
        %2640 = vmatprep.subr.bf16.mxu0 0
        %2641 = vmatpush1.bf16.msra.mxu0 %v2340
        %2642 = vmatprep.subr.bf16.mxu0 0
        %2643 = vmatpush1.bf16.msra.mxu0 %v2341
        %2644 = vmatprep.subr.bf16.mxu0 0
        %2645 = vmatpush1.bf16.msra.mxu0 %v2342
        %2646 = vmatprep.subr.bf16.mxu0 0
        %2647 = vmatpush1.bf16.msra.mxu0 %v2343
        %2648 = vmatprep.subr.bf16.mxu0 0
        %2649 = vmatpush1.bf16.msra.mxu0 %v2344
        %2650 = vmatprep.mubr.bf16.mxu0 %v1017
        %2651 = vmatmul.mubr.bf16.gmra.mrb[0].mxu0 %v891
        %v2652 = vpop.f32.mrb[0].mxu0
        %v2653 = vadd.f32 %v2492, %v2652
        %v2654 = vpop.f32.mrb[0].mxu0
        %v2655 = vpop.f32.mrb[0].mxu0
        %v2656 = vadd.f32 %v2495, %v2655
        %v2657 = vpop.f32.mrb[0].mxu0
        %2658 = vmatprep.mubr.bf16.mxu0 %v1018
        %2659 = vmatmul.mubr.bf16.gmra.mrb[0].mxu0 %v894
        %v2660 = vpop.f32.mrb[0].mxu0
        %v2661 = vadd.f32 %v2500, %v2660
        %v2662 = vpop.f32.mrb[0].mxu0
        %v2663 = vpop.f32.mrb[0].mxu0
        %v2664 = vadd.f32 %v2503, %v2663
        %v2665 = vpop.f32.mrb[0].mxu0
        %2666 = vmatprep.mubr.bf16.mxu0 %v1019
        %2667 = vmatmul.mubr.bf16.gmra.mrb[0].mxu0 %v897
        %v2668 = vpop.f32.mrb[0].mxu0
        %v2669 = vadd.f32 %v2508, %v2668
        %v2670 = vpop.f32.mrb[0].mxu0
        %v2671 = vpop.f32.mrb[0].mxu0
        %v2672 = vadd.f32 %v2511, %v2671
        %v2673 = vpop.f32.mrb[0].mxu0
        %2674 = vmatprep.mubr.bf16.mxu0 %v1020
        %2675 = vmatmul.mubr.bf16.gmra.mrb[0].mxu0 %v900
        %v2676 = vpop.f32.mrb[0].mxu0
        %v2677 = vadd.f32 %v2516, %v2676
        %v2678 = vpop.f32.mrb[0].mxu0
        %v2679 = vpop.f32.mrb[0].mxu0
        %v2680 = vadd.f32 %v2519, %v2679
        %v2681 = vpop.f32.mrb[0].mxu0
        %2682 = vmatprep.mubr.bf16.mxu0 %v1021
        %2683 = vmatmul.mubr.bf16.gmra.mrb[0].mxu0 %v903
        %v2684 = vpop.f32.mrb[0].mxu0
        %v2685 = vadd.f32 %v2524, %v2684
        %v2686 = vpop.f32.mrb[0].mxu0
        %v2687 = vpop.f32.mrb[0].mxu0
        %v2688 = vadd.f32 %v2527, %v2687
        %v2689 = vpop.f32.mrb[0].mxu0
        %2690 = vmatprep.mubr.bf16.mxu0 %v1022
        %2691 = vmatmul.mubr.bf16.gmra.mrb[0].mxu0 %v906
        %v2692 = vpop.f32.mrb[0].mxu0
        %v2693 = vadd.f32 %v2532, %v2692
        %v2694 = vpop.f32.mrb[0].mxu0
        %v2695 = vpop.f32.mrb[0].mxu0
        %v2696 = vadd.f32 %v2535, %v2695
        %v2697 = vpop.f32.mrb[0].mxu0
        %2698 = vmatprep.mubr.bf16.mxu0 %v1023
        %2699 = vmatmul.mubr.bf16.gmra.mrb[0].mxu0 %v909
        %v2700 = vpop.f32.mrb[0].mxu0
        %v2701 = vadd.f32 %v2540, %v2700
        %v2702 = vpop.f32.mrb[0].mxu0
        %v2703 = vpop.f32.mrb[0].mxu0
        %v2704 = vadd.f32 %v2543, %v2703
        %v2705 = vpop.f32.mrb[0].mxu0
        %2706 = vmatprep.mubr.bf16.mxu0 %v1024
        %2707 = vmatmul.mubr.bf16.gmra.mrb[0].mxu0 %v912
        %v2708 = vpop.f32.mrb[0].mxu0
        %v2709 = vadd.f32 %v2548, %v2708
        %v2710 = vpop.f32.mrb[0].mxu0
        %v2711 = vpop.f32.mrb[0].mxu0
        %v2712 = vadd.f32 %v2551, %v2711
        %v2713 = vpop.f32.mrb[0].mxu0
        %2714 = vmatprep.mubr.bf16.mxu0 %v1025
        %2715 = vmatmul.mubr.bf16.gmra.mrb[0].mxu0 %v915
        %v2716 = vpop.f32.mrb[0].mxu0
        %v2717 = vadd.f32 %v2556, %v2716
        %v2718 = vpop.f32.mrb[0].mxu0
        %v2719 = vpop.f32.mrb[0].mxu0
        %v2720 = vadd.f32 %v2559, %v2719
        %v2721 = vpop.f32.mrb[0].mxu0
        %2722 = vmatprep.mubr.bf16.mxu0 %v1026
        %2723 = vmatmul.mubr.bf16.gmra.mrb[0].mxu0 %v918
        %v2724 = vpop.f32.mrb[0].mxu0
        %v2725 = vadd.f32 %v2564, %v2724
        %v2726 = vpop.f32.mrb[0].mxu0
        %v2727 = vpop.f32.mrb[0].mxu0
        %v2728 = vadd.f32 %v2567, %v2727
        %v2729 = vpop.f32.mrb[0].mxu0
        %2730 = vmatprep.mubr.bf16.mxu0 %v1027
        %2731 = vmatmul.mubr.bf16.gmra.mrb[0].mxu0 %v921
        %v2732 = vpop.f32.mrb[0].mxu0
        %v2733 = vadd.f32 %v2572, %v2732
        %v2734 = vpop.f32.mrb[0].mxu0
        %v2735 = vpop.f32.mrb[0].mxu0
        %v2736 = vadd.f32 %v2575, %v2735
        %v2737 = vpop.f32.mrb[0].mxu0
        %2738 = vmatprep.mubr.bf16.mxu0 %v1028
        %2739 = vmatmul.mubr.bf16.gmra.mrb[0].mxu0 %v924
        %v2740 = vpop.f32.mrb[0].mxu0
        %v2741 = vadd.f32 %v2580, %v2740
        %v2742 = vpop.f32.mrb[0].mxu0
        %v2743 = vpop.f32.mrb[0].mxu0
        %v2744 = vadd.f32 %v2583, %v2743
        %v2745 = vpop.f32.mrb[0].mxu0
        %2746 = vmatprep.mubr.bf16.mxu0 %v1029
        %2747 = vmatmul.mubr.bf16.gmra.mrb[0].mxu0 %v927
        %v2748 = vpop.f32.mrb[0].mxu0
        %v2749 = vadd.f32 %v2588, %v2748
        %v2750 = vpop.f32.mrb[0].mxu0
        %v2751 = vpop.f32.mrb[0].mxu0
        %v2752 = vadd.f32 %v2591, %v2751
        %v2753 = vpop.f32.mrb[0].mxu0
        %2754 = vmatprep.mubr.bf16.mxu0 %v1030
        %2755 = vmatmul.mubr.bf16.gmra.mrb[0].mxu0 %v930
        %v2756 = vpop.f32.mrb[0].mxu0
        %v2757 = vadd.f32 %v2596, %v2756
        %v2758 = vpop.f32.mrb[0].mxu0
        %v2759 = vpop.f32.mrb[0].mxu0
        %v2760 = vadd.f32 %v2599, %v2759
        %v2761 = vpop.f32.mrb[0].mxu0
        %2762 = vmatprep.mubr.bf16.mxu0 %v1031
        %2763 = vmatmul.mubr.bf16.gmra.mrb[0].mxu0 %v933
        %v2764 = vpop.f32.mrb[0].mxu0
        %v2765 = vadd.f32 %v2604, %v2764
        %v2766 = vpop.f32.mrb[0].mxu0
        %v2767 = vpop.f32.mrb[0].mxu0
        %v2768 = vadd.f32 %v2607, %v2767
        %v2769 = vpop.f32.mrb[0].mxu0
        %2770 = vmatprep.mubr.bf16.mxu0 %v1032
        %2771 = vmatmul.mubr.bf16.gmra.mrb[0].mxu0 %v936
        %v2772 = vpop.f32.mrb[0].mxu0
        %v2773 = vadd.f32 %v2612, %v2772
        %v2774 = vpop.f32.mrb[0].mxu0
        %v2775 = vpop.f32.mrb[0].mxu0
        %v2776 = vadd.f32 %v2615, %v2775
        %v2777 = vpop.f32.mrb[0].mxu0
        %2778 = vdwg.mxu0
        %2779 = vmatprep.subr.bf16.mxu0 0
        %2780 = vmatpush1.bf16.msra.mxu0 %v2345
        %2781 = vmatprep.subr.bf16.mxu0 0
        %2782 = vmatpush1.bf16.msra.mxu0 %v2346
        %2783 = vmatprep.subr.bf16.mxu0 0
        %2784 = vmatpush1.bf16.msra.mxu0 %v2347
        %2785 = vmatprep.subr.bf16.mxu0 0
        %2786 = vmatpush1.bf16.msra.mxu0 %v2348
        %2787 = vmatprep.subr.bf16.mxu0 0
        %2788 = vmatpush1.bf16.msra.mxu0 %v2349
        %2789 = vmatprep.subr.bf16.mxu0 0
        %2790 = vmatpush1.bf16.msra.mxu0 %v2350
        %2791 = vmatprep.subr.bf16.mxu0 0
        %2792 = vmatpush1.bf16.msra.mxu0 %v2351
        %2793 = vmatprep.subr.bf16.mxu0 0
        %2794 = vmatpush1.bf16.msra.mxu0 %v2352
        %2795 = vmatprep.subr.bf16.mxu0 0
        %2796 = vmatpush1.bf16.msra.mxu0 %v2353
        %2797 = vmatprep.subr.bf16.mxu0 0
        %2798 = vmatpush1.bf16.msra.mxu0 %v2354
        %2799 = vmatprep.subr.bf16.mxu0 0
        %2800 = vmatpush1.bf16.msra.mxu0 %v2355
        %2801 = vmatprep.subr.bf16.mxu0 0
        %2802 = vmatpush1.bf16.msra.mxu0 %v2356
        %2803 = vmatprep.subr.bf16.mxu0 0
        %2804 = vmatpush1.bf16.msra.mxu0 %v2357
        %2805 = vmatprep.subr.bf16.mxu0 0
        %2806 = vmatpush1.bf16.msra.mxu0 %v2358
        %2807 = vmatprep.subr.bf16.mxu0 0
        %2808 = vmatpush1.bf16.msra.mxu0 %v2359
        %2809 = vmatprep.subr.bf16.mxu0 0
        %2810 = vmatpush1.bf16.msra.mxu0 %v2360
        %2811 = vmatprep.mubr.bf16.mxu0 %v1355
        %2812 = vmatmul.mubr.bf16.gmra.mrb[0].mxu0 %v1108
        %v2813 = vpop.f32.mrb[0].mxu0
        %v2814 = vadd.f32 %v2653, %v2813
        %v2815 = vpop.f32.mrb[0].mxu0
        %v2816 = vpop.f32.mrb[0].mxu0
        %v2817 = vadd.f32 %v2656, %v2816
        %v2818 = vpop.f32.mrb[0].mxu0
        %2819 = vmatprep.mubr.bf16.mxu0 %v1358
        %2820 = vmatmul.mubr.bf16.gmra.mrb[0].mxu0 %v1120
        %v2821 = vpop.f32.mrb[0].mxu0
        %v2822 = vadd.f32 %v2661, %v2821
        %v2823 = vpop.f32.mrb[0].mxu0
        %v2824 = vpop.f32.mrb[0].mxu0
        %v2825 = vadd.f32 %v2664, %v2824
        %v2826 = vpop.f32.mrb[0].mxu0
        %2827 = vmatprep.mubr.bf16.mxu0 %v1361
        %2828 = vmatmul.mubr.bf16.gmra.mrb[0].mxu0 %v1132
        %v2829 = vpop.f32.mrb[0].mxu0
        %v2830 = vadd.f32 %v2669, %v2829
        %v2831 = vpop.f32.mrb[0].mxu0
        %v2832 = vpop.f32.mrb[0].mxu0
        %v2833 = vadd.f32 %v2672, %v2832
        %v2834 = vpop.f32.mrb[0].mxu0
        %2835 = vmatprep.mubr.bf16.mxu0 %v1364
        %2836 = vmatmul.mubr.bf16.gmra.mrb[0].mxu0 %v1144
        %v2837 = vpop.f32.mrb[0].mxu0
        %v2838 = vadd.f32 %v2677, %v2837
        %v2839 = vpop.f32.mrb[0].mxu0
        %v2840 = vpop.f32.mrb[0].mxu0
        %v2841 = vadd.f32 %v2680, %v2840
        %v2842 = vpop.f32.mrb[0].mxu0
        %2843 = vmatprep.mubr.bf16.mxu0 %v1367
        %2844 = vmatmul.mubr.bf16.gmra.mrb[0].mxu0 %v1156
        %v2845 = vpop.f32.mrb[0].mxu0
        %v2846 = vadd.f32 %v2685, %v2845
        %v2847 = vpop.f32.mrb[0].mxu0
        %v2848 = vpop.f32.mrb[0].mxu0
        %v2849 = vadd.f32 %v2688, %v2848
        %v2850 = vpop.f32.mrb[0].mxu0
        %2851 = vmatprep.mubr.bf16.mxu0 %v1370
        %2852 = vmatmul.mubr.bf16.gmra.mrb[0].mxu0 %v1168
        %v2853 = vpop.f32.mrb[0].mxu0
        %v2854 = vadd.f32 %v2693, %v2853
        %v2855 = vpop.f32.mrb[0].mxu0
        %v2856 = vpop.f32.mrb[0].mxu0
        %v2857 = vadd.f32 %v2696, %v2856
        %v2858 = vpop.f32.mrb[0].mxu0
        %2859 = vmatprep.mubr.bf16.mxu0 %v1373
        %2860 = vmatmul.mubr.bf16.gmra.mrb[0].mxu0 %v1180
        %v2861 = vpop.f32.mrb[0].mxu0
        %v2862 = vadd.f32 %v2701, %v2861
        %v2863 = vpop.f32.mrb[0].mxu0
        %v2864 = vpop.f32.mrb[0].mxu0
        %v2865 = vadd.f32 %v2704, %v2864
        %v2866 = vpop.f32.mrb[0].mxu0
        %2867 = vmatprep.mubr.bf16.mxu0 %v1376
        %2868 = vmatmul.mubr.bf16.gmra.mrb[0].mxu0 %v1192
        %v2869 = vpop.f32.mrb[0].mxu0
        %v2870 = vadd.f32 %v2709, %v2869
        %v2871 = vpop.f32.mrb[0].mxu0
        %v2872 = vpop.f32.mrb[0].mxu0
        %v2873 = vadd.f32 %v2712, %v2872
        %v2874 = vpop.f32.mrb[0].mxu0
        %2875 = vmatprep.mubr.bf16.mxu0 %v1379
        %2876 = vmatmul.mubr.bf16.gmra.mrb[0].mxu0 %v1204
        %v2877 = vpop.f32.mrb[0].mxu0
        %v2878 = vadd.f32 %v2717, %v2877
        %v2879 = vpop.f32.mrb[0].mxu0
        %v2880 = vpop.f32.mrb[0].mxu0
        %v2881 = vadd.f32 %v2720, %v2880
        %v2882 = vpop.f32.mrb[0].mxu0
        %2883 = vmatprep.mubr.bf16.mxu0 %v1382
        %2884 = vmatmul.mubr.bf16.gmra.mrb[0].mxu0 %v1216
        %v2885 = vpop.f32.mrb[0].mxu0
        %v2886 = vadd.f32 %v2725, %v2885
        %v2887 = vpop.f32.mrb[0].mxu0
        %v2888 = vpop.f32.mrb[0].mxu0
        %v2889 = vadd.f32 %v2728, %v2888
        %v2890 = vpop.f32.mrb[0].mxu0
        %2891 = vmatprep.mubr.bf16.mxu0 %v1385
        %2892 = vmatmul.mubr.bf16.gmra.mrb[0].mxu0 %v1228
        %v2893 = vpop.f32.mrb[0].mxu0
        %v2894 = vadd.f32 %v2733, %v2893
        %v2895 = vpop.f32.mrb[0].mxu0
        %v2896 = vpop.f32.mrb[0].mxu0
        %v2897 = vadd.f32 %v2736, %v2896
        %v2898 = vpop.f32.mrb[0].mxu0
        %2899 = vmatprep.mubr.bf16.mxu0 %v1388
        %2900 = vmatmul.mubr.bf16.gmra.mrb[0].mxu0 %v1240
        %v2901 = vpop.f32.mrb[0].mxu0
        %v2902 = vadd.f32 %v2741, %v2901
        %v2903 = vpop.f32.mrb[0].mxu0
        %v2904 = vpop.f32.mrb[0].mxu0
        %v2905 = vadd.f32 %v2744, %v2904
        %v2906 = vpop.f32.mrb[0].mxu0
        %2907 = vmatprep.mubr.bf16.mxu0 %v1391
        %2908 = vmatmul.mubr.bf16.gmra.mrb[0].mxu0 %v1252
        %v2909 = vpop.f32.mrb[0].mxu0
        %v2910 = vadd.f32 %v2749, %v2909
        %v2911 = vpop.f32.mrb[0].mxu0
        %v2912 = vpop.f32.mrb[0].mxu0
        %v2913 = vadd.f32 %v2752, %v2912
        %v2914 = vpop.f32.mrb[0].mxu0
        %2915 = vmatprep.mubr.bf16.mxu0 %v1394
        %2916 = vmatmul.mubr.bf16.gmra.mrb[0].mxu0 %v1264
        %v2917 = vpop.f32.mrb[0].mxu0
        %v2918 = vadd.f32 %v2757, %v2917
        %v2919 = vpop.f32.mrb[0].mxu0
        %v2920 = vpop.f32.mrb[0].mxu0
        %v2921 = vadd.f32 %v2760, %v2920
        %v2922 = vpop.f32.mrb[0].mxu0
        %2923 = vmatprep.mubr.bf16.mxu0 %v1397
        %2924 = vmatmul.mubr.bf16.gmra.mrb[0].mxu0 %v1276
        %v2925 = vpop.f32.mrb[0].mxu0
        %v2926 = vadd.f32 %v2765, %v2925
        %v2927 = vpop.f32.mrb[0].mxu0
        %v2928 = vpop.f32.mrb[0].mxu0
        %v2929 = vadd.f32 %v2768, %v2928
        %v2930 = vpop.f32.mrb[0].mxu0
        %2931 = vmatprep.mubr.bf16.mxu0 %v1400
        %2932 = vmatmul.mubr.bf16.gmra.mrb[0].mxu0 %v1288
        %v2933 = vpop.f32.mrb[0].mxu0
        %v2934 = vadd.f32 %v2773, %v2933
        %v2935 = vpop.f32.mrb[0].mxu0
        %v2936 = vpop.f32.mrb[0].mxu0
        %v2937 = vadd.f32 %v2776, %v2936
        %v2938 = vpop.f32.mrb[0].mxu0
        %2939 = vdwg.mxu0
        %2940 = vmatprep.subr.bf16.mxu0 0
        %2941 = vmatpush1.bf16.msra.mxu0 %v2361
        %2942 = vmatprep.subr.bf16.mxu0 0
        %2943 = vmatpush1.bf16.msra.mxu0 %v2362
        %2944 = vmatprep.subr.bf16.mxu0 0
        %2945 = vmatpush1.bf16.msra.mxu0 %v2363
        %2946 = vmatprep.subr.bf16.mxu0 0
        %2947 = vmatpush1.bf16.msra.mxu0 %v2364
        %2948 = vmatprep.subr.bf16.mxu0 0
        %2949 = vmatpush1.bf16.msra.mxu0 %v2365
        %2950 = vmatprep.subr.bf16.mxu0 0
        %2951 = vmatpush1.bf16.msra.mxu0 %v2366
        %2952 = vmatprep.subr.bf16.mxu0 0
        %2953 = vmatpush1.bf16.msra.mxu0 %v2367
        %2954 = vmatprep.subr.bf16.mxu0 0
        %2955 = vmatpush1.bf16.msra.mxu0 %v2368
        %2956 = vmatprep.subr.bf16.mxu0 0
        %2957 = vmatpush1.bf16.msra.mxu0 %v2369
        %2958 = vmatprep.subr.bf16.mxu0 0
        %2959 = vmatpush1.bf16.msra.mxu0 %v2370
        %2960 = vmatprep.subr.bf16.mxu0 0
        %2961 = vmatpush1.bf16.msra.mxu0 %v2371
        %2962 = vmatprep.subr.bf16.mxu0 0
        %2963 = vmatpush1.bf16.msra.mxu0 %v2372
        %2964 = vmatprep.subr.bf16.mxu0 0
        %2965 = vmatpush1.bf16.msra.mxu0 %v2373
        %2966 = vmatprep.subr.bf16.mxu0 0
        %2967 = vmatpush1.bf16.msra.mxu0 %v2374
        %2968 = vmatprep.subr.bf16.mxu0 0
        %2969 = vmatpush1.bf16.msra.mxu0 %v2375
        %2970 = vmatprep.subr.bf16.mxu0 0
        %2971 = vmatpush1.bf16.msra.mxu0 %v2376
        %2972 = vmatprep.mubr.bf16.mxu0 %v1572
        %2973 = vmatmul.mubr.bf16.gmra.mrb[0].mxu0 %v1481
        %v2974 = vpop.f32.mrb[0].mxu0
        %v2975 = vadd.f32 %v2814, %v2974
        %v2976 = vpop.f32.mrb[0].mxu0
        %v2977 = vpop.f32.mrb[0].mxu0
        %v2978 = vadd.f32 %v2817, %v2977
        %v2979 = vpop.f32.mrb[0].mxu0
        %2980 = vmatprep.mubr.bf16.mxu0 %v1584
        %2981 = vmatmul.mubr.bf16.gmra.mrb[0].mxu0 %v1482
        %v2982 = vpop.f32.mrb[0].mxu0
        %v2983 = vadd.f32 %v2822, %v2982
        %v2984 = vpop.f32.mrb[0].mxu0
        %v2985 = vpop.f32.mrb[0].mxu0
        %v2986 = vadd.f32 %v2825, %v2985
        %v2987 = vpop.f32.mrb[0].mxu0
        %2988 = vmatprep.mubr.bf16.mxu0 %v1596
        %2989 = vmatmul.mubr.bf16.gmra.mrb[0].mxu0 %v1483
        %v2990 = vpop.f32.mrb[0].mxu0
        %v2991 = vadd.f32 %v2830, %v2990
        %v2992 = vpop.f32.mrb[0].mxu0
        %v2993 = vpop.f32.mrb[0].mxu0
        %v2994 = vadd.f32 %v2833, %v2993
        %v2995 = vpop.f32.mrb[0].mxu0
        %2996 = vmatprep.mubr.bf16.mxu0 %v1608
        %2997 = vmatmul.mubr.bf16.gmra.mrb[0].mxu0 %v1484
        %v2998 = vpop.f32.mrb[0].mxu0
        %v2999 = vadd.f32 %v2838, %v2998
        %v3000 = vpop.f32.mrb[0].mxu0
        %v3001 = vpop.f32.mrb[0].mxu0
        %v3002 = vadd.f32 %v2841, %v3001
        %v3003 = vpop.f32.mrb[0].mxu0
        %3004 = vmatprep.mubr.bf16.mxu0 %v1620
        %3005 = vmatmul.mubr.bf16.gmra.mrb[0].mxu0 %v1485
        %v3006 = vpop.f32.mrb[0].mxu0
        %v3007 = vadd.f32 %v2846, %v3006
        %v3008 = vpop.f32.mrb[0].mxu0
        %v3009 = vpop.f32.mrb[0].mxu0
        %v3010 = vadd.f32 %v2849, %v3009
        %v3011 = vpop.f32.mrb[0].mxu0
        %3012 = vmatprep.mubr.bf16.mxu0 %v1632
        %3013 = vmatmul.mubr.bf16.gmra.mrb[0].mxu0 %v1486
        %v3014 = vpop.f32.mrb[0].mxu0
        %v3015 = vadd.f32 %v2854, %v3014
        %v3016 = vpop.f32.mrb[0].mxu0
        %v3017 = vpop.f32.mrb[0].mxu0
        %v3018 = vadd.f32 %v2857, %v3017
        %v3019 = vpop.f32.mrb[0].mxu0
        %3020 = vmatprep.mubr.bf16.mxu0 %v1644
        %3021 = vmatmul.mubr.bf16.gmra.mrb[0].mxu0 %v1487
        %v3022 = vpop.f32.mrb[0].mxu0
        %v3023 = vadd.f32 %v2862, %v3022
        %v3024 = vpop.f32.mrb[0].mxu0
        %v3025 = vpop.f32.mrb[0].mxu0
        %v3026 = vadd.f32 %v2865, %v3025
        %v3027 = vpop.f32.mrb[0].mxu0
        %3028 = vmatprep.mubr.bf16.mxu0 %v1656
        %3029 = vmatmul.mubr.bf16.gmra.mrb[0].mxu0 %v1488
        %v3030 = vpop.f32.mrb[0].mxu0
        %v3031 = vadd.f32 %v2870, %v3030
        %v3032 = vpop.f32.mrb[0].mxu0
        %v3033 = vpop.f32.mrb[0].mxu0
        %v3034 = vadd.f32 %v2873, %v3033
        %v3035 = vpop.f32.mrb[0].mxu0
        %3036 = vmatprep.mubr.bf16.mxu0 %v1668
        %3037 = vmatmul.mubr.bf16.gmra.mrb[0].mxu0 %v1489
        %v3038 = vpop.f32.mrb[0].mxu0
        %v3039 = vadd.f32 %v2878, %v3038
        %v3040 = vpop.f32.mrb[0].mxu0
        %v3041 = vpop.f32.mrb[0].mxu0
        %v3042 = vadd.f32 %v2881, %v3041
        %v3043 = vpop.f32.mrb[0].mxu0
        %3044 = vmatprep.mubr.bf16.mxu0 %v1680
        %3045 = vmatmul.mubr.bf16.gmra.mrb[0].mxu0 %v1490
        %v3046 = vpop.f32.mrb[0].mxu0
        %v3047 = vadd.f32 %v2886, %v3046
        %v3048 = vpop.f32.mrb[0].mxu0
        %v3049 = vpop.f32.mrb[0].mxu0
        %v3050 = vadd.f32 %v2889, %v3049
        %v3051 = vpop.f32.mrb[0].mxu0
        %3052 = vmatprep.mubr.bf16.mxu0 %v1692
        %3053 = vmatmul.mubr.bf16.gmra.mrb[0].mxu0 %v1491
        %v3054 = vpop.f32.mrb[0].mxu0
        %v3055 = vadd.f32 %v2894, %v3054
        %v3056 = vpop.f32.mrb[0].mxu0
        %v3057 = vpop.f32.mrb[0].mxu0
        %v3058 = vadd.f32 %v2897, %v3057
        %v3059 = vpop.f32.mrb[0].mxu0
        %3060 = vmatprep.mubr.bf16.mxu0 %v1704
        %3061 = vmatmul.mubr.bf16.gmra.mrb[0].mxu0 %v1492
        %v3062 = vpop.f32.mrb[0].mxu0
        %v3063 = vadd.f32 %v2902, %v3062
        %v3064 = vpop.f32.mrb[0].mxu0
        %v3065 = vpop.f32.mrb[0].mxu0
        %v3066 = vadd.f32 %v2905, %v3065
        %v3067 = vpop.f32.mrb[0].mxu0
        %3068 = vmatprep.mubr.bf16.mxu0 %v1716
        %3069 = vmatmul.mubr.bf16.gmra.mrb[0].mxu0 %v1493
        %v3070 = vpop.f32.mrb[0].mxu0
        %v3071 = vadd.f32 %v2910, %v3070
        %v3072 = vpop.f32.mrb[0].mxu0
        %v3073 = vpop.f32.mrb[0].mxu0
        %v3074 = vadd.f32 %v2913, %v3073
        %v3075 = vpop.f32.mrb[0].mxu0
        %3076 = vmatprep.mubr.bf16.mxu0 %v1728
        %3077 = vmatmul.mubr.bf16.gmra.mrb[0].mxu0 %v1494
        %v3078 = vpop.f32.mrb[0].mxu0
        %v3079 = vadd.f32 %v2918, %v3078
        %v3080 = vpop.f32.mrb[0].mxu0
        %v3081 = vpop.f32.mrb[0].mxu0
        %v3082 = vadd.f32 %v2921, %v3081
        %v3083 = vpop.f32.mrb[0].mxu0
        %3084 = vmatprep.mubr.bf16.mxu0 %v1740
        %3085 = vmatmul.mubr.bf16.gmra.mrb[0].mxu0 %v1495
        %v3086 = vpop.f32.mrb[0].mxu0
        %v3087 = vadd.f32 %v2926, %v3086
        %v3088 = vpop.f32.mrb[0].mxu0
        %v3089 = vpop.f32.mrb[0].mxu0
        %v3090 = vadd.f32 %v2929, %v3089
        %v3091 = vpop.f32.mrb[0].mxu0
        %3092 = vmatprep.mubr.bf16.mxu0 %v1752
        %3093 = vmatmul.mubr.bf16.gmra.mrb[0].mxu0 %v1496
        %v3094 = vpop.f32.mrb[0].mxu0
        %v3095 = vadd.f32 %v2934, %v3094
        %v3096 = vpop.f32.mrb[0].mxu0
        %v3097 = vpop.f32.mrb[0].mxu0
        %v3098 = vadd.f32 %v2937, %v3097
        %v3099 = vpop.f32.mrb[0].mxu0
        %3100 = vdwg.mxu0
        %3101 = vmatprep.subr.bf16.mxu0 0
        %3102 = vmatpush1.bf16.msra.mxu0 %v2377
        %3103 = vmatprep.subr.bf16.mxu0 0
        %3104 = vmatpush1.bf16.msra.mxu0 %v2378
        %3105 = vmatprep.subr.bf16.mxu0 0
        %3106 = vmatpush1.bf16.msra.mxu0 %v2379
        %3107 = vmatprep.subr.bf16.mxu0 0
        %3108 = vmatpush1.bf16.msra.mxu0 %v2380
        %3109 = vmatprep.subr.bf16.mxu0 0
        %3110 = vmatpush1.bf16.msra.mxu0 %v2381
        %3111 = vmatprep.subr.bf16.mxu0 0
        %3112 = vmatpush1.bf16.msra.mxu0 %v2382
        %3113 = vmatprep.subr.bf16.mxu0 0
        %3114 = vmatpush1.bf16.msra.mxu0 %v2383
        %3115 = vmatprep.subr.bf16.mxu0 0
        %3116 = vmatpush1.bf16.msra.mxu0 %v2384
        %3117 = vmatprep.subr.bf16.mxu0 0
        %3118 = vmatpush1.bf16.msra.mxu0 0
        %3119 = vmatprep.subr.bf16.mxu0 0
        %3120 = vmatpush1.bf16.msra.mxu0 0
        %3121 = vmatprep.subr.bf16.mxu0 0
        %3122 = vmatpush1.bf16.msra.mxu0 0
        %3123 = vmatprep.subr.bf16.mxu0 0
        %3124 = vmatpush1.bf16.msra.mxu0 0
        %3125 = vmatprep.subr.bf16.mxu0 0
        %3126 = vmatpush1.bf16.msra.mxu0 0
        %3127 = vmatprep.subr.bf16.mxu0 0
        %3128 = vmatpush1.bf16.msra.mxu0 0
        %3129 = vmatprep.subr.bf16.mxu0 0
        %3130 = vmatpush1.bf16.msra.mxu0 0
        %3131 = vmatprep.subr.bf16.mxu0 0
        %3132 = vmatpush1.bf16.msra.mxu0 0
        %3133 = vmatprep.mubr.bf16.mxu0 0
        %3134 = vmatmul.mubr.bf16.gmra.mrb[0].mxu0 %v1819
        %v3135 = vpop.f32.mrb[0].mxu0
        %v3136 = vadd.f32 %v2975, %v3135
        %v3137 = vpop.f32.mrb[0].mxu0
        %v3138 = vpop.f32.mrb[0].mxu0
        %v3139 = vadd.f32 %v2978, %v3138
        %v3140 = vpop.f32.mrb[0].mxu0
        %3141 = vmatprep.mubr.bf16.mxu0 0
        %3142 = vmatmul.mubr.bf16.gmra.mrb[0].mxu0 %v1822
        %v3143 = vpop.f32.mrb[0].mxu0
        %v3144 = vadd.f32 %v2983, %v3143
        %v3145 = vpop.f32.mrb[0].mxu0
        %v3146 = vpop.f32.mrb[0].mxu0
        %v3147 = vadd.f32 %v2986, %v3146
        %v3148 = vpop.f32.mrb[0].mxu0
        %3149 = vmatprep.mubr.bf16.mxu0 0
        %3150 = vmatmul.mubr.bf16.gmra.mrb[0].mxu0 %v1825
        %v3151 = vpop.f32.mrb[0].mxu0
        %v3152 = vadd.f32 %v2991, %v3151
        %v3153 = vpop.f32.mrb[0].mxu0
        %v3154 = vpop.f32.mrb[0].mxu0
        %v3155 = vadd.f32 %v2994, %v3154
        %v3156 = vpop.f32.mrb[0].mxu0
        %3157 = vmatprep.mubr.bf16.mxu0 0
        %3158 = vmatmul.mubr.bf16.gmra.mrb[0].mxu0 %v1828
        %v3159 = vpop.f32.mrb[0].mxu0
        %v3160 = vadd.f32 %v2999, %v3159
        %v3161 = vpop.f32.mrb[0].mxu0
        %v3162 = vpop.f32.mrb[0].mxu0
        %v3163 = vadd.f32 %v3002, %v3162
        %v3164 = vpop.f32.mrb[0].mxu0
        %3165 = vmatprep.mubr.bf16.mxu0 0
        %3166 = vmatmul.mubr.bf16.gmra.mrb[0].mxu0 %v1831
        %v3167 = vpop.f32.mrb[0].mxu0
        %v3168 = vadd.f32 %v3007, %v3167
        %v3169 = vpop.f32.mrb[0].mxu0
        %v3170 = vpop.f32.mrb[0].mxu0
        %v3171 = vadd.f32 %v3010, %v3170
        %v3172 = vpop.f32.mrb[0].mxu0
        %3173 = vmatprep.mubr.bf16.mxu0 0
        %3174 = vmatmul.mubr.bf16.gmra.mrb[0].mxu0 %v1834
        %v3175 = vpop.f32.mrb[0].mxu0
        %v3176 = vadd.f32 %v3015, %v3175
        %v3177 = vpop.f32.mrb[0].mxu0
        %v3178 = vpop.f32.mrb[0].mxu0
        %v3179 = vadd.f32 %v3018, %v3178
        %v3180 = vpop.f32.mrb[0].mxu0
        %3181 = vmatprep.mubr.bf16.mxu0 0
        %3182 = vmatmul.mubr.bf16.gmra.mrb[0].mxu0 %v1837
        %v3183 = vpop.f32.mrb[0].mxu0
        %v3184 = vadd.f32 %v3023, %v3183
        %v3185 = vpop.f32.mrb[0].mxu0
        %v3186 = vpop.f32.mrb[0].mxu0
        %v3187 = vadd.f32 %v3026, %v3186
        %v3188 = vpop.f32.mrb[0].mxu0
        %3189 = vmatprep.mubr.bf16.mxu0 0
        %3190 = vmatmul.mubr.bf16.gmra.mrb[0].mxu0 %v1840
        %v3191 = vpop.f32.mrb[0].mxu0
        %v3192 = vadd.f32 %v3031, %v3191
        %v3193 = vpop.f32.mrb[0].mxu0
        %v3194 = vpop.f32.mrb[0].mxu0
        %v3195 = vadd.f32 %v3034, %v3194
        %v3196 = vpop.f32.mrb[0].mxu0
        %3197 = vmatprep.mubr.bf16.mxu0 0
        %3198 = vmatmul.mubr.bf16.gmra.mrb[0].mxu0 %v1843
        %v3199 = vpop.f32.mrb[0].mxu0
        %v3200 = vadd.f32 %v3039, %v3199
        %v3201 = vpop.f32.mrb[0].mxu0
        %v3202 = vpop.f32.mrb[0].mxu0
        %v3203 = vadd.f32 %v3042, %v3202
        %v3204 = vpop.f32.mrb[0].mxu0
        %3205 = vmatprep.mubr.bf16.mxu0 0
        %3206 = vmatmul.mubr.bf16.gmra.mrb[0].mxu0 %v1846
        %v3207 = vpop.f32.mrb[0].mxu0
        %v3208 = vadd.f32 %v3047, %v3207
        %v3209 = vpop.f32.mrb[0].mxu0
        %v3210 = vpop.f32.mrb[0].mxu0
        %v3211 = vadd.f32 %v3050, %v3210
        %v3212 = vpop.f32.mrb[0].mxu0
        %3213 = vmatprep.mubr.bf16.mxu0 0
        %3214 = vmatmul.mubr.bf16.gmra.mrb[0].mxu0 %v1849
        %v3215 = vpop.f32.mrb[0].mxu0
        %v3216 = vadd.f32 %v3055, %v3215
        %v3217 = vpop.f32.mrb[0].mxu0
        %v3218 = vpop.f32.mrb[0].mxu0
        %v3219 = vadd.f32 %v3058, %v3218
        %v3220 = vpop.f32.mrb[0].mxu0
        %3221 = vmatprep.mubr.bf16.mxu0 0
        %3222 = vmatmul.mubr.bf16.gmra.mrb[0].mxu0 %v1852
        %v3223 = vpop.f32.mrb[0].mxu0
        %v3224 = vadd.f32 %v3063, %v3223
        %v3225 = vpop.f32.mrb[0].mxu0
        %v3226 = vpop.f32.mrb[0].mxu0
        %v3227 = vadd.f32 %v3066, %v3226
        %v3228 = vpop.f32.mrb[0].mxu0
        %3229 = vmatprep.mubr.bf16.mxu0 0
        %3230 = vmatmul.mubr.bf16.gmra.mrb[0].mxu0 %v1855
        %v3231 = vpop.f32.mrb[0].mxu0
        %v3232 = vadd.f32 %v3071, %v3231
        %v3233 = vpop.f32.mrb[0].mxu0
        %v3234 = vpop.f32.mrb[0].mxu0
        %v3235 = vadd.f32 %v3074, %v3234
        %v3236 = vpop.f32.mrb[0].mxu0
        %3237 = vmatprep.mubr.bf16.mxu0 0
        %3238 = vmatmul.mubr.bf16.gmra.mrb[0].mxu0 %v1858
        %v3239 = vpop.f32.mrb[0].mxu0
        %v3240 = vadd.f32 %v3079, %v3239
        %v3241 = vpop.f32.mrb[0].mxu0
        %v3242 = vpop.f32.mrb[0].mxu0
        %v3243 = vadd.f32 %v3082, %v3242
        %v3244 = vpop.f32.mrb[0].mxu0
        %3245 = vmatprep.mubr.bf16.mxu0 0
        %3246 = vmatmul.mubr.bf16.gmra.mrb[0].mxu0 %v1861
        %v3247 = vpop.f32.mrb[0].mxu0
        %v3248 = vadd.f32 %v3087, %v3247
        %v3249 = vpop.f32.mrb[0].mxu0
        %v3250 = vpop.f32.mrb[0].mxu0
        %v3251 = vadd.f32 %v3090, %v3250
        %v3252 = vpop.f32.mrb[0].mxu0
        %3253 = vmatprep.mubr.bf16.mxu0 0
        %3254 = vmatmul.mubr.bf16.gmra.mrb[0].mxu0 %v1864
        %v3255 = vpop.f32.mrb[0].mxu0
        %v3256 = vadd.f32 %v3095, %v3255
        %v3257 = vpop.f32.mrb[0].mxu0
        %v3258 = vpop.f32.mrb[0].mxu0
        %v3259 = vadd.f32 %v3098, %v3258
        %v3260 = vpop.f32.mrb[0].mxu0
        %3261 = vdwg.mxu0
        %v3262 = vld [vmem:[%s2] sm:$0x1]
        %v3263 = vlaneseq
        %v3264 = vshrl.u32 %v3263, 7
        %v3265 = vsub.s32 0, %v3264
        %v3266 = vrot.slane %v3262, %v3265
        %v3267 = vmul.f32 %v3136, %v3266
        %v3268 = vmul.f32 %v3139, %v3266
        %v3269 = vmul.f32 %v3144, %v3266
        %v3270 = vmul.f32 %v3147, %v3266
        %v3271 = vmul.f32 %v3152, %v3266
        %v3272 = vmul.f32 %v3155, %v3266
        %v3273 = vmul.f32 %v3160, %v3266
        %v3274 = vmul.f32 %v3163, %v3266
        %v3275 = vmul.f32 %v3168, %v3266
        %v3276 = vmul.f32 %v3171, %v3266
        %v3277 = vmul.f32 %v3176, %v3266
        %v3278 = vmul.f32 %v3179, %v3266
        %v3279 = vmul.f32 %v3184, %v3266
        %v3280 = vmul.f32 %v3187, %v3266
        %v3281 = vmul.f32 %v3192, %v3266
        %v3282 = vmul.f32 %v3195, %v3266
        %v3283 = vmul.f32 %v3200, %v3266
        %v3284 = vmul.f32 %v3203, %v3266
        %v3285 = vmul.f32 %v3208, %v3266
        %v3286 = vmul.f32 %v3211, %v3266
        %v3287 = vmul.f32 %v3216, %v3266
        %v3288 = vmul.f32 %v3219, %v3266
        %v3289 = vmul.f32 %v3224, %v3266
        %v3290 = vmul.f32 %v3227, %v3266
        %v3291 = vmul.f32 %v3232, %v3266
        %v3292 = vmul.f32 %v3235, %v3266
        %v3293 = vmul.f32 %v3240, %v3266
        %v3294 = vmul.f32 %v3243, %v3266
        %v3295 = vmul.f32 %v3248, %v3266
        %v3296 = vmul.f32 %v3251, %v3266
        %v3297 = vmul.f32 %v3256, %v3266
        %v3298 = vmul.f32 %v3259, %v3266
        %v3299 = vld [vmem:[%s2 + $0x1] sm:$0x1]
        %v3300 = vlaneseq
        %v3301 = vshrl.u32 %v3300, 7
        %v3302 = vsub.s32 0, %v3301
        %v3303 = vrot.slane %v3299, %v3302
        %v3304 = vadd.f32 %v3267, %v3303
        %v3305 = vadd.f32 %v3268, %v3303
        %v3306 = vadd.f32 %v3269, %v3303
        %v3307 = vadd.f32 %v3270, %v3303
        %v3308 = vadd.f32 %v3271, %v3303
        %v3309 = vadd.f32 %v3272, %v3303
        %v3310 = vadd.f32 %v3273, %v3303
        %v3311 = vadd.f32 %v3274, %v3303
        %v3312 = vadd.f32 %v3275, %v3303
        %v3313 = vadd.f32 %v3276, %v3303
        %v3314 = vadd.f32 %v3277, %v3303
        %v3315 = vadd.f32 %v3278, %v3303
        %v3316 = vadd.f32 %v3279, %v3303
        %v3317 = vadd.f32 %v3280, %v3303
        %v3318 = vadd.f32 %v3281, %v3303
        %v3319 = vadd.f32 %v3282, %v3303
        %v3320 = vadd.f32 %v3283, %v3303
        %v3321 = vadd.f32 %v3284, %v3303
        %v3322 = vadd.f32 %v3285, %v3303
        %v3323 = vadd.f32 %v3286, %v3303
        %v3324 = vadd.f32 %v3287, %v3303
        %v3325 = vadd.f32 %v3288, %v3303
        %v3326 = vadd.f32 %v3289, %v3303
        %v3327 = vadd.f32 %v3290, %v3303
        %v3328 = vadd.f32 %v3291, %v3303
        %v3329 = vadd.f32 %v3292, %v3303
        %v3330 = vadd.f32 %v3293, %v3303
        %v3331 = vadd.f32 %v3294, %v3303
        %v3332 = vadd.f32 %v3295, %v3303
        %v3333 = vadd.f32 %v3296, %v3303
        %v3334 = vadd.f32 %v3297, %v3303
        %v3335 = vadd.f32 %v3298, %v3303
        %v3336 = vmax.f32 %v3304, 0.0
        %v3337 = vmax.f32 %v3305, 0.0
        %v3338 = vmax.f32 %v3306, 0.0
        %v3339 = vmax.f32 %v3307, 0.0
        %v3340 = vmax.f32 %v3308, 0.0
        %v3341 = vmax.f32 %v3309, 0.0
        %v3342 = vmax.f32 %v3310, 0.0
        %v3343 = vmax.f32 %v3311, 0.0
        %v3344 = vmax.f32 %v3312, 0.0
        %v3345 = vmax.f32 %v3313, 0.0
        %v3346 = vmax.f32 %v3314, 0.0
        %v3347 = vmax.f32 %v3315, 0.0
        %v3348 = vmax.f32 %v3316, 0.0
        %v3349 = vmax.f32 %v3317, 0.0
        %v3350 = vmax.f32 %v3318, 0.0
        %v3351 = vmax.f32 %v3319, 0.0
        %v3352 = vmax.f32 %v3320, 0.0
        %v3353 = vmax.f32 %v3321, 0.0
        %v3354 = vmax.f32 %v3322, 0.0
        %v3355 = vmax.f32 %v3323, 0.0
        %v3356 = vmax.f32 %v3324, 0.0
        %v3357 = vmax.f32 %v3325, 0.0
        %v3358 = vmax.f32 %v3326, 0.0
        %v3359 = vmax.f32 %v3327, 0.0
        %v3360 = vmax.f32 %v3328, 0.0
        %v3361 = vmax.f32 %v3329, 0.0
        %v3362 = vmax.f32 %v3330, 0.0
        %v3363 = vmax.f32 %v3331, 0.0
        %v3364 = vmax.f32 %v3332, 0.0
        %v3365 = vmax.f32 %v3333, 0.0
        %v3366 = vmax.f32 %v3334, 0.0
        %v3367 = vmax.f32 %v3335, 0.0
        %v3368 = vpack.c.bf16 %v3337, %v3336
        %v3369 = vpack.c.bf16 %v3339, %v3338
        %v3370 = vpack.c.bf16 %v3341, %v3340
        %v3371 = vpack.c.bf16 %v3343, %v3342
        %v3372 = vpack.c.bf16 %v3345, %v3344
        %v3373 = vpack.c.bf16 %v3347, %v3346
        %v3374 = vpack.c.bf16 %v3349, %v3348
        %v3375 = vpack.c.bf16 %v3351, %v3350
        %v3376 = vpack.c.bf16 %v3353, %v3352
        %v3377 = vpack.c.bf16 %v3355, %v3354
        %v3378 = vpack.c.bf16 %v3357, %v3356
        %v3379 = vpack.c.bf16 %v3359, %v3358
        %v3380 = vpack.c.bf16 %v3361, %v3360
        %v3381 = vpack.c.bf16 %v3363, %v3362
        %v3382 = vpack.c.bf16 %v3365, %v3364
        %v3383 = vpack.c.bf16 %v3367, %v3366
        %v3385 = vshrl.u32 0, 16
        %v3387 = vrot.slane %v3385, 7
        %v3388 = vshll.u32 0, 16
        %v3390 = vor.u32 %v3387, %v3388
        %v3392 = vshrl.u32 %v3368, 16
        %v3394 = vrot.slane %v3392, 7
        %v3395 = vshll.u32 %v3368, 16
        %v3397 = vor.u32 %v3394, %v3395
        %v3399 = vshrl.u32 %v3369, 16
        %v3401 = vrot.slane %v3399, 7
        %v3402 = vshll.u32 %v3369, 16
        %v3404 = vor.u32 %v3401, %v3402
        %v3406 = vshrl.u32 %v3370, 16
        %v3408 = vrot.slane %v3406, 7
        %v3409 = vshll.u32 %v3370, 16
        %v3411 = vor.u32 %v3408, %v3409
        %v3413 = vshrl.u32 %v3371, 16
        %v3415 = vrot.slane %v3413, 7
        %v3416 = vshll.u32 %v3371, 16
        %v3418 = vor.u32 %v3415, %v3416
        %v3420 = vshrl.u32 %v3372, 16
        %v3422 = vrot.slane %v3420, 7
        %v3423 = vshll.u32 %v3372, 16
        %v3425 = vor.u32 %v3422, %v3423
        %v3427 = vshrl.u32 %v3373, 16
        %v3429 = vrot.slane %v3427, 7
        %v3430 = vshll.u32 %v3373, 16
        %v3432 = vor.u32 %v3429, %v3430
        %v3434 = vshrl.u32 %v3374, 16
        %v3436 = vrot.slane %v3434, 7
        %v3437 = vshll.u32 %v3374, 16
        %v3439 = vor.u32 %v3436, %v3437
        %v3441 = vshrl.u32 %v3375, 16
        %v3443 = vrot.slane %v3441, 7
        %v3444 = vshll.u32 %v3375, 16
        %v3446 = vor.u32 %v3443, %v3444
        %v3448 = vshrl.u32 %v3376, 16
        %v3450 = vrot.slane %v3448, 7
        %v3451 = vshll.u32 %v3376, 16
        %v3453 = vor.u32 %v3450, %v3451
        %v3455 = vshrl.u32 %v3377, 16
        %v3457 = vrot.slane %v3455, 7
        %v3458 = vshll.u32 %v3377, 16
        %v3460 = vor.u32 %v3457, %v3458
        %v3462 = vshrl.u32 %v3378, 16
        %v3464 = vrot.slane %v3462, 7
        %v3465 = vshll.u32 %v3378, 16
        %v3467 = vor.u32 %v3464, %v3465
        %v3469 = vshrl.u32 %v3379, 16
        %v3471 = vrot.slane %v3469, 7
        %v3472 = vshll.u32 %v3379, 16
        %v3474 = vor.u32 %v3471, %v3472
        %v3476 = vshrl.u32 %v3380, 16
        %v3478 = vrot.slane %v3476, 7
        %v3479 = vshll.u32 %v3380, 16
        %v3481 = vor.u32 %v3478, %v3479
        %v3483 = vshrl.u32 %v3381, 16
        %v3485 = vrot.slane %v3483, 7
        %v3486 = vshll.u32 %v3381, 16
        %v3488 = vor.u32 %v3485, %v3486
        %v3490 = vshrl.u32 %v3382, 16
        %v3492 = vrot.slane %v3490, 7
        %v3493 = vshll.u32 %v3382, 16
        %v3495 = vor.u32 %v3492, %v3493
        %v3497 = vshrl.u32 %v3383, 16
        %v3499 = vrot.slane %v3497, 7
        %v3500 = vshll.u32 %v3383, 16
        %v3502 = vor.u32 %v3499, %v3500
        %vm3537 = vcmask 1040384
        %vm3538 = vsmask.f32 256
        %vm3539 = vmand %vm3537, %vm3538
        %v3540 = vsel %vm3539, 0, %v3390
        %v3541 = vsel %vm3539, 0, %v3397
        %v3542 = vsel %vm3539, 0, %v3404
        %v3543 = vsel %vm3539, 0, %v3411
        %v3544 = vsel %vm3539, 0, %v3418
        %v3545 = vsel %vm3539, 0, %v3425
        %v3546 = vsel %vm3539, 0, %v3432
        %v3547 = vsel %vm3539, 0, %v3439
        %v3548 = vsel %vm3539, 0, %v3446
        %v3549 = vsel %vm3539, 0, %v3453
        %v3550 = vsel %vm3539, 0, %v3460
        %v3551 = vsel %vm3539, 0, %v3467
        %v3552 = vsel %vm3539, 0, %v3474
        %v3553 = vsel %vm3539, 0, %v3481
        %v3554 = vsel %vm3539, 0, %v3488
        %v3555 = vsel %vm3539, 0, %v3495
        %v3556 = vsel %vm3539, 0, %v3502
        %v3557 = vsel %vm3539, %v3387, 0
        %v3558 = vsel %vm3539, %v3394, 0
        %v3559 = vsel %vm3539, %v3401, 0
        %v3560 = vsel %vm3539, %v3408, 0
        %v3561 = vsel %vm3539, %v3415, 0
        %v3562 = vsel %vm3539, %v3422, 0
        %v3563 = vsel %vm3539, %v3429, 0
        %v3564 = vsel %vm3539, %v3436, 0
        %v3565 = vsel %vm3539, %v3443, 0
        %v3566 = vsel %vm3539, %v3450, 0
        %v3567 = vsel %vm3539, %v3457, 0
        %v3568 = vsel %vm3539, %v3464, 0
        %v3569 = vsel %vm3539, %v3471, 0
        %v3570 = vsel %vm3539, %v3478, 0
        %v3571 = vsel %vm3539, %v3485, 0
        %v3572 = vsel %vm3539, %v3492, 0
        %v3573 = vsel %vm3539, %v3499, 0
        %v3608 = vunpack.c.l.b16 %v3540
        %v3609 = vunpack.c.h.b16 %v3540
        %v3610 = vunpack.c.l.b16 %v3557
        %v3611 = vunpack.c.l.b16 %v3541
        %v3612 = vunpack.c.h.b16 %v3541
        %v3613 = vunpack.c.l.b16 %v3558
        %v3614 = vunpack.c.l.b16 %v3542
        %v3615 = vunpack.c.h.b16 %v3542
        %v3616 = vunpack.c.l.b16 %v3559
        %v3617 = vunpack.c.l.b16 %v3543
        %v3618 = vunpack.c.h.b16 %v3543
        %v3619 = vunpack.c.l.b16 %v3560
        %v3620 = vunpack.c.l.b16 %v3544
        %v3621 = vunpack.c.h.b16 %v3544
        %v3622 = vunpack.c.l.b16 %v3561
        %v3623 = vunpack.c.l.b16 %v3545
        %v3624 = vunpack.c.h.b16 %v3545
        %v3625 = vunpack.c.l.b16 %v3562
        %v3626 = vunpack.c.l.b16 %v3546
        %v3627 = vunpack.c.h.b16 %v3546
        %v3628 = vunpack.c.l.b16 %v3563
        %v3629 = vunpack.c.l.b16 %v3547
        %v3630 = vunpack.c.h.b16 %v3547
        %v3631 = vunpack.c.l.b16 %v3564
        %v3632 = vunpack.c.l.b16 %v3548
        %v3633 = vunpack.c.h.b16 %v3548
        %v3634 = vunpack.c.l.b16 %v3565
        %v3635 = vunpack.c.l.b16 %v3549
        %v3636 = vunpack.c.h.b16 %v3549
        %v3637 = vunpack.c.l.b16 %v3566
        %v3638 = vunpack.c.l.b16 %v3550
        %v3639 = vunpack.c.h.b16 %v3550
        %v3640 = vunpack.c.l.b16 %v3567
        %v3641 = vunpack.c.l.b16 %v3551
        %v3642 = vunpack.c.h.b16 %v3551
        %v3643 = vunpack.c.l.b16 %v3568
        %v3644 = vunpack.c.l.b16 %v3552
        %v3645 = vunpack.c.h.b16 %v3552
        %v3646 = vunpack.c.l.b16 %v3569
        %v3647 = vunpack.c.l.b16 %v3553
        %v3648 = vunpack.c.h.b16 %v3553
        %v3649 = vunpack.c.l.b16 %v3570
        %v3650 = vunpack.c.l.b16 %v3554
        %v3651 = vunpack.c.h.b16 %v3554
        %v3652 = vunpack.c.l.b16 %v3571
        %v3653 = vunpack.c.l.b16 %v3555
        %v3654 = vunpack.c.h.b16 %v3555
        %v3655 = vunpack.c.l.b16 %v3572
        %v3656 = vunpack.c.l.b16 %v3556
        %v3657 = vunpack.c.h.b16 %v3556
        %v3658 = vunpack.c.l.b16 %v3573
        %v3659 = vpack.c.b16 %v3608, %v3608
        %v3660 = vpack.c.b16 %v3609, %v3609
        %v3661 = vpack.c.b16 %v3610, %v3610
        %v3662 = vpack.c.b16 %v3611, %v3611
        %v3663 = vpack.c.b16 %v3612, %v3612
        %v3664 = vpack.c.b16 %v3613, %v3613
        %v3665 = vpack.c.b16 %v3614, %v3614
        %v3666 = vpack.c.b16 %v3615, %v3615
        %v3667 = vpack.c.b16 %v3616, %v3616
        %v3668 = vpack.c.b16 %v3617, %v3617
        %v3669 = vpack.c.b16 %v3618, %v3618
        %v3670 = vpack.c.b16 %v3619, %v3619
        %v3671 = vpack.c.b16 %v3620, %v3620
        %v3672 = vpack.c.b16 %v3621, %v3621
        %v3673 = vpack.c.b16 %v3622, %v3622
        %v3674 = vpack.c.b16 %v3623, %v3623
        %v3675 = vpack.c.b16 %v3624, %v3624
        %v3676 = vpack.c.b16 %v3625, %v3625
        %v3677 = vpack.c.b16 %v3626, %v3626
        %v3678 = vpack.c.b16 %v3627, %v3627
        %v3679 = vpack.c.b16 %v3628, %v3628
        %v3680 = vpack.c.b16 %v3629, %v3629
        %v3681 = vpack.c.b16 %v3630, %v3630
        %v3682 = vpack.c.b16 %v3631, %v3631
        %v3683 = vpack.c.b16 %v3632, %v3632
        %v3684 = vpack.c.b16 %v3633, %v3633
        %v3685 = vpack.c.b16 %v3634, %v3634
        %v3686 = vpack.c.b16 %v3635, %v3635
        %v3687 = vpack.c.b16 %v3636, %v3636
        %v3688 = vpack.c.b16 %v3637, %v3637
        %v3689 = vpack.c.b16 %v3638, %v3638
        %v3690 = vpack.c.b16 %v3639, %v3639
        %v3691 = vpack.c.b16 %v3640, %v3640
        %v3692 = vpack.c.b16 %v3641, %v3641
        %v3693 = vpack.c.b16 %v3642, %v3642
        %v3694 = vpack.c.b16 %v3643, %v3643
        %v3695 = vpack.c.b16 %v3644, %v3644
        %v3696 = vpack.c.b16 %v3645, %v3645
        %v3697 = vpack.c.b16 %v3646, %v3646
        %v3698 = vpack.c.b16 %v3647, %v3647
        %v3699 = vpack.c.b16 %v3648, %v3648
        %v3700 = vpack.c.b16 %v3649, %v3649
        %v3701 = vpack.c.b16 %v3650, %v3650
        %v3702 = vpack.c.b16 %v3651, %v3651
        %v3703 = vpack.c.b16 %v3652, %v3652
        %v3704 = vpack.c.b16 %v3653, %v3653
        %v3705 = vpack.c.b16 %v3654, %v3654
        %v3706 = vpack.c.b16 %v3655, %v3655
        %v3707 = vpack.c.b16 %v3656, %v3656
        %v3708 = vpack.c.b16 %v3657, %v3657
        %v3709 = vpack.c.b16 %v3658, %v3658
        %3761 = vst [vmem:[#allocation2] sm:$0xf] %v3659
        %3762 = vst [vmem:[#allocation2 + $0x4] sm:$0xf] %v3660
        %3763 = vst [vmem:[#allocation2 + $0x8] sm:$0x1] %v3661
        %3764 = vst [vmem:[#allocation2 + $0xc] sm:$0xf] %v3662
        %3765 = vst [vmem:[#allocation2 + $0x10] sm:$0xf] %v3663
        %3766 = vst [vmem:[#allocation2 + $0x14] sm:$0x1] %v3664
        %3767 = vst [vmem:[#allocation2 + $0x18] sm:$0xf] %v3665
        %3768 = vst [vmem:[#allocation2 + $0x1c] sm:$0xf] %v3666
        %3769 = vst [vmem:[#allocation2 + $0x20] sm:$0x1] %v3667
        %3770 = vst [vmem:[#allocation2 + $0x24] sm:$0xf] %v3668
        %3771 = vst [vmem:[#allocation2 + $0x28] sm:$0xf] %v3669
        %3772 = vst [vmem:[#allocation2 + $0x2c] sm:$0x1] %v3670
        %3773 = vst [vmem:[#allocation2 + $0x30] sm:$0xf] %v3671
        %3774 = vst [vmem:[#allocation2 + $0x34] sm:$0xf] %v3672
        %3775 = vst [vmem:[#allocation2 + $0x38] sm:$0x1] %v3673
        %3776 = vst [vmem:[#allocation2 + $0x3c] sm:$0xf] %v3674
        %3777 = vst [vmem:[#allocation2 + $0x40] sm:$0xf] %v3675
        %3778 = vst [vmem:[#allocation2 + $0x44] sm:$0x1] %v3676
        %3779 = vst [vmem:[#allocation2 + $0x48] sm:$0xf] %v3677
        %3780 = vst [vmem:[#allocation2 + $0x4c] sm:$0xf] %v3678
        %3781 = vst [vmem:[#allocation2 + $0x50] sm:$0x1] %v3679
        %3782 = vst [vmem:[#allocation2 + $0x54] sm:$0xf] %v3680
        %3783 = vst [vmem:[#allocation2 + $0x58] sm:$0xf] %v3681
        %3784 = vst [vmem:[#allocation2 + $0x5c] sm:$0x1] %v3682
        %3785 = vst [vmem:[#allocation2 + $0x60] sm:$0xf] %v3683
        %3786 = vst [vmem:[#allocation2 + $0x64] sm:$0xf] %v3684
        %3787 = vst [vmem:[#allocation2 + $0x68] sm:$0x1] %v3685
        %3788 = vst [vmem:[#allocation2 + $0x6c] sm:$0xf] %v3686
        %3789 = vst [vmem:[#allocation2 + $0x70] sm:$0xf] %v3687
        %3790 = vst [vmem:[#allocation2 + $0x74] sm:$0x1] %v3688
        %3791 = vst [vmem:[#allocation2 + $0x78] sm:$0xf] %v3689
        %3792 = vst [vmem:[#allocation2 + $0x7c] sm:$0xf] %v3690
        %3793 = vst [vmem:[#allocation2 + $0x80] sm:$0x1] %v3691
        %3794 = vst [vmem:[#allocation2 + $0x84] sm:$0xf] %v3692
        %3795 = vst [vmem:[#allocation2 + $0x88] sm:$0xf] %v3693
        %3796 = vst [vmem:[#allocation2 + $0x8c] sm:$0x1] %v3694
        %3797 = vst [vmem:[#allocation2 + $0x90] sm:$0xf] %v3695
        %3798 = vst [vmem:[#allocation2 + $0x94] sm:$0xf] %v3696
        %3799 = vst [vmem:[#allocation2 + $0x98] sm:$0x1] %v3697
        %3800 = vst [vmem:[#allocation2 + $0x9c] sm:$0xf] %v3698
        %3801 = vst [vmem:[#allocation2 + $0xa0] sm:$0xf] %v3699
        %3802 = vst [vmem:[#allocation2 + $0xa4] sm:$0x1] %v3700
        %3803 = vst [vmem:[#allocation2 + $0xa8] sm:$0xf] %v3701
        %3804 = vst [vmem:[#allocation2 + $0xac] sm:$0xf] %v3702
        %3805 = vst [vmem:[#allocation2 + $0xb0] sm:$0x1] %v3703
        %3806 = vst [vmem:[#allocation2 + $0xb4] sm:$0xf] %v3704
        %3807 = vst [vmem:[#allocation2 + $0xb8] sm:$0xf] %v3705
        %3808 = vst [vmem:[#allocation2 + $0xbc] sm:$0x1] %v3706
        %3809 = vst [vmem:[#allocation2 + $0xc0] sm:$0xf] %v3707
        %3810 = vst [vmem:[#allocation2 + $0xc4] sm:$0xf] %v3708
        %3811 = vst [vmem:[#allocation2 + $0xc8] sm:$0x1] %v3709
        %3812 = vst [vmem:[#allocation2 + $0xcc] sm:$0xf] %v3659
        %3813 = vst [vmem:[#allocation2 + $0xd0] sm:$0xf] %v3660
        %3814 = vst [vmem:[#allocation2 + $0xd4] sm:$0x1] %v3661
        %v3815 = vld [vmem:[#allocation2] sm:$0xf]
        %v3816 = vld [vmem:[#allocation2 + $0x4] sm:$0xf]
        %v3817 = vld [vmem:[#allocation2 + $0xc] sm:$0xf]
        %v3818 = vld [vmem:[#allocation2 + $0x10] sm:$0xf]
        %v3819 = vld [vmem:[#allocation2 + $0x18] sm:$0xf]
        %v3820 = vld [vmem:[#allocation2 + $0x1c] sm:$0xf]
        %v3821 = vld [vmem:[#allocation2 + $0x24] sm:$0xf]
        %v3822 = vld [vmem:[#allocation2 + $0x28] sm:$0xf]
        %v3823 = vld [vmem:[#allocation2 + $0x30] sm:$0xf]
        %v3824 = vld [vmem:[#allocation2 + $0x34] sm:$0xf]
        %v3825 = vld [vmem:[#allocation2 + $0x3c] sm:$0xf]
        %v3826 = vld [vmem:[#allocation2 + $0x40] sm:$0xf]
        %v3827 = vld [vmem:[#allocation2 + $0x48] sm:$0xf]
        %v3828 = vld [vmem:[#allocation2 + $0x4c] sm:$0xf]
        %v3829 = vld [vmem:[#allocation2 + $0x54] sm:$0xf]
        %v3830 = vld [vmem:[#allocation2 + $0x58] sm:$0xf]
        %v3831 = vld [vmem:[#allocation2 + $0x60] sm:$0xf]
        %v3832 = vld [vmem:[#allocation2 + $0x64] sm:$0xf]
        %v3833 = vld [vmem:[#allocation2 + $0x6c] sm:$0xf]
        %v3834 = vld [vmem:[#allocation2 + $0x70] sm:$0xf]
        %v3835 = vld [vmem:[#allocation2 + $0x78] sm:$0xf]
        %v3836 = vld [vmem:[#allocation2 + $0x7c] sm:$0xf]
        %v3837 = vld [vmem:[#allocation2 + $0x84] sm:$0xf]
        %v3838 = vld [vmem:[#allocation2 + $0x88] sm:$0xf]
        %v3839 = vld [vmem:[#allocation2 + $0x90] sm:$0xf]
        %v3840 = vld [vmem:[#allocation2 + $0x94] sm:$0xf]
        %v3841 = vld [vmem:[#allocation2 + $0x9c] sm:$0xf]
        %v3842 = vld [vmem:[#allocation2 + $0xa0] sm:$0xf]
        %v3843 = vld [vmem:[#allocation2 + $0xa8] sm:$0xf]
        %v3844 = vld [vmem:[#allocation2 + $0xac] sm:$0xf]
        %v3845 = vld [vmem:[#allocation2 + $0xb4] sm:$0xf]
        %v3846 = vld [vmem:[#allocation2 + $0xb8] sm:$0xf]
        %v3847 = vld [vmem:[#allocation2 + $0x8] sm:$0x1]
        %v3848 = vld [vmem:[#allocation2 + $0x14] sm:$0x1]
        %v3849 = vld [vmem:[#allocation2 + $0x20] sm:$0x1]
        %v3850 = vld [vmem:[#allocation2 + $0x2c] sm:$0x1]
        %v3851 = vld [vmem:[#allocation2 + $0x38] sm:$0x1]
        %v3852 = vld [vmem:[#allocation2 + $0x44] sm:$0x1]
        %v3853 = vld [vmem:[#allocation2 + $0x50] sm:$0x1]
        %v3854 = vld [vmem:[#allocation2 + $0x5c] sm:$0x1]
        %v3855 = vld [vmem:[#allocation2 + $0x68] sm:$0x1]
        %v3856 = vld [vmem:[#allocation2 + $0x74] sm:$0x1]
        %v3857 = vld [vmem:[#allocation2 + $0x80] sm:$0x1]
        %v3858 = vld [vmem:[#allocation2 + $0x8c] sm:$0x1]
        %v3859 = vld [vmem:[#allocation2 + $0x98] sm:$0x1]
        %v3860 = vld [vmem:[#allocation2 + $0xa4] sm:$0x1]
        %v3861 = vld [vmem:[#allocation2 + $0xb0] sm:$0x1]
        %v3862 = vld [vmem:[#allocation2 + $0xbc] sm:$0x1]
        %v3863 = vld [vmem:[#allocation2] sm:$0xe]
        %v3864 = vld [vmem:[#allocation2 + $0xc] sm:$0xe]
        %v3865 = vld [vmem:[#allocation2 + $0x18] sm:$0xe]
        %v3866 = vld [vmem:[#allocation2 + $0x24] sm:$0xe]
        %v3867 = vld [vmem:[#allocation2 + $0x30] sm:$0xe]
        %v3868 = vld [vmem:[#allocation2 + $0x3c] sm:$0xe]
        %v3869 = vld [vmem:[#allocation2 + $0x48] sm:$0xe]
        %v3870 = vld [vmem:[#allocation2 + $0x54] sm:$0xe]
        %v3871 = vld [vmem:[#allocation2 + $0x60] sm:$0xe]
        %v3872 = vld [vmem:[#allocation2 + $0x6c] sm:$0xe]
        %v3873 = vld [vmem:[#allocation2 + $0x78] sm:$0xe]
        %v3874 = vld [vmem:[#allocation2 + $0x84] sm:$0xe]
        %v3875 = vld [vmem:[#allocation2 + $0x90] sm:$0xe]
        %v3876 = vld [vmem:[#allocation2 + $0x9c] sm:$0xe]
        %v3877 = vld [vmem:[#allocation2 + $0xa8] sm:$0xe]
        %v3878 = vld [vmem:[#allocation2 + $0xb4] sm:$0xe]
        %s3879 = scalar_lea.vmem [#allocation2], 12
        %v3880 = vld [vmem:[%s3879] sm:$0xf]
        %v3881 = vld [vmem:[%s3879 + $0x4] sm:$0xf]
        %v3882 = vld [vmem:[%s3879 + $0xc] sm:$0xf]
        %v3883 = vld [vmem:[%s3879 + $0x10] sm:$0xf]
        %v3884 = vld [vmem:[%s3879 + $0x18] sm:$0xf]
        %v3885 = vld [vmem:[%s3879 + $0x1c] sm:$0xf]
        %v3886 = vld [vmem:[%s3879 + $0x24] sm:$0xf]
        %v3887 = vld [vmem:[%s3879 + $0x28] sm:$0xf]
        %v3888 = vld [vmem:[%s3879 + $0x30] sm:$0xf]
        %v3889 = vld [vmem:[%s3879 + $0x34] sm:$0xf]
        %v3890 = vld [vmem:[%s3879 + $0x3c] sm:$0xf]
        %v3891 = vld [vmem:[%s3879 + $0x40] sm:$0xf]
        %v3892 = vld [vmem:[%s3879 + $0x48] sm:$0xf]
        %v3893 = vld [vmem:[%s3879 + $0x4c] sm:$0xf]
        %v3894 = vld [vmem:[%s3879 + $0x54] sm:$0xf]
        %v3895 = vld [vmem:[%s3879 + $0x58] sm:$0xf]
        %v3896 = vld [vmem:[%s3879 + $0x60] sm:$0xf]
        %v3897 = vld [vmem:[%s3879 + $0x64] sm:$0xf]
        %v3898 = vld [vmem:[%s3879 + $0x6c] sm:$0xf]
        %v3899 = vld [vmem:[%s3879 + $0x70] sm:$0xf]
        %v3900 = vld [vmem:[%s3879 + $0x78] sm:$0xf]
        %v3901 = vld [vmem:[%s3879 + $0x7c] sm:$0xf]
        %v3902 = vld [vmem:[%s3879 + $0x84] sm:$0xf]
        %v3903 = vld [vmem:[%s3879 + $0x88] sm:$0xf]
        %v3904 = vld [vmem:[%s3879 + $0x90] sm:$0xf]
        %v3905 = vld [vmem:[%s3879 + $0x94] sm:$0xf]
        %v3906 = vld [vmem:[%s3879 + $0x9c] sm:$0xf]
        %v3907 = vld [vmem:[%s3879 + $0xa0] sm:$0xf]
        %v3908 = vld [vmem:[%s3879 + $0xa8] sm:$0xf]
        %v3909 = vld [vmem:[%s3879 + $0xac] sm:$0xf]
        %v3910 = vld [vmem:[%s3879 + $0xb4] sm:$0xf]
        %v3911 = vld [vmem:[%s3879 + $0xb8] sm:$0xf]
        %v3912 = vld [vmem:[%s3879 + $0x8] sm:$0x1]
        %v3913 = vld [vmem:[%s3879 + $0x14] sm:$0x1]
        %v3914 = vld [vmem:[%s3879 + $0x20] sm:$0x1]
        %v3915 = vld [vmem:[%s3879 + $0x2c] sm:$0x1]
        %v3916 = vld [vmem:[%s3879 + $0x38] sm:$0x1]
        %v3917 = vld [vmem:[%s3879 + $0x44] sm:$0x1]
        %v3918 = vld [vmem:[%s3879 + $0x50] sm:$0x1]
        %v3919 = vld [vmem:[%s3879 + $0x5c] sm:$0x1]
        %v3920 = vld [vmem:[%s3879 + $0x68] sm:$0x1]
        %v3921 = vld [vmem:[%s3879 + $0x74] sm:$0x1]
        %v3922 = vld [vmem:[%s3879 + $0x80] sm:$0x1]
        %v3923 = vld [vmem:[%s3879 + $0x8c] sm:$0x1]
        %v3924 = vld [vmem:[%s3879 + $0x98] sm:$0x1]
        %v3925 = vld [vmem:[%s3879 + $0xa4] sm:$0x1]
        %v3926 = vld [vmem:[%s3879 + $0xb0] sm:$0x1]
        %v3927 = vld [vmem:[%s3879 + $0xbc] sm:$0x1]
        %v3928 = vld [vmem:[%s3879] sm:$0xe]
        %v3929 = vld [vmem:[%s3879 + $0xc] sm:$0xe]
        %v3930 = vld [vmem:[%s3879 + $0x18] sm:$0xe]
        %v3931 = vld [vmem:[%s3879 + $0x24] sm:$0xe]
        %v3932 = vld [vmem:[%s3879 + $0x30] sm:$0xe]
        %v3933 = vld [vmem:[%s3879 + $0x3c] sm:$0xe]
        %v3934 = vld [vmem:[%s3879 + $0x48] sm:$0xe]
        %v3935 = vld [vmem:[%s3879 + $0x54] sm:$0xe]
        %v3936 = vld [vmem:[%s3879 + $0x60] sm:$0xe]
        %v3937 = vld [vmem:[%s3879 + $0x6c] sm:$0xe]
        %v3938 = vld [vmem:[%s3879 + $0x78] sm:$0xe]
        %v3939 = vld [vmem:[%s3879 + $0x84] sm:$0xe]
        %v3940 = vld [vmem:[%s3879 + $0x90] sm:$0xe]
        %v3941 = vld [vmem:[%s3879 + $0x9c] sm:$0xe]
        %v3942 = vld [vmem:[%s3879 + $0xa8] sm:$0xe]
        %v3943 = vld [vmem:[%s3879 + $0xb4] sm:$0xe]
        %s3944 = scalar_lea.vmem [#allocation2], 24
        %v3945 = vld [vmem:[%s3944] sm:$0xf]
        %v3946 = vld [vmem:[%s3944 + $0x4] sm:$0xf]
        %v3947 = vld [vmem:[%s3944 + $0xc] sm:$0xf]
        %v3948 = vld [vmem:[%s3944 + $0x10] sm:$0xf]
        %v3949 = vld [vmem:[%s3944 + $0x18] sm:$0xf]
        %v3950 = vld [vmem:[%s3944 + $0x1c] sm:$0xf]
        %v3951 = vld [vmem:[%s3944 + $0x24] sm:$0xf]
        %v3952 = vld [vmem:[%s3944 + $0x28] sm:$0xf]
        %v3953 = vld [vmem:[%s3944 + $0x30] sm:$0xf]
        %v3954 = vld [vmem:[%s3944 + $0x34] sm:$0xf]
        %v3955 = vld [vmem:[%s3944 + $0x3c] sm:$0xf]
        %v3956 = vld [vmem:[%s3944 + $0x40] sm:$0xf]
        %v3957 = vld [vmem:[%s3944 + $0x48] sm:$0xf]
        %v3958 = vld [vmem:[%s3944 + $0x4c] sm:$0xf]
        %v3959 = vld [vmem:[%s3944 + $0x54] sm:$0xf]
        %v3960 = vld [vmem:[%s3944 + $0x58] sm:$0xf]
        %v3961 = vld [vmem:[%s3944 + $0x60] sm:$0xf]
        %v3962 = vld [vmem:[%s3944 + $0x64] sm:$0xf]
        %v3963 = vld [vmem:[%s3944 + $0x6c] sm:$0xf]
        %v3964 = vld [vmem:[%s3944 + $0x70] sm:$0xf]
        %v3965 = vld [vmem:[%s3944 + $0x78] sm:$0xf]
        %v3966 = vld [vmem:[%s3944 + $0x7c] sm:$0xf]
        %v3967 = vld [vmem:[%s3944 + $0x84] sm:$0xf]
        %v3968 = vld [vmem:[%s3944 + $0x88] sm:$0xf]
        %v3969 = vld [vmem:[%s3944 + $0x90] sm:$0xf]
        %v3970 = vld [vmem:[%s3944 + $0x94] sm:$0xf]
        %v3971 = vld [vmem:[%s3944 + $0x9c] sm:$0xf]
        %v3972 = vld [vmem:[%s3944 + $0xa0] sm:$0xf]
        %v3973 = vld [vmem:[%s3944 + $0xa8] sm:$0xf]
        %v3974 = vld [vmem:[%s3944 + $0xac] sm:$0xf]
        %v3975 = vld [vmem:[%s3944 + $0xb4] sm:$0xf]
        %v3976 = vld [vmem:[%s3944 + $0xb8] sm:$0xf]
        %v3977 = vld [vmem:[%s3944 + $0x8] sm:$0x1]
        %v3978 = vld [vmem:[%s3944 + $0x14] sm:$0x1]
        %v3979 = vld [vmem:[%s3944 + $0x20] sm:$0x1]
        %v3980 = vld [vmem:[%s3944 + $0x2c] sm:$0x1]
        %v3981 = vld [vmem:[%s3944 + $0x38] sm:$0x1]
        %v3982 = vld [vmem:[%s3944 + $0x44] sm:$0x1]
        %v3983 = vld [vmem:[%s3944 + $0x50] sm:$0x1]
        %v3984 = vld [vmem:[%s3944 + $0x5c] sm:$0x1]
        %v3985 = vld [vmem:[%s3944 + $0x68] sm:$0x1]
        %v3986 = vld [vmem:[%s3944 + $0x74] sm:$0x1]
        %v3987 = vld [vmem:[%s3944 + $0x80] sm:$0x1]
        %v3988 = vld [vmem:[%s3944 + $0x8c] sm:$0x1]
        %v3989 = vld [vmem:[%s3944 + $0x98] sm:$0x1]
        %v3990 = vld [vmem:[%s3944 + $0xa4] sm:$0x1]
        %v3991 = vld [vmem:[%s3944 + $0xb0] sm:$0x1]
        %v3992 = vld [vmem:[%s3944 + $0xbc] sm:$0x1]
        %v3993 = vld [vmem:[%s3944] sm:$0xe]
        %v3994 = vld [vmem:[%s3944 + $0xc] sm:$0xe]
        %v3995 = vld [vmem:[%s3944 + $0x18] sm:$0xe]
        %v3996 = vld [vmem:[%s3944 + $0x24] sm:$0xe]
        %v3997 = vld [vmem:[%s3944 + $0x30] sm:$0xe]
        %v3998 = vld [vmem:[%s3944 + $0x3c] sm:$0xe]
        %v3999 = vld [vmem:[%s3944 + $0x48] sm:$0xe]
        %v4000 = vld [vmem:[%s3944 + $0x54] sm:$0xe]
        %v4001 = vld [vmem:[%s3944 + $0x60] sm:$0xe]
        %v4002 = vld [vmem:[%s3944 + $0x6c] sm:$0xe]
        %v4003 = vld [vmem:[%s3944 + $0x78] sm:$0xe]
        %v4004 = vld [vmem:[%s3944 + $0x84] sm:$0xe]
        %v4005 = vld [vmem:[%s3944 + $0x90] sm:$0xe]
        %v4006 = vld [vmem:[%s3944 + $0x9c] sm:$0xe]
        %v4007 = vld [vmem:[%s3944 + $0xa8] sm:$0xe]
        %v4008 = vld [vmem:[%s3944 + $0xb4] sm:$0xe]
        %v4041 = vunpack.c.l.b16 %v3815
        %v4042 = vunpack.c.l.b16 %v3816
        %v4043 = vunpack.c.l.b16 %v3817
        %v4044 = vunpack.c.l.b16 %v3818
        %v4045 = vunpack.c.l.b16 %v3819
        %v4046 = vunpack.c.l.b16 %v3820
        %v4047 = vunpack.c.l.b16 %v3821
        %v4048 = vunpack.c.l.b16 %v3822
        %v4049 = vunpack.c.l.b16 %v3823
        %v4050 = vunpack.c.l.b16 %v3824
        %v4051 = vunpack.c.l.b16 %v3825
        %v4052 = vunpack.c.l.b16 %v3826
        %v4053 = vunpack.c.l.b16 %v3827
        %v4054 = vunpack.c.l.b16 %v3828
        %v4055 = vunpack.c.l.b16 %v3829
        %v4056 = vunpack.c.l.b16 %v3830
        %v4057 = vunpack.c.l.b16 %v3831
        %v4058 = vunpack.c.l.b16 %v3832
        %v4059 = vunpack.c.l.b16 %v3833
        %v4060 = vunpack.c.l.b16 %v3834
        %v4061 = vunpack.c.l.b16 %v3835
        %v4062 = vunpack.c.l.b16 %v3836
        %v4063 = vunpack.c.l.b16 %v3837
        %v4064 = vunpack.c.l.b16 %v3838
        %v4065 = vunpack.c.l.b16 %v3839
        %v4066 = vunpack.c.l.b16 %v3840
        %v4067 = vunpack.c.l.b16 %v3841
        %v4068 = vunpack.c.l.b16 %v3842
        %v4069 = vunpack.c.l.b16 %v3843
        %v4070 = vunpack.c.l.b16 %v3844
        %v4071 = vunpack.c.l.b16 %v3845
        %v4072 = vunpack.c.l.b16 %v3846
        %v4073 = vpack.c.b16 %v4042, %v4041
        %v4074 = vpack.c.b16 %v4044, %v4043
        %v4075 = vpack.c.b16 %v4046, %v4045
        %v4076 = vpack.c.b16 %v4048, %v4047
        %v4077 = vpack.c.b16 %v4050, %v4049
        %v4078 = vpack.c.b16 %v4052, %v4051
        %v4079 = vpack.c.b16 %v4054, %v4053
        %v4080 = vpack.c.b16 %v4056, %v4055
        %v4081 = vpack.c.b16 %v4058, %v4057
        %v4082 = vpack.c.b16 %v4060, %v4059
        %v4083 = vpack.c.b16 %v4062, %v4061
        %v4084 = vpack.c.b16 %v4064, %v4063
        %v4085 = vpack.c.b16 %v4066, %v4065
        %v4086 = vpack.c.b16 %v4068, %v4067
        %v4087 = vpack.c.b16 %v4070, %v4069
        %v4088 = vpack.c.b16 %v4072, %v4071
        %v4121 = vunpack.c.l.b16 %v3847
        %v4122 = vunpack.c.l.b16 %v3848
        %v4123 = vunpack.c.l.b16 %v3849
        %v4124 = vunpack.c.l.b16 %v3850
        %v4125 = vunpack.c.l.b16 %v3851
        %v4126 = vunpack.c.l.b16 %v3852
        %v4127 = vunpack.c.l.b16 %v3853
        %v4128 = vunpack.c.l.b16 %v3854
        %v4129 = vunpack.c.l.b16 %v3855
        %v4130 = vunpack.c.l.b16 %v3856
        %v4131 = vunpack.c.l.b16 %v3857
        %v4132 = vunpack.c.l.b16 %v3858
        %v4133 = vunpack.c.l.b16 %v3859
        %v4134 = vunpack.c.l.b16 %v3860
        %v4135 = vunpack.c.l.b16 %v3861
        %v4136 = vunpack.c.l.b16 %v3862
        %v4137 = vpack.c.b16 %v4121, %v4121
        %v4138 = vpack.c.b16 %v4122, %v4122
        %v4139 = vpack.c.b16 %v4123, %v4123
        %v4140 = vpack.c.b16 %v4124, %v4124
        %v4141 = vpack.c.b16 %v4125, %v4125
        %v4142 = vpack.c.b16 %v4126, %v4126
        %v4143 = vpack.c.b16 %v4127, %v4127
        %v4144 = vpack.c.b16 %v4128, %v4128
        %v4145 = vpack.c.b16 %v4129, %v4129
        %v4146 = vpack.c.b16 %v4130, %v4130
        %v4147 = vpack.c.b16 %v4131, %v4131
        %v4148 = vpack.c.b16 %v4132, %v4132
        %v4149 = vpack.c.b16 %v4133, %v4133
        %v4150 = vpack.c.b16 %v4134, %v4134
        %v4151 = vpack.c.b16 %v4135, %v4135
        %v4152 = vpack.c.b16 %v4136, %v4136
        %v4154 = vshrl.u32 %v4073, 16
        %v4156 = vshll.u32 %v4073, 16
        %v4158 = vrot.slane %v4156, 1
        %v4159 = vor.u32 %v4154, %v4158
        %v4161 = vshll.u32 %v4137, 16
        %v4163 = vrot.slane %v4161, 1
        %v4164 = vsel %vm631, %v4159, %v4163
        %v4166 = vshrl.u32 %v4074, 16
        %v4168 = vshll.u32 %v4074, 16
        %v4170 = vrot.slane %v4168, 1
        %v4171 = vor.u32 %v4166, %v4170
        %v4173 = vshll.u32 %v4138, 16
        %v4175 = vrot.slane %v4173, 1
        %v4176 = vsel %vm631, %v4171, %v4175
        %v4178 = vshrl.u32 %v4075, 16
        %v4180 = vshll.u32 %v4075, 16
        %v4182 = vrot.slane %v4180, 1
        %v4183 = vor.u32 %v4178, %v4182
        %v4185 = vshll.u32 %v4139, 16
        %v4187 = vrot.slane %v4185, 1
        %v4188 = vsel %vm631, %v4183, %v4187
        %v4190 = vshrl.u32 %v4076, 16
        %v4192 = vshll.u32 %v4076, 16
        %v4194 = vrot.slane %v4192, 1
        %v4195 = vor.u32 %v4190, %v4194
        %v4197 = vshll.u32 %v4140, 16
        %v4199 = vrot.slane %v4197, 1
        %v4200 = vsel %vm631, %v4195, %v4199
        %v4202 = vshrl.u32 %v4077, 16
        %v4204 = vshll.u32 %v4077, 16
        %v4206 = vrot.slane %v4204, 1
        %v4207 = vor.u32 %v4202, %v4206
        %v4209 = vshll.u32 %v4141, 16
        %v4211 = vrot.slane %v4209, 1
        %v4212 = vsel %vm631, %v4207, %v4211
        %v4214 = vshrl.u32 %v4078, 16
        %v4216 = vshll.u32 %v4078, 16
        %v4218 = vrot.slane %v4216, 1
        %v4219 = vor.u32 %v4214, %v4218
        %v4221 = vshll.u32 %v4142, 16
        %v4223 = vrot.slane %v4221, 1
        %v4224 = vsel %vm631, %v4219, %v4223
        %v4226 = vshrl.u32 %v4079, 16
        %v4228 = vshll.u32 %v4079, 16
        %v4230 = vrot.slane %v4228, 1
        %v4231 = vor.u32 %v4226, %v4230
        %v4233 = vshll.u32 %v4143, 16
        %v4235 = vrot.slane %v4233, 1
        %v4236 = vsel %vm631, %v4231, %v4235
        %v4238 = vshrl.u32 %v4080, 16
        %v4240 = vshll.u32 %v4080, 16
        %v4242 = vrot.slane %v4240, 1
        %v4243 = vor.u32 %v4238, %v4242
        %v4245 = vshll.u32 %v4144, 16
        %v4247 = vrot.slane %v4245, 1
        %v4248 = vsel %vm631, %v4243, %v4247
        %v4250 = vshrl.u32 %v4081, 16
        %v4252 = vshll.u32 %v4081, 16
        %v4254 = vrot.slane %v4252, 1
        %v4255 = vor.u32 %v4250, %v4254
        %v4257 = vshll.u32 %v4145, 16
        %v4259 = vrot.slane %v4257, 1
        %v4260 = vsel %vm631, %v4255, %v4259
        %v4262 = vshrl.u32 %v4082, 16
        %v4264 = vshll.u32 %v4082, 16
        %v4266 = vrot.slane %v4264, 1
        %v4267 = vor.u32 %v4262, %v4266
        %v4269 = vshll.u32 %v4146, 16
        %v4271 = vrot.slane %v4269, 1
        %v4272 = vsel %vm631, %v4267, %v4271
        %v4274 = vshrl.u32 %v4083, 16
        %v4276 = vshll.u32 %v4083, 16
        %v4278 = vrot.slane %v4276, 1
        %v4279 = vor.u32 %v4274, %v4278
        %v4281 = vshll.u32 %v4147, 16
        %v4283 = vrot.slane %v4281, 1
        %v4284 = vsel %vm631, %v4279, %v4283
        %v4286 = vshrl.u32 %v4084, 16
        %v4288 = vshll.u32 %v4084, 16
        %v4290 = vrot.slane %v4288, 1
        %v4291 = vor.u32 %v4286, %v4290
        %v4293 = vshll.u32 %v4148, 16
        %v4295 = vrot.slane %v4293, 1
        %v4296 = vsel %vm631, %v4291, %v4295
        %v4298 = vshrl.u32 %v4085, 16
        %v4300 = vshll.u32 %v4085, 16
        %v4302 = vrot.slane %v4300, 1
        %v4303 = vor.u32 %v4298, %v4302
        %v4305 = vshll.u32 %v4149, 16
        %v4307 = vrot.slane %v4305, 1
        %v4308 = vsel %vm631, %v4303, %v4307
        %v4310 = vshrl.u32 %v4086, 16
        %v4312 = vshll.u32 %v4086, 16
        %v4314 = vrot.slane %v4312, 1
        %v4315 = vor.u32 %v4310, %v4314
        %v4317 = vshll.u32 %v4150, 16
        %v4319 = vrot.slane %v4317, 1
        %v4320 = vsel %vm631, %v4315, %v4319
        %v4322 = vshrl.u32 %v4087, 16
        %v4324 = vshll.u32 %v4087, 16
        %v4326 = vrot.slane %v4324, 1
        %v4327 = vor.u32 %v4322, %v4326
        %v4329 = vshll.u32 %v4151, 16
        %v4331 = vrot.slane %v4329, 1
        %v4332 = vsel %vm631, %v4327, %v4331
        %v4334 = vshrl.u32 %v4088, 16
        %v4336 = vshll.u32 %v4088, 16
        %v4338 = vrot.slane %v4336, 1
        %v4339 = vor.u32 %v4334, %v4338
        %v4341 = vshll.u32 %v4152, 16
        %v4343 = vrot.slane %v4341, 1
        %v4344 = vsel %vm631, %v4339, %v4343
        %v4377 = vunpack.c.l.b16 %v3863
        %v4378 = vunpack.c.l.b16 %v3864
        %v4379 = vunpack.c.l.b16 %v3865
        %v4380 = vunpack.c.l.b16 %v3866
        %v4381 = vunpack.c.l.b16 %v3867
        %v4382 = vunpack.c.l.b16 %v3868
        %v4383 = vunpack.c.l.b16 %v3869
        %v4384 = vunpack.c.l.b16 %v3870
        %v4385 = vunpack.c.l.b16 %v3871
        %v4386 = vunpack.c.l.b16 %v3872
        %v4387 = vunpack.c.l.b16 %v3873
        %v4388 = vunpack.c.l.b16 %v3874
        %v4389 = vunpack.c.l.b16 %v3875
        %v4390 = vunpack.c.l.b16 %v3876
        %v4391 = vunpack.c.l.b16 %v3877
        %v4392 = vunpack.c.l.b16 %v3878
        %v4393 = vpack.c.b16 %v4042, %v4377
        %v4394 = vpack.c.b16 %v4044, %v4378
        %v4395 = vpack.c.b16 %v4046, %v4379
        %v4396 = vpack.c.b16 %v4048, %v4380
        %v4397 = vpack.c.b16 %v4050, %v4381
        %v4398 = vpack.c.b16 %v4052, %v4382
        %v4399 = vpack.c.b16 %v4054, %v4383
        %v4400 = vpack.c.b16 %v4056, %v4384
        %v4401 = vpack.c.b16 %v4058, %v4385
        %v4402 = vpack.c.b16 %v4060, %v4386
        %v4403 = vpack.c.b16 %v4062, %v4387
        %v4404 = vpack.c.b16 %v4064, %v4388
        %v4405 = vpack.c.b16 %v4066, %v4389
        %v4406 = vpack.c.b16 %v4068, %v4390
        %v4407 = vpack.c.b16 %v4070, %v4391
        %v4408 = vpack.c.b16 %v4072, %v4392
        %v4409 = vrot.slane %v4393, 1
        %v4410 = vrot.slane %v4137, 1
        %v4411 = vsel %vm888, %v4409, %v4410
        %v4412 = vrot.slane %v4394, 1
        %v4413 = vrot.slane %v4138, 1
        %v4414 = vsel %vm888, %v4412, %v4413
        %v4415 = vrot.slane %v4395, 1
        %v4416 = vrot.slane %v4139, 1
        %v4417 = vsel %vm888, %v4415, %v4416
        %v4418 = vrot.slane %v4396, 1
        %v4419 = vrot.slane %v4140, 1
        %v4420 = vsel %vm888, %v4418, %v4419
        %v4421 = vrot.slane %v4397, 1
        %v4422 = vrot.slane %v4141, 1
        %v4423 = vsel %vm888, %v4421, %v4422
        %v4424 = vrot.slane %v4398, 1
        %v4425 = vrot.slane %v4142, 1
        %v4426 = vsel %vm888, %v4424, %v4425
        %v4427 = vrot.slane %v4399, 1
        %v4428 = vrot.slane %v4143, 1
        %v4429 = vsel %vm888, %v4427, %v4428
        %v4430 = vrot.slane %v4400, 1
        %v4431 = vrot.slane %v4144, 1
        %v4432 = vsel %vm888, %v4430, %v4431
        %v4433 = vrot.slane %v4401, 1
        %v4434 = vrot.slane %v4145, 1
        %v4435 = vsel %vm888, %v4433, %v4434
        %v4436 = vrot.slane %v4402, 1
        %v4437 = vrot.slane %v4146, 1
        %v4438 = vsel %vm888, %v4436, %v4437
        %v4439 = vrot.slane %v4403, 1
        %v4440 = vrot.slane %v4147, 1
        %v4441 = vsel %vm888, %v4439, %v4440
        %v4442 = vrot.slane %v4404, 1
        %v4443 = vrot.slane %v4148, 1
        %v4444 = vsel %vm888, %v4442, %v4443
        %v4445 = vrot.slane %v4405, 1
        %v4446 = vrot.slane %v4149, 1
        %v4447 = vsel %vm888, %v4445, %v4446
        %v4448 = vrot.slane %v4406, 1
        %v4449 = vrot.slane %v4150, 1
        %v4450 = vsel %vm888, %v4448, %v4449
        %v4451 = vrot.slane %v4407, 1
        %v4452 = vrot.slane %v4151, 1
        %v4453 = vsel %vm888, %v4451, %v4452
        %v4454 = vrot.slane %v4408, 1
        %v4455 = vrot.slane %v4152, 1
        %v4456 = vsel %vm888, %v4454, %v4455
        %v4505 = vunpack.c.l.b16 %v3880
        %v4506 = vunpack.c.l.b16 %v3881
        %v4507 = vunpack.c.l.b16 %v3882
        %v4508 = vunpack.c.l.b16 %v3883
        %v4509 = vunpack.c.l.b16 %v3884
        %v4510 = vunpack.c.l.b16 %v3885
        %v4511 = vunpack.c.l.b16 %v3886
        %v4512 = vunpack.c.l.b16 %v3887
        %v4513 = vunpack.c.l.b16 %v3888
        %v4514 = vunpack.c.l.b16 %v3889
        %v4515 = vunpack.c.l.b16 %v3890
        %v4516 = vunpack.c.l.b16 %v3891
        %v4517 = vunpack.c.l.b16 %v3892
        %v4518 = vunpack.c.l.b16 %v3893
        %v4519 = vunpack.c.l.b16 %v3894
        %v4520 = vunpack.c.l.b16 %v3895
        %v4521 = vunpack.c.l.b16 %v3896
        %v4522 = vunpack.c.l.b16 %v3897
        %v4523 = vunpack.c.l.b16 %v3898
        %v4524 = vunpack.c.l.b16 %v3899
        %v4525 = vunpack.c.l.b16 %v3900
        %v4526 = vunpack.c.l.b16 %v3901
        %v4527 = vunpack.c.l.b16 %v3902
        %v4528 = vunpack.c.l.b16 %v3903
        %v4529 = vunpack.c.l.b16 %v3904
        %v4530 = vunpack.c.l.b16 %v3905
        %v4531 = vunpack.c.l.b16 %v3906
        %v4532 = vunpack.c.l.b16 %v3907
        %v4533 = vunpack.c.l.b16 %v3908
        %v4534 = vunpack.c.l.b16 %v3909
        %v4535 = vunpack.c.l.b16 %v3910
        %v4536 = vunpack.c.l.b16 %v3911
        %v4537 = vpack.c.b16 %v4506, %v4505
        %v4538 = vpack.c.b16 %v4508, %v4507
        %v4539 = vpack.c.b16 %v4510, %v4509
        %v4540 = vpack.c.b16 %v4512, %v4511
        %v4541 = vpack.c.b16 %v4514, %v4513
        %v4542 = vpack.c.b16 %v4516, %v4515
        %v4543 = vpack.c.b16 %v4518, %v4517
        %v4544 = vpack.c.b16 %v4520, %v4519
        %v4545 = vpack.c.b16 %v4522, %v4521
        %v4546 = vpack.c.b16 %v4524, %v4523
        %v4547 = vpack.c.b16 %v4526, %v4525
        %v4548 = vpack.c.b16 %v4528, %v4527
        %v4549 = vpack.c.b16 %v4530, %v4529
        %v4550 = vpack.c.b16 %v4532, %v4531
        %v4551 = vpack.c.b16 %v4534, %v4533
        %v4552 = vpack.c.b16 %v4536, %v4535
        %v4585 = vunpack.c.l.b16 %v3912
        %v4586 = vunpack.c.l.b16 %v3913
        %v4587 = vunpack.c.l.b16 %v3914
        %v4588 = vunpack.c.l.b16 %v3915
        %v4589 = vunpack.c.l.b16 %v3916
        %v4590 = vunpack.c.l.b16 %v3917
        %v4591 = vunpack.c.l.b16 %v3918
        %v4592 = vunpack.c.l.b16 %v3919
        %v4593 = vunpack.c.l.b16 %v3920
        %v4594 = vunpack.c.l.b16 %v3921
        %v4595 = vunpack.c.l.b16 %v3922
        %v4596 = vunpack.c.l.b16 %v3923
        %v4597 = vunpack.c.l.b16 %v3924
        %v4598 = vunpack.c.l.b16 %v3925
        %v4599 = vunpack.c.l.b16 %v3926
        %v4600 = vunpack.c.l.b16 %v3927
        %v4601 = vpack.c.b16 %v4585, %v4585
        %v4602 = vpack.c.b16 %v4586, %v4586
        %v4603 = vpack.c.b16 %v4587, %v4587
        %v4604 = vpack.c.b16 %v4588, %v4588
        %v4605 = vpack.c.b16 %v4589, %v4589
        %v4606 = vpack.c.b16 %v4590, %v4590
        %v4607 = vpack.c.b16 %v4591, %v4591
        %v4608 = vpack.c.b16 %v4592, %v4592
        %v4609 = vpack.c.b16 %v4593, %v4593
        %v4610 = vpack.c.b16 %v4594, %v4594
        %v4611 = vpack.c.b16 %v4595, %v4595
        %v4612 = vpack.c.b16 %v4596, %v4596
        %v4613 = vpack.c.b16 %v4597, %v4597
        %v4614 = vpack.c.b16 %v4598, %v4598
        %v4615 = vpack.c.b16 %v4599, %v4599
        %v4616 = vpack.c.b16 %v4600, %v4600
        %v4618 = vshrl.u32 %v4537, 16
        %v4620 = vshll.u32 %v4537, 16
        %v4622 = vrot.slane %v4620, 1
        %v4623 = vor.u32 %v4618, %v4622
        %v4625 = vshll.u32 %v4601, 16
        %v4627 = vrot.slane %v4625, 1
        %v4628 = vsel %vm631, %v4623, %v4627
        %v4630 = vshrl.u32 %v4538, 16
        %v4632 = vshll.u32 %v4538, 16
        %v4634 = vrot.slane %v4632, 1
        %v4635 = vor.u32 %v4630, %v4634
        %v4637 = vshll.u32 %v4602, 16
        %v4639 = vrot.slane %v4637, 1
        %v4640 = vsel %vm631, %v4635, %v4639
        %v4642 = vshrl.u32 %v4539, 16
        %v4644 = vshll.u32 %v4539, 16
        %v4646 = vrot.slane %v4644, 1
        %v4647 = vor.u32 %v4642, %v4646
        %v4649 = vshll.u32 %v4603, 16
        %v4651 = vrot.slane %v4649, 1
        %v4652 = vsel %vm631, %v4647, %v4651
        %v4654 = vshrl.u32 %v4540, 16
        %v4656 = vshll.u32 %v4540, 16
        %v4658 = vrot.slane %v4656, 1
        %v4659 = vor.u32 %v4654, %v4658
        %v4661 = vshll.u32 %v4604, 16
        %v4663 = vrot.slane %v4661, 1
        %v4664 = vsel %vm631, %v4659, %v4663
        %v4666 = vshrl.u32 %v4541, 16
        %v4668 = vshll.u32 %v4541, 16
        %v4670 = vrot.slane %v4668, 1
        %v4671 = vor.u32 %v4666, %v4670
        %v4673 = vshll.u32 %v4605, 16
        %v4675 = vrot.slane %v4673, 1
        %v4676 = vsel %vm631, %v4671, %v4675
        %v4678 = vshrl.u32 %v4542, 16
        %v4680 = vshll.u32 %v4542, 16
        %v4682 = vrot.slane %v4680, 1
        %v4683 = vor.u32 %v4678, %v4682
        %v4685 = vshll.u32 %v4606, 16
        %v4687 = vrot.slane %v4685, 1
        %v4688 = vsel %vm631, %v4683, %v4687
        %v4690 = vshrl.u32 %v4543, 16
        %v4692 = vshll.u32 %v4543, 16
        %v4694 = vrot.slane %v4692, 1
        %v4695 = vor.u32 %v4690, %v4694
        %v4697 = vshll.u32 %v4607, 16
        %v4699 = vrot.slane %v4697, 1
        %v4700 = vsel %vm631, %v4695, %v4699
        %v4702 = vshrl.u32 %v4544, 16
        %v4704 = vshll.u32 %v4544, 16
        %v4706 = vrot.slane %v4704, 1
        %v4707 = vor.u32 %v4702, %v4706
        %v4709 = vshll.u32 %v4608, 16
        %v4711 = vrot.slane %v4709, 1
        %v4712 = vsel %vm631, %v4707, %v4711
        %v4714 = vshrl.u32 %v4545, 16
        %v4716 = vshll.u32 %v4545, 16
        %v4718 = vrot.slane %v4716, 1
        %v4719 = vor.u32 %v4714, %v4718
        %v4721 = vshll.u32 %v4609, 16
        %v4723 = vrot.slane %v4721, 1
        %v4724 = vsel %vm631, %v4719, %v4723
        %v4726 = vshrl.u32 %v4546, 16
        %v4728 = vshll.u32 %v4546, 16
        %v4730 = vrot.slane %v4728, 1
        %v4731 = vor.u32 %v4726, %v4730
        %v4733 = vshll.u32 %v4610, 16
        %v4735 = vrot.slane %v4733, 1
        %v4736 = vsel %vm631, %v4731, %v4735
        %v4738 = vshrl.u32 %v4547, 16
        %v4740 = vshll.u32 %v4547, 16
        %v4742 = vrot.slane %v4740, 1
        %v4743 = vor.u32 %v4738, %v4742
        %v4745 = vshll.u32 %v4611, 16
        %v4747 = vrot.slane %v4745, 1
        %v4748 = vsel %vm631, %v4743, %v4747
        %v4750 = vshrl.u32 %v4548, 16
        %v4752 = vshll.u32 %v4548, 16
        %v4754 = vrot.slane %v4752, 1
        %v4755 = vor.u32 %v4750, %v4754
        %v4757 = vshll.u32 %v4612, 16
        %v4759 = vrot.slane %v4757, 1
        %v4760 = vsel %vm631, %v4755, %v4759
        %v4762 = vshrl.u32 %v4549, 16
        %v4764 = vshll.u32 %v4549, 16
        %v4766 = vrot.slane %v4764, 1
        %v4767 = vor.u32 %v4762, %v4766
        %v4769 = vshll.u32 %v4613, 16
        %v4771 = vrot.slane %v4769, 1
        %v4772 = vsel %vm631, %v4767, %v4771
        %v4774 = vshrl.u32 %v4550, 16
        %v4776 = vshll.u32 %v4550, 16
        %v4778 = vrot.slane %v4776, 1
        %v4779 = vor.u32 %v4774, %v4778
        %v4781 = vshll.u32 %v4614, 16
        %v4783 = vrot.slane %v4781, 1
        %v4784 = vsel %vm631, %v4779, %v4783
        %v4786 = vshrl.u32 %v4551, 16
        %v4788 = vshll.u32 %v4551, 16
        %v4790 = vrot.slane %v4788, 1
        %v4791 = vor.u32 %v4786, %v4790
        %v4793 = vshll.u32 %v4615, 16
        %v4795 = vrot.slane %v4793, 1
        %v4796 = vsel %vm631, %v4791, %v4795
        %v4798 = vshrl.u32 %v4552, 16
        %v4800 = vshll.u32 %v4552, 16
        %v4802 = vrot.slane %v4800, 1
        %v4803 = vor.u32 %v4798, %v4802
        %v4805 = vshll.u32 %v4616, 16
        %v4807 = vrot.slane %v4805, 1
        %v4808 = vsel %vm631, %v4803, %v4807
        %v4841 = vunpack.c.l.b16 %v3928
        %v4842 = vunpack.c.l.b16 %v3929
        %v4843 = vunpack.c.l.b16 %v3930
        %v4844 = vunpack.c.l.b16 %v3931
        %v4845 = vunpack.c.l.b16 %v3932
        %v4846 = vunpack.c.l.b16 %v3933
        %v4847 = vunpack.c.l.b16 %v3934
        %v4848 = vunpack.c.l.b16 %v3935
        %v4849 = vunpack.c.l.b16 %v3936
        %v4850 = vunpack.c.l.b16 %v3937
        %v4851 = vunpack.c.l.b16 %v3938
        %v4852 = vunpack.c.l.b16 %v3939
        %v4853 = vunpack.c.l.b16 %v3940
        %v4854 = vunpack.c.l.b16 %v3941
        %v4855 = vunpack.c.l.b16 %v3942
        %v4856 = vunpack.c.l.b16 %v3943
        %v4857 = vpack.c.b16 %v4506, %v4841
        %v4858 = vpack.c.b16 %v4508, %v4842
        %v4859 = vpack.c.b16 %v4510, %v4843
        %v4860 = vpack.c.b16 %v4512, %v4844
        %v4861 = vpack.c.b16 %v4514, %v4845
        %v4862 = vpack.c.b16 %v4516, %v4846
        %v4863 = vpack.c.b16 %v4518, %v4847
        %v4864 = vpack.c.b16 %v4520, %v4848
        %v4865 = vpack.c.b16 %v4522, %v4849
        %v4866 = vpack.c.b16 %v4524, %v4850
        %v4867 = vpack.c.b16 %v4526, %v4851
        %v4868 = vpack.c.b16 %v4528, %v4852
        %v4869 = vpack.c.b16 %v4530, %v4853
        %v4870 = vpack.c.b16 %v4532, %v4854
        %v4871 = vpack.c.b16 %v4534, %v4855
        %v4872 = vpack.c.b16 %v4536, %v4856
        %v4873 = vrot.slane %v4857, 1
        %v4874 = vrot.slane %v4601, 1
        %v4875 = vsel %vm888, %v4873, %v4874
        %v4876 = vrot.slane %v4858, 1
        %v4877 = vrot.slane %v4602, 1
        %v4878 = vsel %vm888, %v4876, %v4877
        %v4879 = vrot.slane %v4859, 1
        %v4880 = vrot.slane %v4603, 1
        %v4881 = vsel %vm888, %v4879, %v4880
        %v4882 = vrot.slane %v4860, 1
        %v4883 = vrot.slane %v4604, 1
        %v4884 = vsel %vm888, %v4882, %v4883
        %v4885 = vrot.slane %v4861, 1
        %v4886 = vrot.slane %v4605, 1
        %v4887 = vsel %vm888, %v4885, %v4886
        %v4888 = vrot.slane %v4862, 1
        %v4889 = vrot.slane %v4606, 1
        %v4890 = vsel %vm888, %v4888, %v4889
        %v4891 = vrot.slane %v4863, 1
        %v4892 = vrot.slane %v4607, 1
        %v4893 = vsel %vm888, %v4891, %v4892
        %v4894 = vrot.slane %v4864, 1
        %v4895 = vrot.slane %v4608, 1
        %v4896 = vsel %vm888, %v4894, %v4895
        %v4897 = vrot.slane %v4865, 1
        %v4898 = vrot.slane %v4609, 1
        %v4899 = vsel %vm888, %v4897, %v4898
        %v4900 = vrot.slane %v4866, 1
        %v4901 = vrot.slane %v4610, 1
        %v4902 = vsel %vm888, %v4900, %v4901
        %v4903 = vrot.slane %v4867, 1
        %v4904 = vrot.slane %v4611, 1
        %v4905 = vsel %vm888, %v4903, %v4904
        %v4906 = vrot.slane %v4868, 1
        %v4907 = vrot.slane %v4612, 1
        %v4908 = vsel %vm888, %v4906, %v4907
        %v4909 = vrot.slane %v4869, 1
        %v4910 = vrot.slane %v4613, 1
        %v4911 = vsel %vm888, %v4909, %v4910
        %v4912 = vrot.slane %v4870, 1
        %v4913 = vrot.slane %v4614, 1
        %v4914 = vsel %vm888, %v4912, %v4913
        %v4915 = vrot.slane %v4871, 1
        %v4916 = vrot.slane %v4615, 1
        %v4917 = vsel %vm888, %v4915, %v4916
        %v4918 = vrot.slane %v4872, 1
        %v4919 = vrot.slane %v4616, 1
        %v4920 = vsel %vm888, %v4918, %v4919
        %v4969 = vunpack.c.l.b16 %v3945
        %v4970 = vunpack.c.l.b16 %v3946
        %v4971 = vunpack.c.l.b16 %v3947
        %v4972 = vunpack.c.l.b16 %v3948
        %v4973 = vunpack.c.l.b16 %v3949
        %v4974 = vunpack.c.l.b16 %v3950
        %v4975 = vunpack.c.l.b16 %v3951
        %v4976 = vunpack.c.l.b16 %v3952
        %v4977 = vunpack.c.l.b16 %v3953
        %v4978 = vunpack.c.l.b16 %v3954
        %v4979 = vunpack.c.l.b16 %v3955
        %v4980 = vunpack.c.l.b16 %v3956
        %v4981 = vunpack.c.l.b16 %v3957
        %v4982 = vunpack.c.l.b16 %v3958
        %v4983 = vunpack.c.l.b16 %v3959
        %v4984 = vunpack.c.l.b16 %v3960
        %v4985 = vunpack.c.l.b16 %v3961
        %v4986 = vunpack.c.l.b16 %v3962
        %v4987 = vunpack.c.l.b16 %v3963
        %v4988 = vunpack.c.l.b16 %v3964
        %v4989 = vunpack.c.l.b16 %v3965
        %v4990 = vunpack.c.l.b16 %v3966
        %v4991 = vunpack.c.l.b16 %v3967
        %v4992 = vunpack.c.l.b16 %v3968
        %v4993 = vunpack.c.l.b16 %v3969
        %v4994 = vunpack.c.l.b16 %v3970
        %v4995 = vunpack.c.l.b16 %v3971
        %v4996 = vunpack.c.l.b16 %v3972
        %v4997 = vunpack.c.l.b16 %v3973
        %v4998 = vunpack.c.l.b16 %v3974
        %v4999 = vunpack.c.l.b16 %v3975
        %v5000 = vunpack.c.l.b16 %v3976
        %v5001 = vpack.c.b16 %v4970, %v4969
        %v5002 = vpack.c.b16 %v4972, %v4971
        %v5003 = vpack.c.b16 %v4974, %v4973
        %v5004 = vpack.c.b16 %v4976, %v4975
        %v5005 = vpack.c.b16 %v4978, %v4977
        %v5006 = vpack.c.b16 %v4980, %v4979
        %v5007 = vpack.c.b16 %v4982, %v4981
        %v5008 = vpack.c.b16 %v4984, %v4983
        %v5009 = vpack.c.b16 %v4986, %v4985
        %v5010 = vpack.c.b16 %v4988, %v4987
        %v5011 = vpack.c.b16 %v4990, %v4989
        %v5012 = vpack.c.b16 %v4992, %v4991
        %v5013 = vpack.c.b16 %v4994, %v4993
        %v5014 = vpack.c.b16 %v4996, %v4995
        %v5015 = vpack.c.b16 %v4998, %v4997
        %v5016 = vpack.c.b16 %v5000, %v4999
        %v5049 = vunpack.c.l.b16 %v3977
        %v5050 = vunpack.c.l.b16 %v3978
        %v5051 = vunpack.c.l.b16 %v3979
        %v5052 = vunpack.c.l.b16 %v3980
        %v5053 = vunpack.c.l.b16 %v3981
        %v5054 = vunpack.c.l.b16 %v3982
        %v5055 = vunpack.c.l.b16 %v3983
        %v5056 = vunpack.c.l.b16 %v3984
        %v5057 = vunpack.c.l.b16 %v3985
        %v5058 = vunpack.c.l.b16 %v3986
        %v5059 = vunpack.c.l.b16 %v3987
        %v5060 = vunpack.c.l.b16 %v3988
        %v5061 = vunpack.c.l.b16 %v3989
        %v5062 = vunpack.c.l.b16 %v3990
        %v5063 = vunpack.c.l.b16 %v3991
        %v5064 = vunpack.c.l.b16 %v3992
        %v5065 = vpack.c.b16 %v5049, %v5049
        %v5066 = vpack.c.b16 %v5050, %v5050
        %v5067 = vpack.c.b16 %v5051, %v5051
        %v5068 = vpack.c.b16 %v5052, %v5052
        %v5069 = vpack.c.b16 %v5053, %v5053
        %v5070 = vpack.c.b16 %v5054, %v5054
        %v5071 = vpack.c.b16 %v5055, %v5055
        %v5072 = vpack.c.b16 %v5056, %v5056
        %v5073 = vpack.c.b16 %v5057, %v5057
        %v5074 = vpack.c.b16 %v5058, %v5058
        %v5075 = vpack.c.b16 %v5059, %v5059
        %v5076 = vpack.c.b16 %v5060, %v5060
        %v5077 = vpack.c.b16 %v5061, %v5061
        %v5078 = vpack.c.b16 %v5062, %v5062
        %v5079 = vpack.c.b16 %v5063, %v5063
        %v5080 = vpack.c.b16 %v5064, %v5064
        %v5082 = vshrl.u32 %v5001, 16
        %v5084 = vshll.u32 %v5001, 16
        %v5086 = vrot.slane %v5084, 1
        %v5087 = vor.u32 %v5082, %v5086
        %v5089 = vshll.u32 %v5065, 16
        %v5091 = vrot.slane %v5089, 1
        %v5092 = vsel %vm631, %v5087, %v5091
        %v5094 = vshrl.u32 %v5002, 16
        %v5096 = vshll.u32 %v5002, 16
        %v5098 = vrot.slane %v5096, 1
        %v5099 = vor.u32 %v5094, %v5098
        %v5101 = vshll.u32 %v5066, 16
        %v5103 = vrot.slane %v5101, 1
        %v5104 = vsel %vm631, %v5099, %v5103
        %v5106 = vshrl.u32 %v5003, 16
        %v5108 = vshll.u32 %v5003, 16
        %v5110 = vrot.slane %v5108, 1
        %v5111 = vor.u32 %v5106, %v5110
        %v5113 = vshll.u32 %v5067, 16
        %v5115 = vrot.slane %v5113, 1
        %v5116 = vsel %vm631, %v5111, %v5115
        %v5118 = vshrl.u32 %v5004, 16
        %v5120 = vshll.u32 %v5004, 16
        %v5122 = vrot.slane %v5120, 1
        %v5123 = vor.u32 %v5118, %v5122
        %v5125 = vshll.u32 %v5068, 16
        %v5127 = vrot.slane %v5125, 1
        %v5128 = vsel %vm631, %v5123, %v5127
        %v5130 = vshrl.u32 %v5005, 16
        %v5132 = vshll.u32 %v5005, 16
        %v5134 = vrot.slane %v5132, 1
        %v5135 = vor.u32 %v5130, %v5134
        %v5137 = vshll.u32 %v5069, 16
        %v5139 = vrot.slane %v5137, 1
        %v5140 = vsel %vm631, %v5135, %v5139
        %v5142 = vshrl.u32 %v5006, 16
        %v5144 = vshll.u32 %v5006, 16
        %v5146 = vrot.slane %v5144, 1
        %v5147 = vor.u32 %v5142, %v5146
        %v5149 = vshll.u32 %v5070, 16
        %v5151 = vrot.slane %v5149, 1
        %v5152 = vsel %vm631, %v5147, %v5151
        %v5154 = vshrl.u32 %v5007, 16
        %v5156 = vshll.u32 %v5007, 16
        %v5158 = vrot.slane %v5156, 1
        %v5159 = vor.u32 %v5154, %v5158
        %v5161 = vshll.u32 %v5071, 16
        %v5163 = vrot.slane %v5161, 1
        %v5164 = vsel %vm631, %v5159, %v5163
        %v5166 = vshrl.u32 %v5008, 16
        %v5168 = vshll.u32 %v5008, 16
        %v5170 = vrot.slane %v5168, 1
        %v5171 = vor.u32 %v5166, %v5170
        %v5173 = vshll.u32 %v5072, 16
        %v5175 = vrot.slane %v5173, 1
        %v5176 = vsel %vm631, %v5171, %v5175
        %v5178 = vshrl.u32 %v5009, 16
        %v5180 = vshll.u32 %v5009, 16
        %v5182 = vrot.slane %v5180, 1
        %v5183 = vor.u32 %v5178, %v5182
        %v5185 = vshll.u32 %v5073, 16
        %v5187 = vrot.slane %v5185, 1
        %v5188 = vsel %vm631, %v5183, %v5187
        %v5190 = vshrl.u32 %v5010, 16
        %v5192 = vshll.u32 %v5010, 16
        %v5194 = vrot.slane %v5192, 1
        %v5195 = vor.u32 %v5190, %v5194
        %v5197 = vshll.u32 %v5074, 16
        %v5199 = vrot.slane %v5197, 1
        %v5200 = vsel %vm631, %v5195, %v5199
        %v5202 = vshrl.u32 %v5011, 16
        %v5204 = vshll.u32 %v5011, 16
        %v5206 = vrot.slane %v5204, 1
        %v5207 = vor.u32 %v5202, %v5206
        %v5209 = vshll.u32 %v5075, 16
        %v5211 = vrot.slane %v5209, 1
        %v5212 = vsel %vm631, %v5207, %v5211
        %v5214 = vshrl.u32 %v5012, 16
        %v5216 = vshll.u32 %v5012, 16
        %v5218 = vrot.slane %v5216, 1
        %v5219 = vor.u32 %v5214, %v5218
        %v5221 = vshll.u32 %v5076, 16
        %v5223 = vrot.slane %v5221, 1
        %v5224 = vsel %vm631, %v5219, %v5223
        %v5226 = vshrl.u32 %v5013, 16
        %v5228 = vshll.u32 %v5013, 16
        %v5230 = vrot.slane %v5228, 1
        %v5231 = vor.u32 %v5226, %v5230
        %v5233 = vshll.u32 %v5077, 16
        %v5235 = vrot.slane %v5233, 1
        %v5236 = vsel %vm631, %v5231, %v5235
        %v5238 = vshrl.u32 %v5014, 16
        %v5240 = vshll.u32 %v5014, 16
        %v5242 = vrot.slane %v5240, 1
        %v5243 = vor.u32 %v5238, %v5242
        %v5245 = vshll.u32 %v5078, 16
        %v5247 = vrot.slane %v5245, 1
        %v5248 = vsel %vm631, %v5243, %v5247
        %v5250 = vshrl.u32 %v5015, 16
        %v5252 = vshll.u32 %v5015, 16
        %v5254 = vrot.slane %v5252, 1
        %v5255 = vor.u32 %v5250, %v5254
        %v5257 = vshll.u32 %v5079, 16
        %v5259 = vrot.slane %v5257, 1
        %v5260 = vsel %vm631, %v5255, %v5259
        %v5262 = vshrl.u32 %v5016, 16
        %v5264 = vshll.u32 %v5016, 16
        %v5266 = vrot.slane %v5264, 1
        %v5267 = vor.u32 %v5262, %v5266
        %v5269 = vshll.u32 %v5080, 16
        %v5271 = vrot.slane %v5269, 1
        %v5272 = vsel %vm631, %v5267, %v5271
        %v5305 = vunpack.c.l.b16 %v3993
        %v5306 = vunpack.c.l.b16 %v3994
        %v5307 = vunpack.c.l.b16 %v3995
        %v5308 = vunpack.c.l.b16 %v3996
        %v5309 = vunpack.c.l.b16 %v3997
        %v5310 = vunpack.c.l.b16 %v3998
        %v5311 = vunpack.c.l.b16 %v3999
        %v5312 = vunpack.c.l.b16 %v4000
        %v5313 = vunpack.c.l.b16 %v4001
        %v5314 = vunpack.c.l.b16 %v4002
        %v5315 = vunpack.c.l.b16 %v4003
        %v5316 = vunpack.c.l.b16 %v4004
        %v5317 = vunpack.c.l.b16 %v4005
        %v5318 = vunpack.c.l.b16 %v4006
        %v5319 = vunpack.c.l.b16 %v4007
        %v5320 = vunpack.c.l.b16 %v4008
        %v5321 = vpack.c.b16 %v4970, %v5305
        %v5322 = vpack.c.b16 %v4972, %v5306
        %v5323 = vpack.c.b16 %v4974, %v5307
        %v5324 = vpack.c.b16 %v4976, %v5308
        %v5325 = vpack.c.b16 %v4978, %v5309
        %v5326 = vpack.c.b16 %v4980, %v5310
        %v5327 = vpack.c.b16 %v4982, %v5311
        %v5328 = vpack.c.b16 %v4984, %v5312
        %v5329 = vpack.c.b16 %v4986, %v5313
        %v5330 = vpack.c.b16 %v4988, %v5314
        %v5331 = vpack.c.b16 %v4990, %v5315
        %v5332 = vpack.c.b16 %v4992, %v5316
        %v5333 = vpack.c.b16 %v4994, %v5317
        %v5334 = vpack.c.b16 %v4996, %v5318
        %v5335 = vpack.c.b16 %v4998, %v5319
        %v5336 = vpack.c.b16 %v5000, %v5320
        %v5337 = vrot.slane %v5321, 1
        %v5338 = vrot.slane %v5065, 1
        %v5339 = vsel %vm888, %v5337, %v5338
        %v5340 = vrot.slane %v5322, 1
        %v5341 = vrot.slane %v5066, 1
        %v5342 = vsel %vm888, %v5340, %v5341
        %v5343 = vrot.slane %v5323, 1
        %v5344 = vrot.slane %v5067, 1
        %v5345 = vsel %vm888, %v5343, %v5344
        %v5346 = vrot.slane %v5324, 1
        %v5347 = vrot.slane %v5068, 1
        %v5348 = vsel %vm888, %v5346, %v5347
        %v5349 = vrot.slane %v5325, 1
        %v5350 = vrot.slane %v5069, 1
        %v5351 = vsel %vm888, %v5349, %v5350
        %v5352 = vrot.slane %v5326, 1
        %v5353 = vrot.slane %v5070, 1
        %v5354 = vsel %vm888, %v5352, %v5353
        %v5355 = vrot.slane %v5327, 1
        %v5356 = vrot.slane %v5071, 1
        %v5357 = vsel %vm888, %v5355, %v5356
        %v5358 = vrot.slane %v5328, 1
        %v5359 = vrot.slane %v5072, 1
        %v5360 = vsel %vm888, %v5358, %v5359
        %v5361 = vrot.slane %v5329, 1
        %v5362 = vrot.slane %v5073, 1
        %v5363 = vsel %vm888, %v5361, %v5362
        %v5364 = vrot.slane %v5330, 1
        %v5365 = vrot.slane %v5074, 1
        %v5366 = vsel %vm888, %v5364, %v5365
        %v5367 = vrot.slane %v5331, 1
        %v5368 = vrot.slane %v5075, 1
        %v5369 = vsel %vm888, %v5367, %v5368
        %v5370 = vrot.slane %v5332, 1
        %v5371 = vrot.slane %v5076, 1
        %v5372 = vsel %vm888, %v5370, %v5371
        %v5373 = vrot.slane %v5333, 1
        %v5374 = vrot.slane %v5077, 1
        %v5375 = vsel %vm888, %v5373, %v5374
        %v5376 = vrot.slane %v5334, 1
        %v5377 = vrot.slane %v5078, 1
        %v5378 = vsel %vm888, %v5376, %v5377
        %v5379 = vrot.slane %v5335, 1
        %v5380 = vrot.slane %v5079, 1
        %v5381 = vsel %vm888, %v5379, %v5380
        %v5382 = vrot.slane %v5336, 1
        %v5383 = vrot.slane %v5080, 1
        %v5384 = vsel %vm888, %v5382, %v5383
        %v5401 = vld [vmem:[#allocation3] sm:$0xf]
        %v5402 = vld [vmem:[#allocation3 + $0x4] sm:$0xf]
        %v5403 = vld [vmem:[#allocation3 + $0x8] sm:$0xf]
        %v5404 = vld [vmem:[#allocation3 + $0xc] sm:$0xf]
        %v5405 = vld [vmem:[#allocation3 + $0x10] sm:$0xf]
        %v5406 = vld [vmem:[#allocation3 + $0x14] sm:$0xf]
        %v5407 = vld [vmem:[#allocation3 + $0x18] sm:$0xf]
        %v5408 = vld [vmem:[#allocation3 + $0x1c] sm:$0xf]
        %v5409 = vld [vmem:[#allocation3 + $0x20] sm:$0xf]
        %v5410 = vld [vmem:[#allocation3 + $0x24] sm:$0xf]
        %v5411 = vld [vmem:[#allocation3 + $0x28] sm:$0xf]
        %v5412 = vld [vmem:[#allocation3 + $0x2c] sm:$0xf]
        %v5413 = vld [vmem:[#allocation3 + $0x30] sm:$0xf]
        %v5414 = vld [vmem:[#allocation3 + $0x34] sm:$0xf]
        %v5415 = vld [vmem:[#allocation3 + $0x38] sm:$0xf]
        %v5416 = vld [vmem:[#allocation3 + $0x3c] sm:$0xf]
        %v5417 = vld [vmem:[#allocation3 + $0x40] sm:$0xf]
        %v5418 = vld [vmem:[#allocation3 + $0x44] sm:$0xf]
        %v5419 = vld [vmem:[#allocation3 + $0x48] sm:$0xf]
        %v5420 = vld [vmem:[#allocation3 + $0x4c] sm:$0xf]
        %v5421 = vld [vmem:[#allocation3 + $0x50] sm:$0xf]
        %v5422 = vld [vmem:[#allocation3 + $0x54] sm:$0xf]
        %v5423 = vld [vmem:[#allocation3 + $0x58] sm:$0xf]
        %v5424 = vld [vmem:[#allocation3 + $0x5c] sm:$0xf]
        %v5425 = vld [vmem:[#allocation3 + $0x60] sm:$0xf]
        %v5426 = vld [vmem:[#allocation3 + $0x64] sm:$0xf]
        %v5427 = vld [vmem:[#allocation3 + $0x68] sm:$0xf]
        %v5428 = vld [vmem:[#allocation3 + $0x6c] sm:$0xf]
        %v5429 = vld [vmem:[#allocation3 + $0x70] sm:$0xf]
        %v5430 = vld [vmem:[#allocation3 + $0x74] sm:$0xf]
        %v5431 = vld [vmem:[#allocation3 + $0x78] sm:$0xf]
        %v5432 = vld [vmem:[#allocation3 + $0x7c] sm:$0xf]
        %v5433 = vld [vmem:[#allocation3 + $0x80] sm:$0xf]
        %v5434 = vld [vmem:[#allocation3 + $0x84] sm:$0xf]
        %v5435 = vld [vmem:[#allocation3 + $0x88] sm:$0xf]
        %v5436 = vld [vmem:[#allocation3 + $0x8c] sm:$0xf]
        %v5437 = vld [vmem:[#allocation3 + $0x90] sm:$0xf]
        %v5438 = vld [vmem:[#allocation3 + $0x94] sm:$0xf]
        %v5439 = vld [vmem:[#allocation3 + $0x98] sm:$0xf]
        %v5440 = vld [vmem:[#allocation3 + $0x9c] sm:$0xf]
        %v5441 = vld [vmem:[#allocation3 + $0xa0] sm:$0xf]
        %v5442 = vld [vmem:[#allocation3 + $0xa4] sm:$0xf]
        %v5443 = vld [vmem:[#allocation3 + $0xa8] sm:$0xf]
        %v5444 = vld [vmem:[#allocation3 + $0xac] sm:$0xf]
        %v5445 = vld [vmem:[#allocation3 + $0xb0] sm:$0xf]
        %v5446 = vld [vmem:[#allocation3 + $0xb4] sm:$0xf]
        %v5447 = vld [vmem:[#allocation3 + $0xb8] sm:$0xf]
        %v5448 = vld [vmem:[#allocation3 + $0xbc] sm:$0xf]
        %v5449 = vld [vmem:[#allocation3 + $0xc0] sm:$0xf]
        %v5450 = vld [vmem:[#allocation3 + $0xc4] sm:$0xf]
        %v5451 = vld [vmem:[#allocation3 + $0xc8] sm:$0xf]
        %v5452 = vld [vmem:[#allocation3 + $0xcc] sm:$0xf]
        %v5453 = vld [vmem:[#allocation3 + $0xd0] sm:$0xf]
        %v5454 = vld [vmem:[#allocation3 + $0xd4] sm:$0xf]
        %v5455 = vld [vmem:[#allocation3 + $0xd8] sm:$0xf]
        %v5456 = vld [vmem:[#allocation3 + $0xdc] sm:$0xf]
        %v5457 = vld [vmem:[#allocation3 + $0xe0] sm:$0xf]
        %v5458 = vld [vmem:[#allocation3 + $0xe4] sm:$0xf]
        %v5459 = vld [vmem:[#allocation3 + $0xe8] sm:$0xf]
        %v5460 = vld [vmem:[#allocation3 + $0xec] sm:$0xf]
        %v5461 = vld [vmem:[#allocation3 + $0xf0] sm:$0xf]
        %v5462 = vld [vmem:[#allocation3 + $0xf4] sm:$0xf]
        %v5463 = vld [vmem:[#allocation3 + $0xf8] sm:$0xf]
        %v5464 = vld [vmem:[#allocation3 + $0xfc] sm:$0xf]
        %v5465 = vld [vmem:[#allocation3 + $0x100] sm:$0xf]
        %v5466 = vld [vmem:[#allocation3 + $0x104] sm:$0xf]
        %v5467 = vld [vmem:[#allocation3 + $0x108] sm:$0xf]
        %v5468 = vld [vmem:[#allocation3 + $0x10c] sm:$0xf]
        %v5469 = vld [vmem:[#allocation3 + $0x110] sm:$0xf]
        %v5470 = vld [vmem:[#allocation3 + $0x114] sm:$0xf]
        %v5471 = vld [vmem:[#allocation3 + $0x118] sm:$0xf]
        %v5472 = vld [vmem:[#allocation3 + $0x11c] sm:$0xf]
        %v5473 = vld [vmem:[#allocation3 + $0x120] sm:$0xf]
        %v5474 = vld [vmem:[#allocation3 + $0x124] sm:$0xf]
        %v5475 = vld [vmem:[#allocation3 + $0x128] sm:$0xf]
        %v5476 = vld [vmem:[#allocation3 + $0x12c] sm:$0xf]
        %v5477 = vld [vmem:[#allocation3 + $0x130] sm:$0xf]
        %v5478 = vld [vmem:[#allocation3 + $0x134] sm:$0xf]
        %v5479 = vld [vmem:[#allocation3 + $0x138] sm:$0xf]
        %v5480 = vld [vmem:[#allocation3 + $0x13c] sm:$0xf]
        %v5481 = vld [vmem:[#allocation3 + $0x140] sm:$0xf]
        %v5482 = vld [vmem:[#allocation3 + $0x144] sm:$0xf]
        %v5483 = vld [vmem:[#allocation3 + $0x148] sm:$0xf]
        %v5484 = vld [vmem:[#allocation3 + $0x14c] sm:$0xf]
        %v5485 = vld [vmem:[#allocation3 + $0x150] sm:$0xf]
        %v5486 = vld [vmem:[#allocation3 + $0x154] sm:$0xf]
        %v5487 = vld [vmem:[#allocation3 + $0x158] sm:$0xf]
        %v5488 = vld [vmem:[#allocation3 + $0x15c] sm:$0xf]
        %v5489 = vld [vmem:[#allocation3 + $0x160] sm:$0xf]
        %v5490 = vld [vmem:[#allocation3 + $0x164] sm:$0xf]
        %v5491 = vld [vmem:[#allocation3 + $0x168] sm:$0xf]
        %v5492 = vld [vmem:[#allocation3 + $0x16c] sm:$0xf]
        %v5493 = vld [vmem:[#allocation3 + $0x170] sm:$0xf]
        %v5494 = vld [vmem:[#allocation3 + $0x174] sm:$0xf]
        %v5495 = vld [vmem:[#allocation3 + $0x178] sm:$0xf]
        %v5496 = vld [vmem:[#allocation3 + $0x17c] sm:$0xf]
        %v5497 = vld [vmem:[#allocation3 + $0x180] sm:$0xf]
        %v5498 = vld [vmem:[#allocation3 + $0x184] sm:$0xf]
        %v5499 = vld [vmem:[#allocation3 + $0x188] sm:$0xf]
        %v5500 = vld [vmem:[#allocation3 + $0x18c] sm:$0xf]
        %v5501 = vld [vmem:[#allocation3 + $0x190] sm:$0xf]
        %v5502 = vld [vmem:[#allocation3 + $0x194] sm:$0xf]
        %v5503 = vld [vmem:[#allocation3 + $0x198] sm:$0xf]
        %v5504 = vld [vmem:[#allocation3 + $0x19c] sm:$0xf]
        %v5505 = vld [vmem:[#allocation3 + $0x1a0] sm:$0xf]
        %v5506 = vld [vmem:[#allocation3 + $0x1a4] sm:$0xf]
        %v5507 = vld [vmem:[#allocation3 + $0x1a8] sm:$0xf]
        %v5508 = vld [vmem:[#allocation3 + $0x1ac] sm:$0xf]
        %v5509 = vld [vmem:[#allocation3 + $0x1b0] sm:$0xf]
        %v5510 = vld [vmem:[#allocation3 + $0x1b4] sm:$0xf]
        %v5511 = vld [vmem:[#allocation3 + $0x1b8] sm:$0xf]
        %v5512 = vld [vmem:[#allocation3 + $0x1bc] sm:$0xf]
        %v5513 = vld [vmem:[#allocation3 + $0x1c0] sm:$0xf]
        %v5514 = vld [vmem:[#allocation3 + $0x1c4] sm:$0xf]
        %v5515 = vld [vmem:[#allocation3 + $0x1c8] sm:$0xf]
        %v5516 = vld [vmem:[#allocation3 + $0x1cc] sm:$0xf]
        %v5517 = vld [vmem:[#allocation3 + $0x1d0] sm:$0xf]
        %v5518 = vld [vmem:[#allocation3 + $0x1d4] sm:$0xf]
        %v5519 = vld [vmem:[#allocation3 + $0x1d8] sm:$0xf]
        %v5520 = vld [vmem:[#allocation3 + $0x1dc] sm:$0xf]
        %v5521 = vld [vmem:[#allocation3 + $0x1e0] sm:$0xf]
        %v5522 = vld [vmem:[#allocation3 + $0x1e4] sm:$0xf]
        %v5523 = vld [vmem:[#allocation3 + $0x1e8] sm:$0xf]
        %v5524 = vld [vmem:[#allocation3 + $0x1ec] sm:$0xf]
        %v5525 = vld [vmem:[#allocation3 + $0x1f0] sm:$0xf]
        %v5526 = vld [vmem:[#allocation3 + $0x1f4] sm:$0xf]
        %v5527 = vld [vmem:[#allocation3 + $0x1f8] sm:$0xf]
        %v5528 = vld [vmem:[#allocation3 + $0x1fc] sm:$0xf]
        %v5529 = vld [vmem:[#allocation3 + $0x200] sm:$0xf]
        %v5530 = vld [vmem:[#allocation3 + $0x204] sm:$0xf]
        %v5531 = vld [vmem:[#allocation3 + $0x208] sm:$0xf]
        %v5532 = vld [vmem:[#allocation3 + $0x20c] sm:$0xf]
        %v5533 = vld [vmem:[#allocation3 + $0x210] sm:$0xf]
        %v5534 = vld [vmem:[#allocation3 + $0x214] sm:$0xf]
        %v5535 = vld [vmem:[#allocation3 + $0x218] sm:$0xf]
        %v5536 = vld [vmem:[#allocation3 + $0x21c] sm:$0xf]
        %v5537 = vld [vmem:[#allocation3 + $0x220] sm:$0xf]
        %v5538 = vld [vmem:[#allocation3 + $0x224] sm:$0xf]
        %v5539 = vld [vmem:[#allocation3 + $0x228] sm:$0xf]
        %v5540 = vld [vmem:[#allocation3 + $0x22c] sm:$0xf]
        %v5541 = vld [vmem:[#allocation3 + $0x230] sm:$0xf]
        %v5542 = vld [vmem:[#allocation3 + $0x234] sm:$0xf]
        %v5543 = vld [vmem:[#allocation3 + $0x238] sm:$0xf]
        %v5544 = vld [vmem:[#allocation3 + $0x23c] sm:$0xf]
        %v5689 = vunpack.c.l.b16 %v5401
        %v5690 = vunpack.c.l.b16 %v5402
        %v5691 = vunpack.c.l.b16 %v5403
        %v5692 = vunpack.c.l.b16 %v5404
        %v5693 = vunpack.c.l.b16 %v5405
        %v5694 = vunpack.c.l.b16 %v5406
        %v5695 = vunpack.c.l.b16 %v5407
        %v5696 = vunpack.c.l.b16 %v5408
        %v5697 = vunpack.c.l.b16 %v5409
        %v5698 = vunpack.c.l.b16 %v5410
        %v5699 = vunpack.c.l.b16 %v5411
        %v5700 = vunpack.c.l.b16 %v5412
        %v5701 = vunpack.c.l.b16 %v5413
        %v5702 = vunpack.c.l.b16 %v5414
        %v5703 = vunpack.c.l.b16 %v5415
        %v5704 = vunpack.c.l.b16 %v5416
        %v5705 = vunpack.c.l.b16 %v5417
        %v5706 = vunpack.c.l.b16 %v5418
        %v5707 = vunpack.c.l.b16 %v5419
        %v5708 = vunpack.c.l.b16 %v5420
        %v5709 = vunpack.c.l.b16 %v5421
        %v5710 = vunpack.c.l.b16 %v5422
        %v5711 = vunpack.c.l.b16 %v5423
        %v5712 = vunpack.c.l.b16 %v5424
        %v5713 = vunpack.c.l.b16 %v5425
        %v5714 = vunpack.c.l.b16 %v5426
        %v5715 = vunpack.c.l.b16 %v5427
        %v5716 = vunpack.c.l.b16 %v5428
        %v5717 = vunpack.c.l.b16 %v5429
        %v5718 = vunpack.c.l.b16 %v5430
        %v5719 = vunpack.c.l.b16 %v5431
        %v5720 = vunpack.c.l.b16 %v5432
        %v5721 = vunpack.c.l.b16 %v5433
        %v5722 = vunpack.c.l.b16 %v5434
        %v5723 = vunpack.c.l.b16 %v5435
        %v5724 = vunpack.c.l.b16 %v5436
        %v5725 = vunpack.c.l.b16 %v5437
        %v5726 = vunpack.c.l.b16 %v5438
        %v5727 = vunpack.c.l.b16 %v5439
        %v5728 = vunpack.c.l.b16 %v5440
        %v5729 = vunpack.c.l.b16 %v5441
        %v5730 = vunpack.c.l.b16 %v5442
        %v5731 = vunpack.c.l.b16 %v5443
        %v5732 = vunpack.c.l.b16 %v5444
        %v5733 = vunpack.c.l.b16 %v5445
        %v5734 = vunpack.c.l.b16 %v5446
        %v5735 = vunpack.c.l.b16 %v5447
        %v5736 = vunpack.c.l.b16 %v5448
        %v5737 = vunpack.c.l.b16 %v5449
        %v5738 = vunpack.c.l.b16 %v5450
        %v5739 = vunpack.c.l.b16 %v5451
        %v5740 = vunpack.c.l.b16 %v5452
        %v5741 = vunpack.c.l.b16 %v5453
        %v5742 = vunpack.c.l.b16 %v5454
        %v5743 = vunpack.c.l.b16 %v5455
        %v5744 = vunpack.c.l.b16 %v5456
        %v5745 = vunpack.c.l.b16 %v5457
        %v5746 = vunpack.c.l.b16 %v5458
        %v5747 = vunpack.c.l.b16 %v5459
        %v5748 = vunpack.c.l.b16 %v5460
        %v5749 = vunpack.c.l.b16 %v5461
        %v5750 = vunpack.c.l.b16 %v5462
        %v5751 = vunpack.c.l.b16 %v5463
        %v5752 = vunpack.c.l.b16 %v5464
        %v5753 = vunpack.c.l.b16 %v5465
        %v5754 = vunpack.c.l.b16 %v5466
        %v5755 = vunpack.c.l.b16 %v5467
        %v5756 = vunpack.c.l.b16 %v5468
        %v5757 = vunpack.c.l.b16 %v5469
        %v5758 = vunpack.c.l.b16 %v5470
        %v5759 = vunpack.c.l.b16 %v5471
        %v5760 = vunpack.c.l.b16 %v5472
        %v5761 = vunpack.c.l.b16 %v5473
        %v5762 = vunpack.c.l.b16 %v5474
        %v5763 = vunpack.c.l.b16 %v5475
        %v5764 = vunpack.c.l.b16 %v5476
        %v5765 = vunpack.c.l.b16 %v5477
        %v5766 = vunpack.c.l.b16 %v5478
        %v5767 = vunpack.c.l.b16 %v5479
        %v5768 = vunpack.c.l.b16 %v5480
        %v5769 = vunpack.c.l.b16 %v5481
        %v5770 = vunpack.c.l.b16 %v5482
        %v5771 = vunpack.c.l.b16 %v5483
        %v5772 = vunpack.c.l.b16 %v5484
        %v5773 = vunpack.c.l.b16 %v5485
        %v5774 = vunpack.c.l.b16 %v5486
        %v5775 = vunpack.c.l.b16 %v5487
        %v5776 = vunpack.c.l.b16 %v5488
        %v5777 = vunpack.c.l.b16 %v5489
        %v5778 = vunpack.c.l.b16 %v5490
        %v5779 = vunpack.c.l.b16 %v5491
        %v5780 = vunpack.c.l.b16 %v5492
        %v5781 = vunpack.c.l.b16 %v5493
        %v5782 = vunpack.c.l.b16 %v5494
        %v5783 = vunpack.c.l.b16 %v5495
        %v5784 = vunpack.c.l.b16 %v5496
        %v5785 = vunpack.c.l.b16 %v5497
        %v5786 = vunpack.c.l.b16 %v5498
        %v5787 = vunpack.c.l.b16 %v5499
        %v5788 = vunpack.c.l.b16 %v5500
        %v5789 = vunpack.c.l.b16 %v5501
        %v5790 = vunpack.c.l.b16 %v5502
        %v5791 = vunpack.c.l.b16 %v5503
        %v5792 = vunpack.c.l.b16 %v5504
        %v5793 = vunpack.c.l.b16 %v5505
        %v5794 = vunpack.c.l.b16 %v5506
        %v5795 = vunpack.c.l.b16 %v5507
        %v5796 = vunpack.c.l.b16 %v5508
        %v5797 = vunpack.c.l.b16 %v5509
        %v5798 = vunpack.c.l.b16 %v5510
        %v5799 = vunpack.c.l.b16 %v5511
        %v5800 = vunpack.c.l.b16 %v5512
        %v5801 = vunpack.c.l.b16 %v5513
        %v5802 = vunpack.c.l.b16 %v5514
        %v5803 = vunpack.c.l.b16 %v5515
        %v5804 = vunpack.c.l.b16 %v5516
        %v5805 = vunpack.c.l.b16 %v5517
        %v5806 = vunpack.c.l.b16 %v5518
        %v5807 = vunpack.c.l.b16 %v5519
        %v5808 = vunpack.c.l.b16 %v5520
        %v5809 = vunpack.c.l.b16 %v5521
        %v5810 = vunpack.c.l.b16 %v5522
        %v5811 = vunpack.c.l.b16 %v5523
        %v5812 = vunpack.c.l.b16 %v5524
        %v5813 = vunpack.c.l.b16 %v5525
        %v5814 = vunpack.c.l.b16 %v5526
        %v5815 = vunpack.c.l.b16 %v5527
        %v5816 = vunpack.c.l.b16 %v5528
        %v5817 = vunpack.c.l.b16 %v5529
        %v5818 = vunpack.c.l.b16 %v5530
        %v5819 = vunpack.c.l.b16 %v5531
        %v5820 = vunpack.c.l.b16 %v5532
        %v5821 = vunpack.c.l.b16 %v5533
        %v5822 = vunpack.c.l.b16 %v5534
        %v5823 = vunpack.c.l.b16 %v5535
        %v5824 = vunpack.c.l.b16 %v5536
        %v5825 = vunpack.c.l.b16 %v5537
        %v5826 = vunpack.c.l.b16 %v5538
        %v5827 = vunpack.c.l.b16 %v5539
        %v5828 = vunpack.c.l.b16 %v5540
        %v5829 = vunpack.c.l.b16 %v5541
        %v5830 = vunpack.c.l.b16 %v5542
        %v5831 = vunpack.c.l.b16 %v5543
        %v5832 = vunpack.c.l.b16 %v5544
        %v5833 = vpack.c.b16 %v5690, %v5689
        %v5834 = vpack.c.b16 %v5692, %v5691
        %v5835 = vpack.c.b16 %v5694, %v5693
        %v5836 = vpack.c.b16 %v5696, %v5695
        %v5837 = vpack.c.b16 %v5698, %v5697
        %v5838 = vpack.c.b16 %v5700, %v5699
        %v5839 = vpack.c.b16 %v5702, %v5701
        %v5840 = vpack.c.b16 %v5704, %v5703
        %v5841 = vpack.c.b16 %v5706, %v5705
        %v5842 = vpack.c.b16 %v5708, %v5707
        %v5843 = vpack.c.b16 %v5710, %v5709
        %v5844 = vpack.c.b16 %v5712, %v5711
        %v5845 = vpack.c.b16 %v5714, %v5713
        %v5846 = vpack.c.b16 %v5716, %v5715
        %v5847 = vpack.c.b16 %v5718, %v5717
        %v5848 = vpack.c.b16 %v5720, %v5719
        %v5849 = vpack.c.b16 %v5722, %v5721
        %v5850 = vpack.c.b16 %v5724, %v5723
        %v5851 = vpack.c.b16 %v5726, %v5725
        %v5852 = vpack.c.b16 %v5728, %v5727
        %v5853 = vpack.c.b16 %v5730, %v5729
        %v5854 = vpack.c.b16 %v5732, %v5731
        %v5855 = vpack.c.b16 %v5734, %v5733
        %v5856 = vpack.c.b16 %v5736, %v5735
        %v5857 = vpack.c.b16 %v5738, %v5737
        %v5858 = vpack.c.b16 %v5740, %v5739
        %v5859 = vpack.c.b16 %v5742, %v5741
        %v5860 = vpack.c.b16 %v5744, %v5743
        %v5861 = vpack.c.b16 %v5746, %v5745
        %v5862 = vpack.c.b16 %v5748, %v5747
        %v5863 = vpack.c.b16 %v5750, %v5749
        %v5864 = vpack.c.b16 %v5752, %v5751
        %v5865 = vpack.c.b16 %v5754, %v5753
        %v5866 = vpack.c.b16 %v5756, %v5755
        %v5867 = vpack.c.b16 %v5758, %v5757
        %v5868 = vpack.c.b16 %v5760, %v5759
        %v5869 = vpack.c.b16 %v5762, %v5761
        %v5870 = vpack.c.b16 %v5764, %v5763
        %v5871 = vpack.c.b16 %v5766, %v5765
        %v5872 = vpack.c.b16 %v5768, %v5767
        %v5873 = vpack.c.b16 %v5770, %v5769
        %v5874 = vpack.c.b16 %v5772, %v5771
        %v5875 = vpack.c.b16 %v5774, %v5773
        %v5876 = vpack.c.b16 %v5776, %v5775
        %v5877 = vpack.c.b16 %v5778, %v5777
        %v5878 = vpack.c.b16 %v5780, %v5779
        %v5879 = vpack.c.b16 %v5782, %v5781
        %v5880 = vpack.c.b16 %v5784, %v5783
        %v5881 = vpack.c.b16 %v5786, %v5785
        %v5882 = vpack.c.b16 %v5788, %v5787
        %v5883 = vpack.c.b16 %v5790, %v5789
        %v5884 = vpack.c.b16 %v5792, %v5791
        %v5885 = vpack.c.b16 %v5794, %v5793
        %v5886 = vpack.c.b16 %v5796, %v5795
        %v5887 = vpack.c.b16 %v5798, %v5797
        %v5888 = vpack.c.b16 %v5800, %v5799
        %v5889 = vpack.c.b16 %v5802, %v5801
        %v5890 = vpack.c.b16 %v5804, %v5803
        %v5891 = vpack.c.b16 %v5806, %v5805
        %v5892 = vpack.c.b16 %v5808, %v5807
        %v5893 = vpack.c.b16 %v5810, %v5809
        %v5894 = vpack.c.b16 %v5812, %v5811
        %v5895 = vpack.c.b16 %v5814, %v5813
        %v5896 = vpack.c.b16 %v5816, %v5815
        %v5897 = vpack.c.b16 %v5818, %v5817
        %v5898 = vpack.c.b16 %v5820, %v5819
        %v5899 = vpack.c.b16 %v5822, %v5821
        %v5900 = vpack.c.b16 %v5824, %v5823
        %v5901 = vpack.c.b16 %v5826, %v5825
        %v5902 = vpack.c.b16 %v5828, %v5827
        %v5903 = vpack.c.b16 %v5830, %v5829
        %v5904 = vpack.c.b16 %v5832, %v5831
        %5977 = vmatprep.subr.bf16.mxu0 0
        %5978 = vmatpush1.bf16.msra.mxu0 %v5833
        %5979 = vmatprep.subr.bf16.mxu0 0
        %5980 = vmatpush1.bf16.msra.mxu0 %v5834
        %5981 = vmatprep.subr.bf16.mxu0 0
        %5982 = vmatpush1.bf16.msra.mxu0 %v5835
        %5983 = vmatprep.subr.bf16.mxu0 0
        %5984 = vmatpush1.bf16.msra.mxu0 %v5836
        %5985 = vmatprep.subr.bf16.mxu0 0
        %5986 = vmatpush1.bf16.msra.mxu0 %v5837
        %5987 = vmatprep.subr.bf16.mxu0 0
        %5988 = vmatpush1.bf16.msra.mxu0 %v5838
        %5989 = vmatprep.subr.bf16.mxu0 0
        %5990 = vmatpush1.bf16.msra.mxu0 %v5839
        %5991 = vmatprep.subr.bf16.mxu0 0
        %5992 = vmatpush1.bf16.msra.mxu0 %v5840
        %5993 = vmatprep.subr.bf16.mxu0 0
        %5994 = vmatpush1.bf16.msra.mxu0 %v5841
        %5995 = vmatprep.subr.bf16.mxu0 0
        %5996 = vmatpush1.bf16.msra.mxu0 %v5842
        %5997 = vmatprep.subr.bf16.mxu0 0
        %5998 = vmatpush1.bf16.msra.mxu0 %v5843
        %5999 = vmatprep.subr.bf16.mxu0 0
        %6000 = vmatpush1.bf16.msra.mxu0 %v5844
        %6001 = vmatprep.subr.bf16.mxu0 0
        %6002 = vmatpush1.bf16.msra.mxu0 %v5845
        %6003 = vmatprep.subr.bf16.mxu0 0
        %6004 = vmatpush1.bf16.msra.mxu0 %v5846
        %6005 = vmatprep.subr.bf16.mxu0 0
        %6006 = vmatpush1.bf16.msra.mxu0 %v5847
        %6007 = vmatprep.subr.bf16.mxu0 0
        %6008 = vmatpush1.bf16.msra.mxu0 %v5848
        %6009 = vmatprep.mubr.bf16.mxu0 %v4164
        %6010 = vmatmul.mubr.bf16.gmra.mrb[0].mxu0 %v4073
        %v6011 = vpop.f32.mrb[0].mxu0
        %v6012 = vadd.f32 0.0, %v6011
        %v6013 = vpop.f32.mrb[0].mxu0
        %v6014 = vpop.f32.mrb[0].mxu0
        %v6015 = vadd.f32 0.0, %v6014
        %v6016 = vpop.f32.mrb[0].mxu0
        %6017 = vmatprep.mubr.bf16.mxu0 %v4176
        %6018 = vmatmul.mubr.bf16.gmra.mrb[0].mxu0 %v4074
        %v6019 = vpop.f32.mrb[0].mxu0
        %v6020 = vadd.f32 0.0, %v6019
        %v6021 = vpop.f32.mrb[0].mxu0
        %v6022 = vpop.f32.mrb[0].mxu0
        %v6023 = vadd.f32 0.0, %v6022
        %v6024 = vpop.f32.mrb[0].mxu0
        %6025 = vmatprep.mubr.bf16.mxu0 %v4188
        %6026 = vmatmul.mubr.bf16.gmra.mrb[0].mxu0 %v4075
        %v6027 = vpop.f32.mrb[0].mxu0
        %v6028 = vadd.f32 0.0, %v6027
        %v6029 = vpop.f32.mrb[0].mxu0
        %v6030 = vpop.f32.mrb[0].mxu0
        %v6031 = vadd.f32 0.0, %v6030
        %v6032 = vpop.f32.mrb[0].mxu0
        %6033 = vmatprep.mubr.bf16.mxu0 %v4200
        %6034 = vmatmul.mubr.bf16.gmra.mrb[0].mxu0 %v4076
        %v6035 = vpop.f32.mrb[0].mxu0
        %v6036 = vadd.f32 0.0, %v6035
        %v6037 = vpop.f32.mrb[0].mxu0
        %v6038 = vpop.f32.mrb[0].mxu0
        %v6039 = vadd.f32 0.0, %v6038
        %v6040 = vpop.f32.mrb[0].mxu0
        %6041 = vmatprep.mubr.bf16.mxu0 %v4212
        %6042 = vmatmul.mubr.bf16.gmra.mrb[0].mxu0 %v4077
        %v6043 = vpop.f32.mrb[0].mxu0
        %v6044 = vadd.f32 0.0, %v6043
        %v6045 = vpop.f32.mrb[0].mxu0
        %v6046 = vpop.f32.mrb[0].mxu0
        %v6047 = vadd.f32 0.0, %v6046
        %v6048 = vpop.f32.mrb[0].mxu0
        %6049 = vmatprep.mubr.bf16.mxu0 %v4224
        %6050 = vmatmul.mubr.bf16.gmra.mrb[0].mxu0 %v4078
        %v6051 = vpop.f32.mrb[0].mxu0
        %v6052 = vadd.f32 0.0, %v6051
        %v6053 = vpop.f32.mrb[0].mxu0
        %v6054 = vpop.f32.mrb[0].mxu0
        %v6055 = vadd.f32 0.0, %v6054
        %v6056 = vpop.f32.mrb[0].mxu0
        %6057 = vmatprep.mubr.bf16.mxu0 %v4236
        %6058 = vmatmul.mubr.bf16.gmra.mrb[0].mxu0 %v4079
        %v6059 = vpop.f32.mrb[0].mxu0
        %v6060 = vadd.f32 0.0, %v6059
        %v6061 = vpop.f32.mrb[0].mxu0
        %v6062 = vpop.f32.mrb[0].mxu0
        %v6063 = vadd.f32 0.0, %v6062
        %v6064 = vpop.f32.mrb[0].mxu0
        %6065 = vmatprep.mubr.bf16.mxu0 %v4248
        %6066 = vmatmul.mubr.bf16.gmra.mrb[0].mxu0 %v4080
        %v6067 = vpop.f32.mrb[0].mxu0
        %v6068 = vadd.f32 0.0, %v6067
        %v6069 = vpop.f32.mrb[0].mxu0
        %v6070 = vpop.f32.mrb[0].mxu0
        %v6071 = vadd.f32 0.0, %v6070
        %v6072 = vpop.f32.mrb[0].mxu0
        %6073 = vmatprep.mubr.bf16.mxu0 %v4260
        %6074 = vmatmul.mubr.bf16.gmra.mrb[0].mxu0 %v4081
        %v6075 = vpop.f32.mrb[0].mxu0
        %v6076 = vadd.f32 0.0, %v6075
        %v6077 = vpop.f32.mrb[0].mxu0
        %v6078 = vpop.f32.mrb[0].mxu0
        %v6079 = vadd.f32 0.0, %v6078
        %v6080 = vpop.f32.mrb[0].mxu0
        %6081 = vmatprep.mubr.bf16.mxu0 %v4272
        %6082 = vmatmul.mubr.bf16.gmra.mrb[0].mxu0 %v4082
        %v6083 = vpop.f32.mrb[0].mxu0
        %v6084 = vadd.f32 0.0, %v6083
        %v6085 = vpop.f32.mrb[0].mxu0
        %v6086 = vpop.f32.mrb[0].mxu0
        %v6087 = vadd.f32 0.0, %v6086
        %v6088 = vpop.f32.mrb[0].mxu0
        %6089 = vmatprep.mubr.bf16.mxu0 %v4284
        %6090 = vmatmul.mubr.bf16.gmra.mrb[0].mxu0 %v4083
        %v6091 = vpop.f32.mrb[0].mxu0
        %v6092 = vadd.f32 0.0, %v6091
        %v6093 = vpop.f32.mrb[0].mxu0
        %v6094 = vpop.f32.mrb[0].mxu0
        %v6095 = vadd.f32 0.0, %v6094
        %v6096 = vpop.f32.mrb[0].mxu0
        %6097 = vmatprep.mubr.bf16.mxu0 %v4296
        %6098 = vmatmul.mubr.bf16.gmra.mrb[0].mxu0 %v4084
        %v6099 = vpop.f32.mrb[0].mxu0
        %v6100 = vadd.f32 0.0, %v6099
        %v6101 = vpop.f32.mrb[0].mxu0
        %v6102 = vpop.f32.mrb[0].mxu0
        %v6103 = vadd.f32 0.0, %v6102
        %v6104 = vpop.f32.mrb[0].mxu0
        %6105 = vmatprep.mubr.bf16.mxu0 %v4308
        %6106 = vmatmul.mubr.bf16.gmra.mrb[0].mxu0 %v4085
        %v6107 = vpop.f32.mrb[0].mxu0
        %v6108 = vadd.f32 0.0, %v6107
        %v6109 = vpop.f32.mrb[0].mxu0
        %v6110 = vpop.f32.mrb[0].mxu0
        %v6111 = vadd.f32 0.0, %v6110
        %v6112 = vpop.f32.mrb[0].mxu0
        %6113 = vmatprep.mubr.bf16.mxu0 %v4320
        %6114 = vmatmul.mubr.bf16.gmra.mrb[0].mxu0 %v4086
        %v6115 = vpop.f32.mrb[0].mxu0
        %v6116 = vadd.f32 0.0, %v6115
        %v6117 = vpop.f32.mrb[0].mxu0
        %v6118 = vpop.f32.mrb[0].mxu0
        %v6119 = vadd.f32 0.0, %v6118
        %v6120 = vpop.f32.mrb[0].mxu0
        %6121 = vmatprep.mubr.bf16.mxu0 %v4332
        %6122 = vmatmul.mubr.bf16.gmra.mrb[0].mxu0 %v4087
        %v6123 = vpop.f32.mrb[0].mxu0
        %v6124 = vadd.f32 0.0, %v6123
        %v6125 = vpop.f32.mrb[0].mxu0
        %v6126 = vpop.f32.mrb[0].mxu0
        %v6127 = vadd.f32 0.0, %v6126
        %v6128 = vpop.f32.mrb[0].mxu0
        %6129 = vmatprep.mubr.bf16.mxu0 %v4344
        %6130 = vmatmul.mubr.bf16.gmra.mrb[0].mxu0 %v4088
        %v6131 = vpop.f32.mrb[0].mxu0
        %v6132 = vadd.f32 0.0, %v6131
        %v6133 = vpop.f32.mrb[0].mxu0
        %v6134 = vpop.f32.mrb[0].mxu0
        %v6135 = vadd.f32 0.0, %v6134
        %v6136 = vpop.f32.mrb[0].mxu0
        %6137 = vdwg.mxu0
        %6138 = vmatprep.subr.bf16.mxu0 0
        %6139 = vmatpush1.bf16.msra.mxu0 %v5849
        %6140 = vmatprep.subr.bf16.mxu0 0
        %6141 = vmatpush1.bf16.msra.mxu0 %v5850
        %6142 = vmatprep.subr.bf16.mxu0 0
        %6143 = vmatpush1.bf16.msra.mxu0 %v5851
        %6144 = vmatprep.subr.bf16.mxu0 0
        %6145 = vmatpush1.bf16.msra.mxu0 %v5852
        %6146 = vmatprep.subr.bf16.mxu0 0
        %6147 = vmatpush1.bf16.msra.mxu0 %v5853
        %6148 = vmatprep.subr.bf16.mxu0 0
        %6149 = vmatpush1.bf16.msra.mxu0 %v5854
        %6150 = vmatprep.subr.bf16.mxu0 0
        %6151 = vmatpush1.bf16.msra.mxu0 %v5855
        %6152 = vmatprep.subr.bf16.mxu0 0
        %6153 = vmatpush1.bf16.msra.mxu0 %v5856
        %6154 = vmatprep.subr.bf16.mxu0 0
        %6155 = vmatpush1.bf16.msra.mxu0 %v5857
        %6156 = vmatprep.subr.bf16.mxu0 0
        %6157 = vmatpush1.bf16.msra.mxu0 %v5858
        %6158 = vmatprep.subr.bf16.mxu0 0
        %6159 = vmatpush1.bf16.msra.mxu0 %v5859
        %6160 = vmatprep.subr.bf16.mxu0 0
        %6161 = vmatpush1.bf16.msra.mxu0 %v5860
        %6162 = vmatprep.subr.bf16.mxu0 0
        %6163 = vmatpush1.bf16.msra.mxu0 %v5861
        %6164 = vmatprep.subr.bf16.mxu0 0
        %6165 = vmatpush1.bf16.msra.mxu0 %v5862
        %6166 = vmatprep.subr.bf16.mxu0 0
        %6167 = vmatpush1.bf16.msra.mxu0 %v5863
        %6168 = vmatprep.subr.bf16.mxu0 0
        %6169 = vmatpush1.bf16.msra.mxu0 %v5864
        %6170 = vmatprep.mubr.bf16.mxu0 %v4537
        %6171 = vmatmul.mubr.bf16.gmra.mrb[0].mxu0 %v4411
        %v6172 = vpop.f32.mrb[0].mxu0
        %v6173 = vadd.f32 %v6012, %v6172
        %v6174 = vpop.f32.mrb[0].mxu0
        %v6175 = vpop.f32.mrb[0].mxu0
        %v6176 = vadd.f32 %v6015, %v6175
        %v6177 = vpop.f32.mrb[0].mxu0
        %6178 = vmatprep.mubr.bf16.mxu0 %v4538
        %6179 = vmatmul.mubr.bf16.gmra.mrb[0].mxu0 %v4414
        %v6180 = vpop.f32.mrb[0].mxu0
        %v6181 = vadd.f32 %v6020, %v6180
        %v6182 = vpop.f32.mrb[0].mxu0
        %v6183 = vpop.f32.mrb[0].mxu0
        %v6184 = vadd.f32 %v6023, %v6183
        %v6185 = vpop.f32.mrb[0].mxu0
        %6186 = vmatprep.mubr.bf16.mxu0 %v4539
        %6187 = vmatmul.mubr.bf16.gmra.mrb[0].mxu0 %v4417
        %v6188 = vpop.f32.mrb[0].mxu0
        %v6189 = vadd.f32 %v6028, %v6188
        %v6190 = vpop.f32.mrb[0].mxu0
        %v6191 = vpop.f32.mrb[0].mxu0
        %v6192 = vadd.f32 %v6031, %v6191
        %v6193 = vpop.f32.mrb[0].mxu0
        %6194 = vmatprep.mubr.bf16.mxu0 %v4540
        %6195 = vmatmul.mubr.bf16.gmra.mrb[0].mxu0 %v4420
        %v6196 = vpop.f32.mrb[0].mxu0
        %v6197 = vadd.f32 %v6036, %v6196
        %v6198 = vpop.f32.mrb[0].mxu0
        %v6199 = vpop.f32.mrb[0].mxu0
        %v6200 = vadd.f32 %v6039, %v6199
        %v6201 = vpop.f32.mrb[0].mxu0
        %6202 = vmatprep.mubr.bf16.mxu0 %v4541
        %6203 = vmatmul.mubr.bf16.gmra.mrb[0].mxu0 %v4423
        %v6204 = vpop.f32.mrb[0].mxu0
        %v6205 = vadd.f32 %v6044, %v6204
        %v6206 = vpop.f32.mrb[0].mxu0
        %v6207 = vpop.f32.mrb[0].mxu0
        %v6208 = vadd.f32 %v6047, %v6207
        %v6209 = vpop.f32.mrb[0].mxu0
        %6210 = vmatprep.mubr.bf16.mxu0 %v4542
        %6211 = vmatmul.mubr.bf16.gmra.mrb[0].mxu0 %v4426
        %v6212 = vpop.f32.mrb[0].mxu0
        %v6213 = vadd.f32 %v6052, %v6212
        %v6214 = vpop.f32.mrb[0].mxu0
        %v6215 = vpop.f32.mrb[0].mxu0
        %v6216 = vadd.f32 %v6055, %v6215
        %v6217 = vpop.f32.mrb[0].mxu0
        %6218 = vmatprep.mubr.bf16.mxu0 %v4543
        %6219 = vmatmul.mubr.bf16.gmra.mrb[0].mxu0 %v4429
        %v6220 = vpop.f32.mrb[0].mxu0
        %v6221 = vadd.f32 %v6060, %v6220
        %v6222 = vpop.f32.mrb[0].mxu0
        %v6223 = vpop.f32.mrb[0].mxu0
        %v6224 = vadd.f32 %v6063, %v6223
        %v6225 = vpop.f32.mrb[0].mxu0
        %6226 = vmatprep.mubr.bf16.mxu0 %v4544
        %6227 = vmatmul.mubr.bf16.gmra.mrb[0].mxu0 %v4432
        %v6228 = vpop.f32.mrb[0].mxu0
        %v6229 = vadd.f32 %v6068, %v6228
        %v6230 = vpop.f32.mrb[0].mxu0
        %v6231 = vpop.f32.mrb[0].mxu0
        %v6232 = vadd.f32 %v6071, %v6231
        %v6233 = vpop.f32.mrb[0].mxu0
        %6234 = vmatprep.mubr.bf16.mxu0 %v4545
        %6235 = vmatmul.mubr.bf16.gmra.mrb[0].mxu0 %v4435
        %v6236 = vpop.f32.mrb[0].mxu0
        %v6237 = vadd.f32 %v6076, %v6236
        %v6238 = vpop.f32.mrb[0].mxu0
        %v6239 = vpop.f32.mrb[0].mxu0
        %v6240 = vadd.f32 %v6079, %v6239
        %v6241 = vpop.f32.mrb[0].mxu0
        %6242 = vmatprep.mubr.bf16.mxu0 %v4546
        %6243 = vmatmul.mubr.bf16.gmra.mrb[0].mxu0 %v4438
        %v6244 = vpop.f32.mrb[0].mxu0
        %v6245 = vadd.f32 %v6084, %v6244
        %v6246 = vpop.f32.mrb[0].mxu0
        %v6247 = vpop.f32.mrb[0].mxu0
        %v6248 = vadd.f32 %v6087, %v6247
        %v6249 = vpop.f32.mrb[0].mxu0
        %6250 = vmatprep.mubr.bf16.mxu0 %v4547
        %6251 = vmatmul.mubr.bf16.gmra.mrb[0].mxu0 %v4441
        %v6252 = vpop.f32.mrb[0].mxu0
        %v6253 = vadd.f32 %v6092, %v6252
        %v6254 = vpop.f32.mrb[0].mxu0
        %v6255 = vpop.f32.mrb[0].mxu0
        %v6256 = vadd.f32 %v6095, %v6255
        %v6257 = vpop.f32.mrb[0].mxu0
        %6258 = vmatprep.mubr.bf16.mxu0 %v4548
        %6259 = vmatmul.mubr.bf16.gmra.mrb[0].mxu0 %v4444
        %v6260 = vpop.f32.mrb[0].mxu0
        %v6261 = vadd.f32 %v6100, %v6260
        %v6262 = vpop.f32.mrb[0].mxu0
        %v6263 = vpop.f32.mrb[0].mxu0
        %v6264 = vadd.f32 %v6103, %v6263
        %v6265 = vpop.f32.mrb[0].mxu0
        %6266 = vmatprep.mubr.bf16.mxu0 %v4549
        %6267 = vmatmul.mubr.bf16.gmra.mrb[0].mxu0 %v4447
        %v6268 = vpop.f32.mrb[0].mxu0
        %v6269 = vadd.f32 %v6108, %v6268
        %v6270 = vpop.f32.mrb[0].mxu0
        %v6271 = vpop.f32.mrb[0].mxu0
        %v6272 = vadd.f32 %v6111, %v6271
        %v6273 = vpop.f32.mrb[0].mxu0
        %6274 = vmatprep.mubr.bf16.mxu0 %v4550
        %6275 = vmatmul.mubr.bf16.gmra.mrb[0].mxu0 %v4450
        %v6276 = vpop.f32.mrb[0].mxu0
        %v6277 = vadd.f32 %v6116, %v6276
        %v6278 = vpop.f32.mrb[0].mxu0
        %v6279 = vpop.f32.mrb[0].mxu0
        %v6280 = vadd.f32 %v6119, %v6279
        %v6281 = vpop.f32.mrb[0].mxu0
        %6282 = vmatprep.mubr.bf16.mxu0 %v4551
        %6283 = vmatmul.mubr.bf16.gmra.mrb[0].mxu0 %v4453
        %v6284 = vpop.f32.mrb[0].mxu0
        %v6285 = vadd.f32 %v6124, %v6284
        %v6286 = vpop.f32.mrb[0].mxu0
        %v6287 = vpop.f32.mrb[0].mxu0
        %v6288 = vadd.f32 %v6127, %v6287
        %v6289 = vpop.f32.mrb[0].mxu0
        %6290 = vmatprep.mubr.bf16.mxu0 %v4552
        %6291 = vmatmul.mubr.bf16.gmra.mrb[0].mxu0 %v4456
        %v6292 = vpop.f32.mrb[0].mxu0
        %v6293 = vadd.f32 %v6132, %v6292
        %v6294 = vpop.f32.mrb[0].mxu0
        %v6295 = vpop.f32.mrb[0].mxu0
        %v6296 = vadd.f32 %v6135, %v6295
        %v6297 = vpop.f32.mrb[0].mxu0
        %6298 = vdwg.mxu0
        %6299 = vmatprep.subr.bf16.mxu0 0
        %6300 = vmatpush1.bf16.msra.mxu0 %v5865
        %6301 = vmatprep.subr.bf16.mxu0 0
        %6302 = vmatpush1.bf16.msra.mxu0 %v5866
        %6303 = vmatprep.subr.bf16.mxu0 0
        %6304 = vmatpush1.bf16.msra.mxu0 %v5867
        %6305 = vmatprep.subr.bf16.mxu0 0
        %6306 = vmatpush1.bf16.msra.mxu0 %v5868
        %6307 = vmatprep.subr.bf16.mxu0 0
        %6308 = vmatpush1.bf16.msra.mxu0 %v5869
        %6309 = vmatprep.subr.bf16.mxu0 0
        %6310 = vmatpush1.bf16.msra.mxu0 %v5870
        %6311 = vmatprep.subr.bf16.mxu0 0
        %6312 = vmatpush1.bf16.msra.mxu0 %v5871
        %6313 = vmatprep.subr.bf16.mxu0 0
        %6314 = vmatpush1.bf16.msra.mxu0 %v5872
        %6315 = vmatprep.subr.bf16.mxu0 0
        %6316 = vmatpush1.bf16.msra.mxu0 %v5873
        %6317 = vmatprep.subr.bf16.mxu0 0
        %6318 = vmatpush1.bf16.msra.mxu0 %v5874
        %6319 = vmatprep.subr.bf16.mxu0 0
        %6320 = vmatpush1.bf16.msra.mxu0 %v5875
        %6321 = vmatprep.subr.bf16.mxu0 0
        %6322 = vmatpush1.bf16.msra.mxu0 %v5876
        %6323 = vmatprep.subr.bf16.mxu0 0
        %6324 = vmatpush1.bf16.msra.mxu0 %v5877
        %6325 = vmatprep.subr.bf16.mxu0 0
        %6326 = vmatpush1.bf16.msra.mxu0 %v5878
        %6327 = vmatprep.subr.bf16.mxu0 0
        %6328 = vmatpush1.bf16.msra.mxu0 %v5879
        %6329 = vmatprep.subr.bf16.mxu0 0
        %6330 = vmatpush1.bf16.msra.mxu0 %v5880
        %6331 = vmatprep.mubr.bf16.mxu0 %v4875
        %6332 = vmatmul.mubr.bf16.gmra.mrb[0].mxu0 %v4628
        %v6333 = vpop.f32.mrb[0].mxu0
        %v6334 = vadd.f32 %v6173, %v6333
        %v6335 = vpop.f32.mrb[0].mxu0
        %v6336 = vpop.f32.mrb[0].mxu0
        %v6337 = vadd.f32 %v6176, %v6336
        %v6338 = vpop.f32.mrb[0].mxu0
        %6339 = vmatprep.mubr.bf16.mxu0 %v4878
        %6340 = vmatmul.mubr.bf16.gmra.mrb[0].mxu0 %v4640
        %v6341 = vpop.f32.mrb[0].mxu0
        %v6342 = vadd.f32 %v6181, %v6341
        %v6343 = vpop.f32.mrb[0].mxu0
        %v6344 = vpop.f32.mrb[0].mxu0
        %v6345 = vadd.f32 %v6184, %v6344
        %v6346 = vpop.f32.mrb[0].mxu0
        %6347 = vmatprep.mubr.bf16.mxu0 %v4881
        %6348 = vmatmul.mubr.bf16.gmra.mrb[0].mxu0 %v4652
        %v6349 = vpop.f32.mrb[0].mxu0
        %v6350 = vadd.f32 %v6189, %v6349
        %v6351 = vpop.f32.mrb[0].mxu0
        %v6352 = vpop.f32.mrb[0].mxu0
        %v6353 = vadd.f32 %v6192, %v6352
        %v6354 = vpop.f32.mrb[0].mxu0
        %6355 = vmatprep.mubr.bf16.mxu0 %v4884
        %6356 = vmatmul.mubr.bf16.gmra.mrb[0].mxu0 %v4664
        %v6357 = vpop.f32.mrb[0].mxu0
        %v6358 = vadd.f32 %v6197, %v6357
        %v6359 = vpop.f32.mrb[0].mxu0
        %v6360 = vpop.f32.mrb[0].mxu0
        %v6361 = vadd.f32 %v6200, %v6360
        %v6362 = vpop.f32.mrb[0].mxu0
        %6363 = vmatprep.mubr.bf16.mxu0 %v4887
        %6364 = vmatmul.mubr.bf16.gmra.mrb[0].mxu0 %v4676
        %v6365 = vpop.f32.mrb[0].mxu0
        %v6366 = vadd.f32 %v6205, %v6365
        %v6367 = vpop.f32.mrb[0].mxu0
        %v6368 = vpop.f32.mrb[0].mxu0
        %v6369 = vadd.f32 %v6208, %v6368
        %v6370 = vpop.f32.mrb[0].mxu0
        %6371 = vmatprep.mubr.bf16.mxu0 %v4890
        %6372 = vmatmul.mubr.bf16.gmra.mrb[0].mxu0 %v4688
        %v6373 = vpop.f32.mrb[0].mxu0
        %v6374 = vadd.f32 %v6213, %v6373
        %v6375 = vpop.f32.mrb[0].mxu0
        %v6376 = vpop.f32.mrb[0].mxu0
        %v6377 = vadd.f32 %v6216, %v6376
        %v6378 = vpop.f32.mrb[0].mxu0
        %6379 = vmatprep.mubr.bf16.mxu0 %v4893
        %6380 = vmatmul.mubr.bf16.gmra.mrb[0].mxu0 %v4700
        %v6381 = vpop.f32.mrb[0].mxu0
        %v6382 = vadd.f32 %v6221, %v6381
        %v6383 = vpop.f32.mrb[0].mxu0
        %v6384 = vpop.f32.mrb[0].mxu0
        %v6385 = vadd.f32 %v6224, %v6384
        %v6386 = vpop.f32.mrb[0].mxu0
        %6387 = vmatprep.mubr.bf16.mxu0 %v4896
        %6388 = vmatmul.mubr.bf16.gmra.mrb[0].mxu0 %v4712
        %v6389 = vpop.f32.mrb[0].mxu0
        %v6390 = vadd.f32 %v6229, %v6389
        %v6391 = vpop.f32.mrb[0].mxu0
        %v6392 = vpop.f32.mrb[0].mxu0
        %v6393 = vadd.f32 %v6232, %v6392
        %v6394 = vpop.f32.mrb[0].mxu0
        %6395 = vmatprep.mubr.bf16.mxu0 %v4899
        %6396 = vmatmul.mubr.bf16.gmra.mrb[0].mxu0 %v4724
        %v6397 = vpop.f32.mrb[0].mxu0
        %v6398 = vadd.f32 %v6237, %v6397
        %v6399 = vpop.f32.mrb[0].mxu0
        %v6400 = vpop.f32.mrb[0].mxu0
        %v6401 = vadd.f32 %v6240, %v6400
        %v6402 = vpop.f32.mrb[0].mxu0
        %6403 = vmatprep.mubr.bf16.mxu0 %v4902
        %6404 = vmatmul.mubr.bf16.gmra.mrb[0].mxu0 %v4736
        %v6405 = vpop.f32.mrb[0].mxu0
        %v6406 = vadd.f32 %v6245, %v6405
        %v6407 = vpop.f32.mrb[0].mxu0
        %v6408 = vpop.f32.mrb[0].mxu0
        %v6409 = vadd.f32 %v6248, %v6408
        %v6410 = vpop.f32.mrb[0].mxu0
        %6411 = vmatprep.mubr.bf16.mxu0 %v4905
        %6412 = vmatmul.mubr.bf16.gmra.mrb[0].mxu0 %v4748
        %v6413 = vpop.f32.mrb[0].mxu0
        %v6414 = vadd.f32 %v6253, %v6413
        %v6415 = vpop.f32.mrb[0].mxu0
        %v6416 = vpop.f32.mrb[0].mxu0
        %v6417 = vadd.f32 %v6256, %v6416
        %v6418 = vpop.f32.mrb[0].mxu0
        %6419 = vmatprep.mubr.bf16.mxu0 %v4908
        %6420 = vmatmul.mubr.bf16.gmra.mrb[0].mxu0 %v4760
        %v6421 = vpop.f32.mrb[0].mxu0
        %v6422 = vadd.f32 %v6261, %v6421
        %v6423 = vpop.f32.mrb[0].mxu0
        %v6424 = vpop.f32.mrb[0].mxu0
        %v6425 = vadd.f32 %v6264, %v6424
        %v6426 = vpop.f32.mrb[0].mxu0
        %6427 = vmatprep.mubr.bf16.mxu0 %v4911
        %6428 = vmatmul.mubr.bf16.gmra.mrb[0].mxu0 %v4772
        %v6429 = vpop.f32.mrb[0].mxu0
        %v6430 = vadd.f32 %v6269, %v6429
        %v6431 = vpop.f32.mrb[0].mxu0
        %v6432 = vpop.f32.mrb[0].mxu0
        %v6433 = vadd.f32 %v6272, %v6432
        %v6434 = vpop.f32.mrb[0].mxu0
        %6435 = vmatprep.mubr.bf16.mxu0 %v4914
        %6436 = vmatmul.mubr.bf16.gmra.mrb[0].mxu0 %v4784
        %v6437 = vpop.f32.mrb[0].mxu0
        %v6438 = vadd.f32 %v6277, %v6437
        %v6439 = vpop.f32.mrb[0].mxu0
        %v6440 = vpop.f32.mrb[0].mxu0
        %v6441 = vadd.f32 %v6280, %v6440
        %v6442 = vpop.f32.mrb[0].mxu0
        %6443 = vmatprep.mubr.bf16.mxu0 %v4917
        %6444 = vmatmul.mubr.bf16.gmra.mrb[0].mxu0 %v4796
        %v6445 = vpop.f32.mrb[0].mxu0
        %v6446 = vadd.f32 %v6285, %v6445
        %v6447 = vpop.f32.mrb[0].mxu0
        %v6448 = vpop.f32.mrb[0].mxu0
        %v6449 = vadd.f32 %v6288, %v6448
        %v6450 = vpop.f32.mrb[0].mxu0
        %6451 = vmatprep.mubr.bf16.mxu0 %v4920
        %6452 = vmatmul.mubr.bf16.gmra.mrb[0].mxu0 %v4808
        %v6453 = vpop.f32.mrb[0].mxu0
        %v6454 = vadd.f32 %v6293, %v6453
        %v6455 = vpop.f32.mrb[0].mxu0
        %v6456 = vpop.f32.mrb[0].mxu0
        %v6457 = vadd.f32 %v6296, %v6456
        %v6458 = vpop.f32.mrb[0].mxu0
        %6459 = vdwg.mxu0
        %6460 = vmatprep.subr.bf16.mxu0 0
        %6461 = vmatpush1.bf16.msra.mxu0 %v5881
        %6462 = vmatprep.subr.bf16.mxu0 0
        %6463 = vmatpush1.bf16.msra.mxu0 %v5882
        %6464 = vmatprep.subr.bf16.mxu0 0
        %6465 = vmatpush1.bf16.msra.mxu0 %v5883
        %6466 = vmatprep.subr.bf16.mxu0 0
        %6467 = vmatpush1.bf16.msra.mxu0 %v5884
        %6468 = vmatprep.subr.bf16.mxu0 0
        %6469 = vmatpush1.bf16.msra.mxu0 %v5885
        %6470 = vmatprep.subr.bf16.mxu0 0
        %6471 = vmatpush1.bf16.msra.mxu0 %v5886
        %6472 = vmatprep.subr.bf16.mxu0 0
        %6473 = vmatpush1.bf16.msra.mxu0 %v5887
        %6474 = vmatprep.subr.bf16.mxu0 0
        %6475 = vmatpush1.bf16.msra.mxu0 %v5888
        %6476 = vmatprep.subr.bf16.mxu0 0
        %6477 = vmatpush1.bf16.msra.mxu0 %v5889
        %6478 = vmatprep.subr.bf16.mxu0 0
        %6479 = vmatpush1.bf16.msra.mxu0 %v5890
        %6480 = vmatprep.subr.bf16.mxu0 0
        %6481 = vmatpush1.bf16.msra.mxu0 %v5891
        %6482 = vmatprep.subr.bf16.mxu0 0
        %6483 = vmatpush1.bf16.msra.mxu0 %v5892
        %6484 = vmatprep.subr.bf16.mxu0 0
        %6485 = vmatpush1.bf16.msra.mxu0 %v5893
        %6486 = vmatprep.subr.bf16.mxu0 0
        %6487 = vmatpush1.bf16.msra.mxu0 %v5894
        %6488 = vmatprep.subr.bf16.mxu0 0
        %6489 = vmatpush1.bf16.msra.mxu0 %v5895
        %6490 = vmatprep.subr.bf16.mxu0 0
        %6491 = vmatpush1.bf16.msra.mxu0 %v5896
        %6492 = vmatprep.mubr.bf16.mxu0 %v5092
        %6493 = vmatmul.mubr.bf16.gmra.mrb[0].mxu0 %v5001
        %v6494 = vpop.f32.mrb[0].mxu0
        %v6495 = vadd.f32 %v6334, %v6494
        %v6496 = vpop.f32.mrb[0].mxu0
        %v6497 = vpop.f32.mrb[0].mxu0
        %v6498 = vadd.f32 %v6337, %v6497
        %v6499 = vpop.f32.mrb[0].mxu0
        %6500 = vmatprep.mubr.bf16.mxu0 %v5104
        %6501 = vmatmul.mubr.bf16.gmra.mrb[0].mxu0 %v5002
        %v6502 = vpop.f32.mrb[0].mxu0
        %v6503 = vadd.f32 %v6342, %v6502
        %v6504 = vpop.f32.mrb[0].mxu0
        %v6505 = vpop.f32.mrb[0].mxu0
        %v6506 = vadd.f32 %v6345, %v6505
        %v6507 = vpop.f32.mrb[0].mxu0
        %6508 = vmatprep.mubr.bf16.mxu0 %v5116
        %6509 = vmatmul.mubr.bf16.gmra.mrb[0].mxu0 %v5003
        %v6510 = vpop.f32.mrb[0].mxu0
        %v6511 = vadd.f32 %v6350, %v6510
        %v6512 = vpop.f32.mrb[0].mxu0
        %v6513 = vpop.f32.mrb[0].mxu0
        %v6514 = vadd.f32 %v6353, %v6513
        %v6515 = vpop.f32.mrb[0].mxu0
        %6516 = vmatprep.mubr.bf16.mxu0 %v5128
        %6517 = vmatmul.mubr.bf16.gmra.mrb[0].mxu0 %v5004
        %v6518 = vpop.f32.mrb[0].mxu0
        %v6519 = vadd.f32 %v6358, %v6518
        %v6520 = vpop.f32.mrb[0].mxu0
        %v6521 = vpop.f32.mrb[0].mxu0
        %v6522 = vadd.f32 %v6361, %v6521
        %v6523 = vpop.f32.mrb[0].mxu0
        %6524 = vmatprep.mubr.bf16.mxu0 %v5140
        %6525 = vmatmul.mubr.bf16.gmra.mrb[0].mxu0 %v5005
        %v6526 = vpop.f32.mrb[0].mxu0
        %v6527 = vadd.f32 %v6366, %v6526
        %v6528 = vpop.f32.mrb[0].mxu0
        %v6529 = vpop.f32.mrb[0].mxu0
        %v6530 = vadd.f32 %v6369, %v6529
        %v6531 = vpop.f32.mrb[0].mxu0
        %6532 = vmatprep.mubr.bf16.mxu0 %v5152
        %6533 = vmatmul.mubr.bf16.gmra.mrb[0].mxu0 %v5006
        %v6534 = vpop.f32.mrb[0].mxu0
        %v6535 = vadd.f32 %v6374, %v6534
        %v6536 = vpop.f32.mrb[0].mxu0
        %v6537 = vpop.f32.mrb[0].mxu0
        %v6538 = vadd.f32 %v6377, %v6537
        %v6539 = vpop.f32.mrb[0].mxu0
        %6540 = vmatprep.mubr.bf16.mxu0 %v5164
        %6541 = vmatmul.mubr.bf16.gmra.mrb[0].mxu0 %v5007
        %v6542 = vpop.f32.mrb[0].mxu0
        %v6543 = vadd.f32 %v6382, %v6542
        %v6544 = vpop.f32.mrb[0].mxu0
        %v6545 = vpop.f32.mrb[0].mxu0
        %v6546 = vadd.f32 %v6385, %v6545
        %v6547 = vpop.f32.mrb[0].mxu0
        %6548 = vmatprep.mubr.bf16.mxu0 %v5176
        %6549 = vmatmul.mubr.bf16.gmra.mrb[0].mxu0 %v5008
        %v6550 = vpop.f32.mrb[0].mxu0
        %v6551 = vadd.f32 %v6390, %v6550
        %v6552 = vpop.f32.mrb[0].mxu0
        %v6553 = vpop.f32.mrb[0].mxu0
        %v6554 = vadd.f32 %v6393, %v6553
        %v6555 = vpop.f32.mrb[0].mxu0
        %6556 = vmatprep.mubr.bf16.mxu0 %v5188
        %6557 = vmatmul.mubr.bf16.gmra.mrb[0].mxu0 %v5009
        %v6558 = vpop.f32.mrb[0].mxu0
        %v6559 = vadd.f32 %v6398, %v6558
        %v6560 = vpop.f32.mrb[0].mxu0
        %v6561 = vpop.f32.mrb[0].mxu0
        %v6562 = vadd.f32 %v6401, %v6561
        %v6563 = vpop.f32.mrb[0].mxu0
        %6564 = vmatprep.mubr.bf16.mxu0 %v5200
        %6565 = vmatmul.mubr.bf16.gmra.mrb[0].mxu0 %v5010
        %v6566 = vpop.f32.mrb[0].mxu0
        %v6567 = vadd.f32 %v6406, %v6566
        %v6568 = vpop.f32.mrb[0].mxu0
        %v6569 = vpop.f32.mrb[0].mxu0
        %v6570 = vadd.f32 %v6409, %v6569
        %v6571 = vpop.f32.mrb[0].mxu0
        %6572 = vmatprep.mubr.bf16.mxu0 %v5212
        %6573 = vmatmul.mubr.bf16.gmra.mrb[0].mxu0 %v5011
        %v6574 = vpop.f32.mrb[0].mxu0
        %v6575 = vadd.f32 %v6414, %v6574
        %v6576 = vpop.f32.mrb[0].mxu0
        %v6577 = vpop.f32.mrb[0].mxu0
        %v6578 = vadd.f32 %v6417, %v6577
        %v6579 = vpop.f32.mrb[0].mxu0
        %6580 = vmatprep.mubr.bf16.mxu0 %v5224
        %6581 = vmatmul.mubr.bf16.gmra.mrb[0].mxu0 %v5012
        %v6582 = vpop.f32.mrb[0].mxu0
        %v6583 = vadd.f32 %v6422, %v6582
        %v6584 = vpop.f32.mrb[0].mxu0
        %v6585 = vpop.f32.mrb[0].mxu0
        %v6586 = vadd.f32 %v6425, %v6585
        %v6587 = vpop.f32.mrb[0].mxu0
        %6588 = vmatprep.mubr.bf16.mxu0 %v5236
        %6589 = vmatmul.mubr.bf16.gmra.mrb[0].mxu0 %v5013
        %v6590 = vpop.f32.mrb[0].mxu0
        %v6591 = vadd.f32 %v6430, %v6590
        %v6592 = vpop.f32.mrb[0].mxu0
        %v6593 = vpop.f32.mrb[0].mxu0
        %v6594 = vadd.f32 %v6433, %v6593
        %v6595 = vpop.f32.mrb[0].mxu0
        %6596 = vmatprep.mubr.bf16.mxu0 %v5248
        %6597 = vmatmul.mubr.bf16.gmra.mrb[0].mxu0 %v5014
        %v6598 = vpop.f32.mrb[0].mxu0
        %v6599 = vadd.f32 %v6438, %v6598
        %v6600 = vpop.f32.mrb[0].mxu0
        %v6601 = vpop.f32.mrb[0].mxu0
        %v6602 = vadd.f32 %v6441, %v6601
        %v6603 = vpop.f32.mrb[0].mxu0
        %6604 = vmatprep.mubr.bf16.mxu0 %v5260
        %6605 = vmatmul.mubr.bf16.gmra.mrb[0].mxu0 %v5015
        %v6606 = vpop.f32.mrb[0].mxu0
        %v6607 = vadd.f32 %v6446, %v6606
        %v6608 = vpop.f32.mrb[0].mxu0
        %v6609 = vpop.f32.mrb[0].mxu0
        %v6610 = vadd.f32 %v6449, %v6609
        %v6611 = vpop.f32.mrb[0].mxu0
        %6612 = vmatprep.mubr.bf16.mxu0 %v5272
        %6613 = vmatmul.mubr.bf16.gmra.mrb[0].mxu0 %v5016
        %v6614 = vpop.f32.mrb[0].mxu0
        %v6615 = vadd.f32 %v6454, %v6614
        %v6616 = vpop.f32.mrb[0].mxu0
        %v6617 = vpop.f32.mrb[0].mxu0
        %v6618 = vadd.f32 %v6457, %v6617
        %v6619 = vpop.f32.mrb[0].mxu0
        %6620 = vdwg.mxu0
        %6621 = vmatprep.subr.bf16.mxu0 0
        %6622 = vmatpush1.bf16.msra.mxu0 %v5897
        %6623 = vmatprep.subr.bf16.mxu0 0
        %6624 = vmatpush1.bf16.msra.mxu0 %v5898
        %6625 = vmatprep.subr.bf16.mxu0 0
        %6626 = vmatpush1.bf16.msra.mxu0 %v5899
        %6627 = vmatprep.subr.bf16.mxu0 0
        %6628 = vmatpush1.bf16.msra.mxu0 %v5900
        %6629 = vmatprep.subr.bf16.mxu0 0
        %6630 = vmatpush1.bf16.msra.mxu0 %v5901
        %6631 = vmatprep.subr.bf16.mxu0 0
        %6632 = vmatpush1.bf16.msra.mxu0 %v5902
        %6633 = vmatprep.subr.bf16.mxu0 0
        %6634 = vmatpush1.bf16.msra.mxu0 %v5903
        %6635 = vmatprep.subr.bf16.mxu0 0
        %6636 = vmatpush1.bf16.msra.mxu0 %v5904
        %6637 = vmatprep.subr.bf16.mxu0 0
        %6638 = vmatpush1.bf16.msra.mxu0 0
        %6639 = vmatprep.subr.bf16.mxu0 0
        %6640 = vmatpush1.bf16.msra.mxu0 0
        %6641 = vmatprep.subr.bf16.mxu0 0
        %6642 = vmatpush1.bf16.msra.mxu0 0
        %6643 = vmatprep.subr.bf16.mxu0 0
        %6644 = vmatpush1.bf16.msra.mxu0 0
        %6645 = vmatprep.subr.bf16.mxu0 0
        %6646 = vmatpush1.bf16.msra.mxu0 0
        %6647 = vmatprep.subr.bf16.mxu0 0
        %6648 = vmatpush1.bf16.msra.mxu0 0
        %6649 = vmatprep.subr.bf16.mxu0 0
        %6650 = vmatpush1.bf16.msra.mxu0 0
        %6651 = vmatprep.subr.bf16.mxu0 0
        %6652 = vmatpush1.bf16.msra.mxu0 0
        %6653 = vmatprep.mubr.bf16.mxu0 0
        %6654 = vmatmul.mubr.bf16.gmra.mrb[0].mxu0 %v5339
        %v6655 = vpop.f32.mrb[0].mxu0
        %v6656 = vadd.f32 %v6495, %v6655
        %v6657 = vpop.f32.mrb[0].mxu0
        %v6658 = vpop.f32.mrb[0].mxu0
        %v6659 = vadd.f32 %v6498, %v6658
        %v6660 = vpop.f32.mrb[0].mxu0
        %6661 = vmatprep.mubr.bf16.mxu0 0
        %6662 = vmatmul.mubr.bf16.gmra.mrb[0].mxu0 %v5342
        %v6663 = vpop.f32.mrb[0].mxu0
        %v6664 = vadd.f32 %v6503, %v6663
        %v6665 = vpop.f32.mrb[0].mxu0
        %v6666 = vpop.f32.mrb[0].mxu0
        %v6667 = vadd.f32 %v6506, %v6666
        %v6668 = vpop.f32.mrb[0].mxu0
        %6669 = vmatprep.mubr.bf16.mxu0 0
        %6670 = vmatmul.mubr.bf16.gmra.mrb[0].mxu0 %v5345
        %v6671 = vpop.f32.mrb[0].mxu0
        %v6672 = vadd.f32 %v6511, %v6671
        %v6673 = vpop.f32.mrb[0].mxu0
        %v6674 = vpop.f32.mrb[0].mxu0
        %v6675 = vadd.f32 %v6514, %v6674
        %v6676 = vpop.f32.mrb[0].mxu0
        %6677 = vmatprep.mubr.bf16.mxu0 0
        %6678 = vmatmul.mubr.bf16.gmra.mrb[0].mxu0 %v5348
        %v6679 = vpop.f32.mrb[0].mxu0
        %v6680 = vadd.f32 %v6519, %v6679
        %v6681 = vpop.f32.mrb[0].mxu0
        %v6682 = vpop.f32.mrb[0].mxu0
        %v6683 = vadd.f32 %v6522, %v6682
        %v6684 = vpop.f32.mrb[0].mxu0
        %6685 = vmatprep.mubr.bf16.mxu0 0
        %6686 = vmatmul.mubr.bf16.gmra.mrb[0].mxu0 %v5351
        %v6687 = vpop.f32.mrb[0].mxu0
        %v6688 = vadd.f32 %v6527, %v6687
        %v6689 = vpop.f32.mrb[0].mxu0
        %v6690 = vpop.f32.mrb[0].mxu0
        %v6691 = vadd.f32 %v6530, %v6690
        %v6692 = vpop.f32.mrb[0].mxu0
        %6693 = vmatprep.mubr.bf16.mxu0 0
        %6694 = vmatmul.mubr.bf16.gmra.mrb[0].mxu0 %v5354
        %v6695 = vpop.f32.mrb[0].mxu0
        %v6696 = vadd.f32 %v6535, %v6695
        %v6697 = vpop.f32.mrb[0].mxu0
        %v6698 = vpop.f32.mrb[0].mxu0
        %v6699 = vadd.f32 %v6538, %v6698
        %v6700 = vpop.f32.mrb[0].mxu0
        %6701 = vmatprep.mubr.bf16.mxu0 0
        %6702 = vmatmul.mubr.bf16.gmra.mrb[0].mxu0 %v5357
        %v6703 = vpop.f32.mrb[0].mxu0
        %v6704 = vadd.f32 %v6543, %v6703
        %v6705 = vpop.f32.mrb[0].mxu0
        %v6706 = vpop.f32.mrb[0].mxu0
        %v6707 = vadd.f32 %v6546, %v6706
        %v6708 = vpop.f32.mrb[0].mxu0
        %6709 = vmatprep.mubr.bf16.mxu0 0
        %6710 = vmatmul.mubr.bf16.gmra.mrb[0].mxu0 %v5360
        %v6711 = vpop.f32.mrb[0].mxu0
        %v6712 = vadd.f32 %v6551, %v6711
        %v6713 = vpop.f32.mrb[0].mxu0
        %v6714 = vpop.f32.mrb[0].mxu0
        %v6715 = vadd.f32 %v6554, %v6714
        %v6716 = vpop.f32.mrb[0].mxu0
        %6717 = vmatprep.mubr.bf16.mxu0 0
        %6718 = vmatmul.mubr.bf16.gmra.mrb[0].mxu0 %v5363
        %v6719 = vpop.f32.mrb[0].mxu0
        %v6720 = vadd.f32 %v6559, %v6719
        %v6721 = vpop.f32.mrb[0].mxu0
        %v6722 = vpop.f32.mrb[0].mxu0
        %v6723 = vadd.f32 %v6562, %v6722
        %v6724 = vpop.f32.mrb[0].mxu0
        %6725 = vmatprep.mubr.bf16.mxu0 0
        %6726 = vmatmul.mubr.bf16.gmra.mrb[0].mxu0 %v5366
        %v6727 = vpop.f32.mrb[0].mxu0
        %v6728 = vadd.f32 %v6567, %v6727
        %v6729 = vpop.f32.mrb[0].mxu0
        %v6730 = vpop.f32.mrb[0].mxu0
        %v6731 = vadd.f32 %v6570, %v6730
        %v6732 = vpop.f32.mrb[0].mxu0
        %6733 = vmatprep.mubr.bf16.mxu0 0
        %6734 = vmatmul.mubr.bf16.gmra.mrb[0].mxu0 %v5369
        %v6735 = vpop.f32.mrb[0].mxu0
        %v6736 = vadd.f32 %v6575, %v6735
        %v6737 = vpop.f32.mrb[0].mxu0
        %v6738 = vpop.f32.mrb[0].mxu0
        %v6739 = vadd.f32 %v6578, %v6738
        %v6740 = vpop.f32.mrb[0].mxu0
        %6741 = vmatprep.mubr.bf16.mxu0 0
        %6742 = vmatmul.mubr.bf16.gmra.mrb[0].mxu0 %v5372
        %v6743 = vpop.f32.mrb[0].mxu0
        %v6744 = vadd.f32 %v6583, %v6743
        %v6745 = vpop.f32.mrb[0].mxu0
        %v6746 = vpop.f32.mrb[0].mxu0
        %v6747 = vadd.f32 %v6586, %v6746
        %v6748 = vpop.f32.mrb[0].mxu0
        %6749 = vmatprep.mubr.bf16.mxu0 0
        %6750 = vmatmul.mubr.bf16.gmra.mrb[0].mxu0 %v5375
        %v6751 = vpop.f32.mrb[0].mxu0
        %v6752 = vadd.f32 %v6591, %v6751
        %v6753 = vpop.f32.mrb[0].mxu0
        %v6754 = vpop.f32.mrb[0].mxu0
        %v6755 = vadd.f32 %v6594, %v6754
        %v6756 = vpop.f32.mrb[0].mxu0
        %6757 = vmatprep.mubr.bf16.mxu0 0
        %6758 = vmatmul.mubr.bf16.gmra.mrb[0].mxu0 %v5378
        %v6759 = vpop.f32.mrb[0].mxu0
        %v6760 = vadd.f32 %v6599, %v6759
        %v6761 = vpop.f32.mrb[0].mxu0
        %v6762 = vpop.f32.mrb[0].mxu0
        %v6763 = vadd.f32 %v6602, %v6762
        %v6764 = vpop.f32.mrb[0].mxu0
        %6765 = vmatprep.mubr.bf16.mxu0 0
        %6766 = vmatmul.mubr.bf16.gmra.mrb[0].mxu0 %v5381
        %v6767 = vpop.f32.mrb[0].mxu0
        %v6768 = vadd.f32 %v6607, %v6767
        %v6769 = vpop.f32.mrb[0].mxu0
        %v6770 = vpop.f32.mrb[0].mxu0
        %v6771 = vadd.f32 %v6610, %v6770
        %v6772 = vpop.f32.mrb[0].mxu0
        %6773 = vmatprep.mubr.bf16.mxu0 0
        %6774 = vmatmul.mubr.bf16.gmra.mrb[0].mxu0 %v5384
        %v6775 = vpop.f32.mrb[0].mxu0
        %v6776 = vadd.f32 %v6615, %v6775
        %v6777 = vpop.f32.mrb[0].mxu0
        %v6778 = vpop.f32.mrb[0].mxu0
        %v6779 = vadd.f32 %v6618, %v6778
        %v6780 = vpop.f32.mrb[0].mxu0
        %6781 = vdwg.mxu0
        %v6782 = vld [vmem:[%s4] sm:$0x1]
        %v6783 = vlaneseq
        %v6784 = vshrl.u32 %v6783, 7
        %v6785 = vsub.s32 0, %v6784
        %v6786 = vrot.slane %v6782, %v6785
        %v6787 = vmul.f32 %v6656, %v6786
        %v6788 = vmul.f32 %v6659, %v6786
        %v6789 = vmul.f32 %v6664, %v6786
        %v6790 = vmul.f32 %v6667, %v6786
        %v6791 = vmul.f32 %v6672, %v6786
        %v6792 = vmul.f32 %v6675, %v6786
        %v6793 = vmul.f32 %v6680, %v6786
        %v6794 = vmul.f32 %v6683, %v6786
        %v6795 = vmul.f32 %v6688, %v6786
        %v6796 = vmul.f32 %v6691, %v6786
        %v6797 = vmul.f32 %v6696, %v6786
        %v6798 = vmul.f32 %v6699, %v6786
        %v6799 = vmul.f32 %v6704, %v6786
        %v6800 = vmul.f32 %v6707, %v6786
        %v6801 = vmul.f32 %v6712, %v6786
        %v6802 = vmul.f32 %v6715, %v6786
        %v6803 = vmul.f32 %v6720, %v6786
        %v6804 = vmul.f32 %v6723, %v6786
        %v6805 = vmul.f32 %v6728, %v6786
        %v6806 = vmul.f32 %v6731, %v6786
        %v6807 = vmul.f32 %v6736, %v6786
        %v6808 = vmul.f32 %v6739, %v6786
        %v6809 = vmul.f32 %v6744, %v6786
        %v6810 = vmul.f32 %v6747, %v6786
        %v6811 = vmul.f32 %v6752, %v6786
        %v6812 = vmul.f32 %v6755, %v6786
        %v6813 = vmul.f32 %v6760, %v6786
        %v6814 = vmul.f32 %v6763, %v6786
        %v6815 = vmul.f32 %v6768, %v6786
        %v6816 = vmul.f32 %v6771, %v6786
        %v6817 = vmul.f32 %v6776, %v6786
        %v6818 = vmul.f32 %v6779, %v6786
        %v6819 = vld [vmem:[%s4 + $0x1] sm:$0x1]
        %v6820 = vlaneseq
        %v6821 = vshrl.u32 %v6820, 7
        %v6822 = vsub.s32 0, %v6821
        %v6823 = vrot.slane %v6819, %v6822
        %v6824 = vadd.f32 %v6787, %v6823
        %v6825 = vadd.f32 %v6788, %v6823
        %v6826 = vadd.f32 %v6789, %v6823
        %v6827 = vadd.f32 %v6790, %v6823
        %v6828 = vadd.f32 %v6791, %v6823
        %v6829 = vadd.f32 %v6792, %v6823
        %v6830 = vadd.f32 %v6793, %v6823
        %v6831 = vadd.f32 %v6794, %v6823
        %v6832 = vadd.f32 %v6795, %v6823
        %v6833 = vadd.f32 %v6796, %v6823
        %v6834 = vadd.f32 %v6797, %v6823
        %v6835 = vadd.f32 %v6798, %v6823
        %v6836 = vadd.f32 %v6799, %v6823
        %v6837 = vadd.f32 %v6800, %v6823
        %v6838 = vadd.f32 %v6801, %v6823
        %v6839 = vadd.f32 %v6802, %v6823
        %v6840 = vadd.f32 %v6803, %v6823
        %v6841 = vadd.f32 %v6804, %v6823
        %v6842 = vadd.f32 %v6805, %v6823
        %v6843 = vadd.f32 %v6806, %v6823
        %v6844 = vadd.f32 %v6807, %v6823
        %v6845 = vadd.f32 %v6808, %v6823
        %v6846 = vadd.f32 %v6809, %v6823
        %v6847 = vadd.f32 %v6810, %v6823
        %v6848 = vadd.f32 %v6811, %v6823
        %v6849 = vadd.f32 %v6812, %v6823
        %v6850 = vadd.f32 %v6813, %v6823
        %v6851 = vadd.f32 %v6814, %v6823
        %v6852 = vadd.f32 %v6815, %v6823
        %v6853 = vadd.f32 %v6816, %v6823
        %v6854 = vadd.f32 %v6817, %v6823
        %v6855 = vadd.f32 %v6818, %v6823
        %v6856 = vld [vmem:[%s357] sm:$0xf]
        %v6857 = vld [vmem:[%s357 + $0x4] sm:$0xf]
        %v6858 = vld [vmem:[%s357 + $0x8] sm:$0x1]
        %v6859 = vld [vmem:[%s357 + $0xc] sm:$0xf]
        %v6860 = vld [vmem:[%s357 + $0x10] sm:$0xf]
        %v6861 = vld [vmem:[%s357 + $0x14] sm:$0x1]
        %v6862 = vld [vmem:[%s357 + $0x18] sm:$0xf]
        %v6863 = vld [vmem:[%s357 + $0x1c] sm:$0xf]
        %v6864 = vld [vmem:[%s357 + $0x20] sm:$0x1]
        %v6865 = vld [vmem:[%s357 + $0x24] sm:$0xf]
        %v6866 = vld [vmem:[%s357 + $0x28] sm:$0xf]
        %v6867 = vld [vmem:[%s357 + $0x2c] sm:$0x1]
        %v6868 = vld [vmem:[%s357 + $0x30] sm:$0xf]
        %v6869 = vld [vmem:[%s357 + $0x34] sm:$0xf]
        %v6870 = vld [vmem:[%s357 + $0x38] sm:$0x1]
        %v6871 = vld [vmem:[%s357 + $0x3c] sm:$0xf]
        %v6872 = vld [vmem:[%s357 + $0x40] sm:$0xf]
        %v6873 = vld [vmem:[%s357 + $0x44] sm:$0x1]
        %v6874 = vld [vmem:[%s357 + $0x48] sm:$0xf]
        %v6875 = vld [vmem:[%s357 + $0x4c] sm:$0xf]
        %v6876 = vld [vmem:[%s357 + $0x50] sm:$0x1]
        %v6877 = vld [vmem:[%s357 + $0x54] sm:$0xf]
        %v6878 = vld [vmem:[%s357 + $0x58] sm:$0xf]
        %v6879 = vld [vmem:[%s357 + $0x5c] sm:$0x1]
        %v6880 = vld [vmem:[%s357 + $0x60] sm:$0xf]
        %v6881 = vld [vmem:[%s357 + $0x64] sm:$0xf]
        %v6882 = vld [vmem:[%s357 + $0x68] sm:$0x1]
        %v6883 = vld [vmem:[%s357 + $0x6c] sm:$0xf]
        %v6884 = vld [vmem:[%s357 + $0x70] sm:$0xf]
        %v6885 = vld [vmem:[%s357 + $0x74] sm:$0x1]
        %v6886 = vld [vmem:[%s357 + $0x78] sm:$0xf]
        %v6887 = vld [vmem:[%s357 + $0x7c] sm:$0xf]
        %v6888 = vld [vmem:[%s357 + $0x80] sm:$0x1]
        %v6889 = vld [vmem:[%s357 + $0x84] sm:$0xf]
        %v6890 = vld [vmem:[%s357 + $0x88] sm:$0xf]
        %v6891 = vld [vmem:[%s357 + $0x8c] sm:$0x1]
        %v6892 = vld [vmem:[%s357 + $0x90] sm:$0xf]
        %v6893 = vld [vmem:[%s357 + $0x94] sm:$0xf]
        %v6894 = vld [vmem:[%s357 + $0x98] sm:$0x1]
        %v6895 = vld [vmem:[%s357 + $0x9c] sm:$0xf]
        %v6896 = vld [vmem:[%s357 + $0xa0] sm:$0xf]
        %v6897 = vld [vmem:[%s357 + $0xa4] sm:$0x1]
        %v6898 = vld [vmem:[%s357 + $0xa8] sm:$0xf]
        %v6899 = vld [vmem:[%s357 + $0xac] sm:$0xf]
        %v6900 = vld [vmem:[%s357 + $0xb0] sm:$0x1]
        %v6901 = vld [vmem:[%s357 + $0xb4] sm:$0xf]
        %v6902 = vld [vmem:[%s357 + $0xb8] sm:$0xf]
        %v6903 = vld [vmem:[%s357 + $0xbc] sm:$0x1]
        %vm6904 = vsmask.f32 3328
        %vm6905 = vsmask.f32 7440
        %vm6906 = vmor %vm6904, %vm6905
        %v6908 = vshrl.u32 %v6856, 16
        %v6910 = vrot.slane %v6908, 4
        %v6911 = vshll.u32 %v6856, 16
        %v6913 = vrot.slane %v6911, 5
        %v6914 = vor.u32 %v6910, %v6913
        %v6915 = vrot.slane %v6914, 4
        %v6917 = vshll.u32 %v6857, 16
        %v6919 = vrot.slane %v6917, 5
        %v6920 = vsel %vm6906, %v6915, %v6919
        %v6921 = vshrl.u32 %v6857, 16
        %v6923 = vrot.slane %v6921, 4
        %v6924 = vor.u32 %v6923, %v6919
        %v6925 = vrot.slane %v6924, 4
        %v6927 = vshll.u32 %v6858, 16
        %v6929 = vrot.slane %v6927, 5
        %v6930 = vsel %vm6906, %v6925, %v6929
        %v6932 = vshrl.u32 %v6859, 16
        %v6934 = vrot.slane %v6932, 4
        %v6935 = vshll.u32 %v6859, 16
        %v6937 = vrot.slane %v6935, 5
        %v6938 = vor.u32 %v6934, %v6937
        %v6939 = vrot.slane %v6938, 4
        %v6941 = vshll.u32 %v6860, 16
        %v6943 = vrot.slane %v6941, 5
        %v6944 = vsel %vm6906, %v6939, %v6943
        %v6945 = vshrl.u32 %v6860, 16
        %v6947 = vrot.slane %v6945, 4
        %v6948 = vor.u32 %v6947, %v6943
        %v6949 = vrot.slane %v6948, 4
        %v6951 = vshll.u32 %v6861, 16
        %v6953 = vrot.slane %v6951, 5
        %v6954 = vsel %vm6906, %v6949, %v6953
        %v6956 = vshrl.u32 %v6862, 16
        %v6958 = vrot.slane %v6956, 4
        %v6959 = vshll.u32 %v6862, 16
        %v6961 = vrot.slane %v6959, 5
        %v6962 = vor.u32 %v6958, %v6961
        %v6963 = vrot.slane %v6962, 4
        %v6965 = vshll.u32 %v6863, 16
        %v6967 = vrot.slane %v6965, 5
        %v6968 = vsel %vm6906, %v6963, %v6967
        %v6969 = vshrl.u32 %v6863, 16
        %v6971 = vrot.slane %v6969, 4
        %v6972 = vor.u32 %v6971, %v6967
        %v6973 = vrot.slane %v6972, 4
        %v6975 = vshll.u32 %v6864, 16
        %v6977 = vrot.slane %v6975, 5
        %v6978 = vsel %vm6906, %v6973, %v6977
        %v6980 = vshrl.u32 %v6865, 16
        %v6982 = vrot.slane %v6980, 4
        %v6983 = vshll.u32 %v6865, 16
        %v6985 = vrot.slane %v6983, 5
        %v6986 = vor.u32 %v6982, %v6985
        %v6987 = vrot.slane %v6986, 4
        %v6989 = vshll.u32 %v6866, 16
        %v6991 = vrot.slane %v6989, 5
        %v6992 = vsel %vm6906, %v6987, %v6991
        %v6993 = vshrl.u32 %v6866, 16
        %v6995 = vrot.slane %v6993, 4
        %v6996 = vor.u32 %v6995, %v6991
        %v6997 = vrot.slane %v6996, 4
        %v6999 = vshll.u32 %v6867, 16
        %v7001 = vrot.slane %v6999, 5
        %v7002 = vsel %vm6906, %v6997, %v7001
        %v7004 = vshrl.u32 %v6868, 16
        %v7006 = vrot.slane %v7004, 4
        %v7007 = vshll.u32 %v6868, 16
        %v7009 = vrot.slane %v7007, 5
        %v7010 = vor.u32 %v7006, %v7009
        %v7011 = vrot.slane %v7010, 4
        %v7013 = vshll.u32 %v6869, 16
        %v7015 = vrot.slane %v7013, 5
        %v7016 = vsel %vm6906, %v7011, %v7015
        %v7017 = vshrl.u32 %v6869, 16
        %v7019 = vrot.slane %v7017, 4
        %v7020 = vor.u32 %v7019, %v7015
        %v7021 = vrot.slane %v7020, 4
        %v7023 = vshll.u32 %v6870, 16
        %v7025 = vrot.slane %v7023, 5
        %v7026 = vsel %vm6906, %v7021, %v7025
        %v7028 = vshrl.u32 %v6871, 16
        %v7030 = vrot.slane %v7028, 4
        %v7031 = vshll.u32 %v6871, 16
        %v7033 = vrot.slane %v7031, 5
        %v7034 = vor.u32 %v7030, %v7033
        %v7035 = vrot.slane %v7034, 4
        %v7037 = vshll.u32 %v6872, 16
        %v7039 = vrot.slane %v7037, 5
        %v7040 = vsel %vm6906, %v7035, %v7039
        %v7041 = vshrl.u32 %v6872, 16
        %v7043 = vrot.slane %v7041, 4
        %v7044 = vor.u32 %v7043, %v7039
        %v7045 = vrot.slane %v7044, 4
        %v7047 = vshll.u32 %v6873, 16
        %v7049 = vrot.slane %v7047, 5
        %v7050 = vsel %vm6906, %v7045, %v7049
        %v7052 = vshrl.u32 %v6874, 16
        %v7054 = vrot.slane %v7052, 4
        %v7055 = vshll.u32 %v6874, 16
        %v7057 = vrot.slane %v7055, 5
        %v7058 = vor.u32 %v7054, %v7057
        %v7059 = vrot.slane %v7058, 4
        %v7061 = vshll.u32 %v6875, 16
        %v7063 = vrot.slane %v7061, 5
        %v7064 = vsel %vm6906, %v7059, %v7063
        %v7065 = vshrl.u32 %v6875, 16
        %v7067 = vrot.slane %v7065, 4
        %v7068 = vor.u32 %v7067, %v7063
        %v7069 = vrot.slane %v7068, 4
        %v7071 = vshll.u32 %v6876, 16
        %v7073 = vrot.slane %v7071, 5
        %v7074 = vsel %vm6906, %v7069, %v7073
        %v7076 = vshrl.u32 %v6877, 16
        %v7078 = vrot.slane %v7076, 4
        %v7079 = vshll.u32 %v6877, 16
        %v7081 = vrot.slane %v7079, 5
        %v7082 = vor.u32 %v7078, %v7081
        %v7083 = vrot.slane %v7082, 4
        %v7085 = vshll.u32 %v6878, 16
        %v7087 = vrot.slane %v7085, 5
        %v7088 = vsel %vm6906, %v7083, %v7087
        %v7089 = vshrl.u32 %v6878, 16
        %v7091 = vrot.slane %v7089, 4
        %v7092 = vor.u32 %v7091, %v7087
        %v7093 = vrot.slane %v7092, 4
        %v7095 = vshll.u32 %v6879, 16
        %v7097 = vrot.slane %v7095, 5
        %v7098 = vsel %vm6906, %v7093, %v7097
        %v7100 = vshrl.u32 %v6880, 16
        %v7102 = vrot.slane %v7100, 4
        %v7103 = vshll.u32 %v6880, 16
        %v7105 = vrot.slane %v7103, 5
        %v7106 = vor.u32 %v7102, %v7105
        %v7107 = vrot.slane %v7106, 4
        %v7109 = vshll.u32 %v6881, 16
        %v7111 = vrot.slane %v7109, 5
        %v7112 = vsel %vm6906, %v7107, %v7111
        %v7113 = vshrl.u32 %v6881, 16
        %v7115 = vrot.slane %v7113, 4
        %v7116 = vor.u32 %v7115, %v7111
        %v7117 = vrot.slane %v7116, 4
        %v7119 = vshll.u32 %v6882, 16
        %v7121 = vrot.slane %v7119, 5
        %v7122 = vsel %vm6906, %v7117, %v7121
        %v7124 = vshrl.u32 %v6883, 16
        %v7126 = vrot.slane %v7124, 4
        %v7127 = vshll.u32 %v6883, 16
        %v7129 = vrot.slane %v7127, 5
        %v7130 = vor.u32 %v7126, %v7129
        %v7131 = vrot.slane %v7130, 4
        %v7133 = vshll.u32 %v6884, 16
        %v7135 = vrot.slane %v7133, 5
        %v7136 = vsel %vm6906, %v7131, %v7135
        %v7137 = vshrl.u32 %v6884, 16
        %v7139 = vrot.slane %v7137, 4
        %v7140 = vor.u32 %v7139, %v7135
        %v7141 = vrot.slane %v7140, 4
        %v7143 = vshll.u32 %v6885, 16
        %v7145 = vrot.slane %v7143, 5
        %v7146 = vsel %vm6906, %v7141, %v7145
        %v7148 = vshrl.u32 %v6886, 16
        %v7150 = vrot.slane %v7148, 4
        %v7151 = vshll.u32 %v6886, 16
        %v7153 = vrot.slane %v7151, 5
        %v7154 = vor.u32 %v7150, %v7153
        %v7155 = vrot.slane %v7154, 4
        %v7157 = vshll.u32 %v6887, 16
        %v7159 = vrot.slane %v7157, 5
        %v7160 = vsel %vm6906, %v7155, %v7159
        %v7161 = vshrl.u32 %v6887, 16
        %v7163 = vrot.slane %v7161, 4
        %v7164 = vor.u32 %v7163, %v7159
        %v7165 = vrot.slane %v7164, 4
        %v7167 = vshll.u32 %v6888, 16
        %v7169 = vrot.slane %v7167, 5
        %v7170 = vsel %vm6906, %v7165, %v7169
        %v7172 = vshrl.u32 %v6889, 16
        %v7174 = vrot.slane %v7172, 4
        %v7175 = vshll.u32 %v6889, 16
        %v7177 = vrot.slane %v7175, 5
        %v7178 = vor.u32 %v7174, %v7177
        %v7179 = vrot.slane %v7178, 4
        %v7181 = vshll.u32 %v6890, 16
        %v7183 = vrot.slane %v7181, 5
        %v7184 = vsel %vm6906, %v7179, %v7183
        %v7185 = vshrl.u32 %v6890, 16
        %v7187 = vrot.slane %v7185, 4
        %v7188 = vor.u32 %v7187, %v7183
        %v7189 = vrot.slane %v7188, 4
        %v7191 = vshll.u32 %v6891, 16
        %v7193 = vrot.slane %v7191, 5
        %v7194 = vsel %vm6906, %v7189, %v7193
        %v7196 = vshrl.u32 %v6892, 16
        %v7198 = vrot.slane %v7196, 4
        %v7199 = vshll.u32 %v6892, 16
        %v7201 = vrot.slane %v7199, 5
        %v7202 = vor.u32 %v7198, %v7201
        %v7203 = vrot.slane %v7202, 4
        %v7205 = vshll.u32 %v6893, 16
        %v7207 = vrot.slane %v7205, 5
        %v7208 = vsel %vm6906, %v7203, %v7207
        %v7209 = vshrl.u32 %v6893, 16
        %v7211 = vrot.slane %v7209, 4
        %v7212 = vor.u32 %v7211, %v7207
        %v7213 = vrot.slane %v7212, 4
        %v7215 = vshll.u32 %v6894, 16
        %v7217 = vrot.slane %v7215, 5
        %v7218 = vsel %vm6906, %v7213, %v7217
        %v7220 = vshrl.u32 %v6895, 16
        %v7222 = vrot.slane %v7220, 4
        %v7223 = vshll.u32 %v6895, 16
        %v7225 = vrot.slane %v7223, 5
        %v7226 = vor.u32 %v7222, %v7225
        %v7227 = vrot.slane %v7226, 4
        %v7229 = vshll.u32 %v6896, 16
        %v7231 = vrot.slane %v7229, 5
        %v7232 = vsel %vm6906, %v7227, %v7231
        %v7233 = vshrl.u32 %v6896, 16
        %v7235 = vrot.slane %v7233, 4
        %v7236 = vor.u32 %v7235, %v7231
        %v7237 = vrot.slane %v7236, 4
        %v7239 = vshll.u32 %v6897, 16
        %v7241 = vrot.slane %v7239, 5
        %v7242 = vsel %vm6906, %v7237, %v7241
        %v7244 = vshrl.u32 %v6898, 16
        %v7246 = vrot.slane %v7244, 4
        %v7247 = vshll.u32 %v6898, 16
        %v7249 = vrot.slane %v7247, 5
        %v7250 = vor.u32 %v7246, %v7249
        %v7251 = vrot.slane %v7250, 4
        %v7253 = vshll.u32 %v6899, 16
        %v7255 = vrot.slane %v7253, 5
        %v7256 = vsel %vm6906, %v7251, %v7255
        %v7257 = vshrl.u32 %v6899, 16
        %v7259 = vrot.slane %v7257, 4
        %v7260 = vor.u32 %v7259, %v7255
        %v7261 = vrot.slane %v7260, 4
        %v7263 = vshll.u32 %v6900, 16
        %v7265 = vrot.slane %v7263, 5
        %v7266 = vsel %vm6906, %v7261, %v7265
        %v7268 = vshrl.u32 %v6901, 16
        %v7270 = vrot.slane %v7268, 4
        %v7271 = vshll.u32 %v6901, 16
        %v7273 = vrot.slane %v7271, 5
        %v7274 = vor.u32 %v7270, %v7273
        %v7275 = vrot.slane %v7274, 4
        %v7277 = vshll.u32 %v6902, 16
        %v7279 = vrot.slane %v7277, 5
        %v7280 = vsel %vm6906, %v7275, %v7279
        %v7281 = vshrl.u32 %v6902, 16
        %v7283 = vrot.slane %v7281, 4
        %v7284 = vor.u32 %v7283, %v7279
        %v7285 = vrot.slane %v7284, 4
        %v7287 = vshll.u32 %v6903, 16
        %v7289 = vrot.slane %v7287, 5
        %v7290 = vsel %vm6906, %v7285, %v7289
        %v7291 = vld [vmem:[%s5] sm:$0xf]
        %v7292 = vld [vmem:[%s5 + $0x4] sm:$0xf]
        %v7293 = vld [vmem:[%s5 + $0x8] sm:$0xf]
        %v7294 = vld [vmem:[%s5 + $0xc] sm:$0xf]
        %v7295 = vld [vmem:[%s5 + $0x10] sm:$0xf]
        %v7296 = vld [vmem:[%s5 + $0x14] sm:$0xf]
        %v7297 = vld [vmem:[%s5 + $0x18] sm:$0xf]
        %v7298 = vld [vmem:[%s5 + $0x1c] sm:$0xf]
        %v7299 = vld [vmem:[%s5 + $0x20] sm:$0xf]
        %v7300 = vld [vmem:[%s5 + $0x24] sm:$0xf]
        %v7301 = vld [vmem:[%s5 + $0x28] sm:$0xf]
        %v7302 = vld [vmem:[%s5 + $0x2c] sm:$0xf]
        %v7303 = vld [vmem:[%s5 + $0x30] sm:$0xf]
        %v7304 = vld [vmem:[%s5 + $0x34] sm:$0xf]
        %v7305 = vld [vmem:[%s5 + $0x38] sm:$0xf]
        %v7306 = vld [vmem:[%s5 + $0x3c] sm:$0xf]
        %v7307 = vunpack.c.l.b16 %v6920
        %v7308 = vunpack.c.l.b16 %v6930
        %v7309 = vunpack.c.l.b16 %v6944
        %v7310 = vunpack.c.l.b16 %v6954
        %v7311 = vunpack.c.l.b16 %v6968
        %v7312 = vunpack.c.l.b16 %v6978
        %v7313 = vunpack.c.l.b16 %v6992
        %v7314 = vunpack.c.l.b16 %v7002
        %v7315 = vunpack.c.l.b16 %v7016
        %v7316 = vunpack.c.l.b16 %v7026
        %v7317 = vunpack.c.l.b16 %v7040
        %v7318 = vunpack.c.l.b16 %v7050
        %v7319 = vunpack.c.l.b16 %v7064
        %v7320 = vunpack.c.l.b16 %v7074
        %v7321 = vunpack.c.l.b16 %v7088
        %v7322 = vunpack.c.l.b16 %v7098
        %v7323 = vunpack.c.l.b16 %v7112
        %v7324 = vunpack.c.l.b16 %v7122
        %v7325 = vunpack.c.l.b16 %v7136
        %v7326 = vunpack.c.l.b16 %v7146
        %v7327 = vunpack.c.l.b16 %v7160
        %v7328 = vunpack.c.l.b16 %v7170
        %v7329 = vunpack.c.l.b16 %v7184
        %v7330 = vunpack.c.l.b16 %v7194
        %v7331 = vunpack.c.l.b16 %v7208
        %v7332 = vunpack.c.l.b16 %v7218
        %v7333 = vunpack.c.l.b16 %v7232
        %v7334 = vunpack.c.l.b16 %v7242
        %v7335 = vunpack.c.l.b16 %v7256
        %v7336 = vunpack.c.l.b16 %v7266
        %v7337 = vunpack.c.l.b16 %v7280
        %v7338 = vunpack.c.l.b16 %v7290
        %v7339 = vpack.c.b16 %v7308, %v7307
        %v7340 = vpack.c.b16 %v7310, %v7309
        %v7341 = vpack.c.b16 %v7312, %v7311
        %v7342 = vpack.c.b16 %v7314, %v7313
        %v7343 = vpack.c.b16 %v7316, %v7315
        %v7344 = vpack.c.b16 %v7318, %v7317
        %v7345 = vpack.c.b16 %v7320, %v7319
        %v7346 = vpack.c.b16 %v7322, %v7321
        %v7347 = vpack.c.b16 %v7324, %v7323
        %v7348 = vpack.c.b16 %v7326, %v7325
        %v7349 = vpack.c.b16 %v7328, %v7327
        %v7350 = vpack.c.b16 %v7330, %v7329
        %v7351 = vpack.c.b16 %v7332, %v7331
        %v7352 = vpack.c.b16 %v7334, %v7333
        %v7353 = vpack.c.b16 %v7336, %v7335
        %v7354 = vpack.c.b16 %v7338, %v7337
        %v7387 = vunpack.c.l.b16 %v7291
        %v7388 = vunpack.c.l.b16 %v7292
        %v7389 = vunpack.c.l.b16 %v7293
        %v7390 = vunpack.c.l.b16 %v7294
        %v7391 = vunpack.c.l.b16 %v7295
        %v7392 = vunpack.c.l.b16 %v7296
        %v7393 = vunpack.c.l.b16 %v7297
        %v7394 = vunpack.c.l.b16 %v7298
        %v7395 = vunpack.c.l.b16 %v7299
        %v7396 = vunpack.c.l.b16 %v7300
        %v7397 = vunpack.c.l.b16 %v7301
        %v7398 = vunpack.c.l.b16 %v7302
        %v7399 = vunpack.c.l.b16 %v7303
        %v7400 = vunpack.c.l.b16 %v7304
        %v7401 = vunpack.c.l.b16 %v7305
        %v7402 = vunpack.c.l.b16 %v7306
        %v7403 = vpack.c.b16 %v7388, %v7387
        %v7404 = vpack.c.b16 %v7390, %v7389
        %v7405 = vpack.c.b16 %v7392, %v7391
        %v7406 = vpack.c.b16 %v7394, %v7393
        %v7407 = vpack.c.b16 %v7396, %v7395
        %v7408 = vpack.c.b16 %v7398, %v7397
        %v7409 = vpack.c.b16 %v7400, %v7399
        %v7410 = vpack.c.b16 %v7402, %v7401
        %7419 = vmatprep.subr.bf16.mxu0 0
        %7420 = vmatpush1.bf16.msra.mxu0 %v7403
        %7421 = vmatprep.subr.bf16.mxu0 0
        %7422 = vmatpush1.bf16.msra.mxu0 %v7404
        %7423 = vmatprep.subr.bf16.mxu0 0
        %7424 = vmatpush1.bf16.msra.mxu0 %v7405
        %7425 = vmatprep.subr.bf16.mxu0 0
        %7426 = vmatpush1.bf16.msra.mxu0 %v7406
        %7427 = vmatprep.subr.bf16.mxu0 0
        %7428 = vmatpush1.bf16.msra.mxu0 %v7407
        %7429 = vmatprep.subr.bf16.mxu0 0
        %7430 = vmatpush1.bf16.msra.mxu0 %v7408
        %7431 = vmatprep.subr.bf16.mxu0 0
        %7432 = vmatpush1.bf16.msra.mxu0 %v7409
        %7433 = vmatprep.subr.bf16.mxu0 0
        %7434 = vmatpush1.bf16.msra.mxu0 %v7410
        %7435 = vmatprep.subr.bf16.mxu0 0
        %7436 = vmatpush1.bf16.msra.mxu0 0
        %7437 = vmatprep.subr.bf16.mxu0 0
        %7438 = vmatpush1.bf16.msra.mxu0 0
        %7439 = vmatprep.subr.bf16.mxu0 0
        %7440 = vmatpush1.bf16.msra.mxu0 0
        %7441 = vmatprep.subr.bf16.mxu0 0
        %7442 = vmatpush1.bf16.msra.mxu0 0
        %7443 = vmatprep.subr.bf16.mxu0 0
        %7444 = vmatpush1.bf16.msra.mxu0 0
        %7445 = vmatprep.subr.bf16.mxu0 0
        %7446 = vmatpush1.bf16.msra.mxu0 0
        %7447 = vmatprep.subr.bf16.mxu0 0
        %7448 = vmatpush1.bf16.msra.mxu0 0
        %7449 = vmatprep.subr.bf16.mxu0 0
        %7450 = vmatpush1.bf16.msra.mxu0 0
        %7451 = vmatprep.mubr.bf16.mxu0 0
        %7452 = vmatmul.mubr.bf16.gmra.mrb[0].mxu0 %v7339
        %v7453 = vpop.f32.mrb[0].mxu0
        %v7454 = vadd.f32 0.0, %v7453
        %v7455 = vpop.f32.mrb[0].mxu0
        %v7456 = vpop.f32.mrb[0].mxu0
        %v7457 = vadd.f32 0.0, %v7456
        %v7458 = vpop.f32.mrb[0].mxu0
        %7459 = vmatprep.mubr.bf16.mxu0 0
        %7460 = vmatmul.mubr.bf16.gmra.mrb[0].mxu0 %v7340
        %v7461 = vpop.f32.mrb[0].mxu0
        %v7462 = vadd.f32 0.0, %v7461
        %v7463 = vpop.f32.mrb[0].mxu0
        %v7464 = vpop.f32.mrb[0].mxu0
        %v7465 = vadd.f32 0.0, %v7464
        %v7466 = vpop.f32.mrb[0].mxu0
        %7467 = vmatprep.mubr.bf16.mxu0 0
        %7468 = vmatmul.mubr.bf16.gmra.mrb[0].mxu0 %v7341
        %v7469 = vpop.f32.mrb[0].mxu0
        %v7470 = vadd.f32 0.0, %v7469
        %v7471 = vpop.f32.mrb[0].mxu0
        %v7472 = vpop.f32.mrb[0].mxu0
        %v7473 = vadd.f32 0.0, %v7472
        %v7474 = vpop.f32.mrb[0].mxu0
        %7475 = vmatprep.mubr.bf16.mxu0 0
        %7476 = vmatmul.mubr.bf16.gmra.mrb[0].mxu0 %v7342
        %v7477 = vpop.f32.mrb[0].mxu0
        %v7478 = vadd.f32 0.0, %v7477
        %v7479 = vpop.f32.mrb[0].mxu0
        %v7480 = vpop.f32.mrb[0].mxu0
        %v7481 = vadd.f32 0.0, %v7480
        %v7482 = vpop.f32.mrb[0].mxu0
        %7483 = vmatprep.mubr.bf16.mxu0 0
        %7484 = vmatmul.mubr.bf16.gmra.mrb[0].mxu0 %v7343
        %v7485 = vpop.f32.mrb[0].mxu0
        %v7486 = vadd.f32 0.0, %v7485
        %v7487 = vpop.f32.mrb[0].mxu0
        %v7488 = vpop.f32.mrb[0].mxu0
        %v7489 = vadd.f32 0.0, %v7488
        %v7490 = vpop.f32.mrb[0].mxu0
        %7491 = vmatprep.mubr.bf16.mxu0 0
        %7492 = vmatmul.mubr.bf16.gmra.mrb[0].mxu0 %v7344
        %v7493 = vpop.f32.mrb[0].mxu0
        %v7494 = vadd.f32 0.0, %v7493
        %v7495 = vpop.f32.mrb[0].mxu0
        %v7496 = vpop.f32.mrb[0].mxu0
        %v7497 = vadd.f32 0.0, %v7496
        %v7498 = vpop.f32.mrb[0].mxu0
        %7499 = vmatprep.mubr.bf16.mxu0 0
        %7500 = vmatmul.mubr.bf16.gmra.mrb[0].mxu0 %v7345
        %v7501 = vpop.f32.mrb[0].mxu0
        %v7502 = vadd.f32 0.0, %v7501
        %v7503 = vpop.f32.mrb[0].mxu0
        %v7504 = vpop.f32.mrb[0].mxu0
        %v7505 = vadd.f32 0.0, %v7504
        %v7506 = vpop.f32.mrb[0].mxu0
        %7507 = vmatprep.mubr.bf16.mxu0 0
        %7508 = vmatmul.mubr.bf16.gmra.mrb[0].mxu0 %v7346
        %v7509 = vpop.f32.mrb[0].mxu0
        %v7510 = vadd.f32 0.0, %v7509
        %v7511 = vpop.f32.mrb[0].mxu0
        %v7512 = vpop.f32.mrb[0].mxu0
        %v7513 = vadd.f32 0.0, %v7512
        %v7514 = vpop.f32.mrb[0].mxu0
        %7515 = vmatprep.mubr.bf16.mxu0 0
        %7516 = vmatmul.mubr.bf16.gmra.mrb[0].mxu0 %v7347
        %v7517 = vpop.f32.mrb[0].mxu0
        %v7518 = vadd.f32 0.0, %v7517
        %v7519 = vpop.f32.mrb[0].mxu0
        %v7520 = vpop.f32.mrb[0].mxu0
        %v7521 = vadd.f32 0.0, %v7520
        %v7522 = vpop.f32.mrb[0].mxu0
        %7523 = vmatprep.mubr.bf16.mxu0 0
        %7524 = vmatmul.mubr.bf16.gmra.mrb[0].mxu0 %v7348
        %v7525 = vpop.f32.mrb[0].mxu0
        %v7526 = vadd.f32 0.0, %v7525
        %v7527 = vpop.f32.mrb[0].mxu0
        %v7528 = vpop.f32.mrb[0].mxu0
        %v7529 = vadd.f32 0.0, %v7528
        %v7530 = vpop.f32.mrb[0].mxu0
        %7531 = vmatprep.mubr.bf16.mxu0 0
        %7532 = vmatmul.mubr.bf16.gmra.mrb[0].mxu0 %v7349
        %v7533 = vpop.f32.mrb[0].mxu0
        %v7534 = vadd.f32 0.0, %v7533
        %v7535 = vpop.f32.mrb[0].mxu0
        %v7536 = vpop.f32.mrb[0].mxu0
        %v7537 = vadd.f32 0.0, %v7536
        %v7538 = vpop.f32.mrb[0].mxu0
        %7539 = vmatprep.mubr.bf16.mxu0 0
        %7540 = vmatmul.mubr.bf16.gmra.mrb[0].mxu0 %v7350
        %v7541 = vpop.f32.mrb[0].mxu0
        %v7542 = vadd.f32 0.0, %v7541
        %v7543 = vpop.f32.mrb[0].mxu0
        %v7544 = vpop.f32.mrb[0].mxu0
        %v7545 = vadd.f32 0.0, %v7544
        %v7546 = vpop.f32.mrb[0].mxu0
        %7547 = vmatprep.mubr.bf16.mxu0 0
        %7548 = vmatmul.mubr.bf16.gmra.mrb[0].mxu0 %v7351
        %v7549 = vpop.f32.mrb[0].mxu0
        %v7550 = vadd.f32 0.0, %v7549
        %v7551 = vpop.f32.mrb[0].mxu0
        %v7552 = vpop.f32.mrb[0].mxu0
        %v7553 = vadd.f32 0.0, %v7552
        %v7554 = vpop.f32.mrb[0].mxu0
        %7555 = vmatprep.mubr.bf16.mxu0 0
        %7556 = vmatmul.mubr.bf16.gmra.mrb[0].mxu0 %v7352
        %v7557 = vpop.f32.mrb[0].mxu0
        %v7558 = vadd.f32 0.0, %v7557
        %v7559 = vpop.f32.mrb[0].mxu0
        %v7560 = vpop.f32.mrb[0].mxu0
        %v7561 = vadd.f32 0.0, %v7560
        %v7562 = vpop.f32.mrb[0].mxu0
        %7563 = vmatprep.mubr.bf16.mxu0 0
        %7564 = vmatmul.mubr.bf16.gmra.mrb[0].mxu0 %v7353
        %v7565 = vpop.f32.mrb[0].mxu0
        %v7566 = vadd.f32 0.0, %v7565
        %v7567 = vpop.f32.mrb[0].mxu0
        %v7568 = vpop.f32.mrb[0].mxu0
        %v7569 = vadd.f32 0.0, %v7568
        %v7570 = vpop.f32.mrb[0].mxu0
        %7571 = vmatprep.mubr.bf16.mxu0 0
        %7572 = vmatmul.mubr.bf16.gmra.mrb[0].mxu0 %v7354
        %v7573 = vpop.f32.mrb[0].mxu0
        %v7574 = vadd.f32 0.0, %v7573
        %v7575 = vpop.f32.mrb[0].mxu0
        %v7576 = vpop.f32.mrb[0].mxu0
        %v7577 = vadd.f32 0.0, %v7576
        %v7578 = vpop.f32.mrb[0].mxu0
        %7579 = vdwg.mxu0
        %v7580 = vld [vmem:[%s6] sm:$0x1]
        %v7581 = vlaneseq
        %v7582 = vshrl.u32 %v7581, 7
        %v7583 = vsub.s32 0, %v7582
        %v7584 = vrot.slane %v7580, %v7583
        %v7585 = vmul.f32 %v7454, %v7584
        %v7586 = vmul.f32 %v7457, %v7584
        %v7587 = vmul.f32 %v7462, %v7584
        %v7588 = vmul.f32 %v7465, %v7584
        %v7589 = vmul.f32 %v7470, %v7584
        %v7590 = vmul.f32 %v7473, %v7584
        %v7591 = vmul.f32 %v7478, %v7584
        %v7592 = vmul.f32 %v7481, %v7584
        %v7593 = vmul.f32 %v7486, %v7584
        %v7594 = vmul.f32 %v7489, %v7584
        %v7595 = vmul.f32 %v7494, %v7584
        %v7596 = vmul.f32 %v7497, %v7584
        %v7597 = vmul.f32 %v7502, %v7584
        %v7598 = vmul.f32 %v7505, %v7584
        %v7599 = vmul.f32 %v7510, %v7584
        %v7600 = vmul.f32 %v7513, %v7584
        %v7601 = vmul.f32 %v7518, %v7584
        %v7602 = vmul.f32 %v7521, %v7584
        %v7603 = vmul.f32 %v7526, %v7584
        %v7604 = vmul.f32 %v7529, %v7584
        %v7605 = vmul.f32 %v7534, %v7584
        %v7606 = vmul.f32 %v7537, %v7584
        %v7607 = vmul.f32 %v7542, %v7584
        %v7608 = vmul.f32 %v7545, %v7584
        %v7609 = vmul.f32 %v7550, %v7584
        %v7610 = vmul.f32 %v7553, %v7584
        %v7611 = vmul.f32 %v7558, %v7584
        %v7612 = vmul.f32 %v7561, %v7584
        %v7613 = vmul.f32 %v7566, %v7584
        %v7614 = vmul.f32 %v7569, %v7584
        %v7615 = vmul.f32 %v7574, %v7584
        %v7616 = vmul.f32 %v7577, %v7584
        %v7617 = vld [vmem:[%s6 + $0x1] sm:$0x1]
        %v7618 = vlaneseq
        %v7619 = vshrl.u32 %v7618, 7
        %v7620 = vsub.s32 0, %v7619
        %v7621 = vrot.slane %v7617, %v7620
        %v7622 = vadd.f32 %v7585, %v7621
        %v7623 = vadd.f32 %v7586, %v7621
        %v7624 = vadd.f32 %v7587, %v7621
        %v7625 = vadd.f32 %v7588, %v7621
        %v7626 = vadd.f32 %v7589, %v7621
        %v7627 = vadd.f32 %v7590, %v7621
        %v7628 = vadd.f32 %v7591, %v7621
        %v7629 = vadd.f32 %v7592, %v7621
        %v7630 = vadd.f32 %v7593, %v7621
        %v7631 = vadd.f32 %v7594, %v7621
        %v7632 = vadd.f32 %v7595, %v7621
        %v7633 = vadd.f32 %v7596, %v7621
        %v7634 = vadd.f32 %v7597, %v7621
        %v7635 = vadd.f32 %v7598, %v7621
        %v7636 = vadd.f32 %v7599, %v7621
        %v7637 = vadd.f32 %v7600, %v7621
        %v7638 = vadd.f32 %v7601, %v7621
        %v7639 = vadd.f32 %v7602, %v7621
        %v7640 = vadd.f32 %v7603, %v7621
        %v7641 = vadd.f32 %v7604, %v7621
        %v7642 = vadd.f32 %v7605, %v7621
        %v7643 = vadd.f32 %v7606, %v7621
        %v7644 = vadd.f32 %v7607, %v7621
        %v7645 = vadd.f32 %v7608, %v7621
        %v7646 = vadd.f32 %v7609, %v7621
        %v7647 = vadd.f32 %v7610, %v7621
        %v7648 = vadd.f32 %v7611, %v7621
        %v7649 = vadd.f32 %v7612, %v7621
        %v7650 = vadd.f32 %v7613, %v7621
        %v7651 = vadd.f32 %v7614, %v7621
        %v7652 = vadd.f32 %v7615, %v7621
        %v7653 = vadd.f32 %v7616, %v7621
        %v7654 = vadd.f32 %v6824, %v7622
        %v7655 = vadd.f32 %v6825, %v7623
        %v7656 = vadd.f32 %v6826, %v7624
        %v7657 = vadd.f32 %v6827, %v7625
        %v7658 = vadd.f32 %v6828, %v7626
        %v7659 = vadd.f32 %v6829, %v7627
        %v7660 = vadd.f32 %v6830, %v7628
        %v7661 = vadd.f32 %v6831, %v7629
        %v7662 = vadd.f32 %v6832, %v7630
        %v7663 = vadd.f32 %v6833, %v7631
        %v7664 = vadd.f32 %v6834, %v7632
        %v7665 = vadd.f32 %v6835, %v7633
        %v7666 = vadd.f32 %v6836, %v7634
        %v7667 = vadd.f32 %v6837, %v7635
        %v7668 = vadd.f32 %v6838, %v7636
        %v7669 = vadd.f32 %v6839, %v7637
        %v7670 = vadd.f32 %v6840, %v7638
        %v7671 = vadd.f32 %v6841, %v7639
        %v7672 = vadd.f32 %v6842, %v7640
        %v7673 = vadd.f32 %v6843, %v7641
        %v7674 = vadd.f32 %v6844, %v7642
        %v7675 = vadd.f32 %v6845, %v7643
        %v7676 = vadd.f32 %v6846, %v7644
        %v7677 = vadd.f32 %v6847, %v7645
        %v7678 = vadd.f32 %v6848, %v7646
        %v7679 = vadd.f32 %v6849, %v7647
        %v7680 = vadd.f32 %v6850, %v7648
        %v7681 = vadd.f32 %v6851, %v7649
        %v7682 = vadd.f32 %v6852, %v7650
        %v7683 = vadd.f32 %v6853, %v7651
        %v7684 = vadd.f32 %v6854, %v7652
        %v7685 = vadd.f32 %v6855, %v7653
        %v7686 = vmax.f32 %v7654, 0.0
        %v7687 = vmax.f32 %v7655, 0.0
        %v7688 = vmax.f32 %v7656, 0.0
        %v7689 = vmax.f32 %v7657, 0.0
        %v7690 = vmax.f32 %v7658, 0.0
        %v7691 = vmax.f32 %v7659, 0.0
        %v7692 = vmax.f32 %v7660, 0.0
        %v7693 = vmax.f32 %v7661, 0.0
        %v7694 = vmax.f32 %v7662, 0.0
        %v7695 = vmax.f32 %v7663, 0.0
        %v7696 = vmax.f32 %v7664, 0.0
        %v7697 = vmax.f32 %v7665, 0.0
        %v7698 = vmax.f32 %v7666, 0.0
        %v7699 = vmax.f32 %v7667, 0.0
        %v7700 = vmax.f32 %v7668, 0.0
        %v7701 = vmax.f32 %v7669, 0.0
        %v7702 = vmax.f32 %v7670, 0.0
        %v7703 = vmax.f32 %v7671, 0.0
        %v7704 = vmax.f32 %v7672, 0.0
        %v7705 = vmax.f32 %v7673, 0.0
        %v7706 = vmax.f32 %v7674, 0.0
        %v7707 = vmax.f32 %v7675, 0.0
        %v7708 = vmax.f32 %v7676, 0.0
        %v7709 = vmax.f32 %v7677, 0.0
        %v7710 = vmax.f32 %v7678, 0.0
        %v7711 = vmax.f32 %v7679, 0.0
        %v7712 = vmax.f32 %v7680, 0.0
        %v7713 = vmax.f32 %v7681, 0.0
        %v7714 = vmax.f32 %v7682, 0.0
        %v7715 = vmax.f32 %v7683, 0.0
        %v7716 = vmax.f32 %v7684, 0.0
        %v7717 = vmax.f32 %v7685, 0.0
        %7718 = vst [vmem:[%s286] sm:$0xff] %v7686
        %7719 = vst [vmem:[%s286 + $0x8] sm:$0xff] %v7687
        %7720 = vst [vmem:[%s286 + $0x10] sm:$0xff] %v7688
        %7721 = vst [vmem:[%s286 + $0x18] sm:$0xff] %v7689
        %7722 = vst [vmem:[%s286 + $0x20] sm:$0xff] %v7690
        %7723 = vst [vmem:[%s286 + $0x28] sm:$0xff] %v7691
        %7724 = vst [vmem:[%s286 + $0x30] sm:$0xff] %v7692
        %7725 = vst [vmem:[%s286 + $0x38] sm:$0xff] %v7693
        %7726 = vst [vmem:[%s286 + $0x40] sm:$0xff] %v7694
        %7727 = vst [vmem:[%s286 + $0x48] sm:$0xff] %v7695
        %7728 = vst [vmem:[%s286 + $0x50] sm:$0xff] %v7696
        %7729 = vst [vmem:[%s286 + $0x58] sm:$0xff] %v7697
        %7730 = vst [vmem:[%s286 + $0x60] sm:$0xff] %v7698
        %7731 = vst [vmem:[%s286 + $0x68] sm:$0xff] %v7699
        %7732 = vst [vmem:[%s286 + $0x70] sm:$0xff] %v7700
        %7733 = vst [vmem:[%s286 + $0x78] sm:$0xff] %v7701
        %7734 = vst [vmem:[%s286 + $0x80] sm:$0xff] %v7702
        %7735 = vst [vmem:[%s286 + $0x88] sm:$0xff] %v7703
        %7736 = vst [vmem:[%s286 + $0x90] sm:$0xff] %v7704
        %7737 = vst [vmem:[%s286 + $0x98] sm:$0xff] %v7705
        %7738 = vst [vmem:[%s286 + $0xa0] sm:$0xff] %v7706
        %7739 = vst [vmem:[%s286 + $0xa8] sm:$0xff] %v7707
        %7740 = vst [vmem:[%s286 + $0xb0] sm:$0xff] %v7708
        %7741 = vst [vmem:[%s286 + $0xb8] sm:$0xff] %v7709
        %7742 = vst [vmem:[%s286 + $0xc0] sm:$0xff] %v7710
        %7743 = vst [vmem:[%s286 + $0xc8] sm:$0xff] %v7711
        %7744 = vst [vmem:[%s286 + $0xd0] sm:$0xff] %v7712
        %7745 = vst [vmem:[%s286 + $0xd8] sm:$0xff] %v7713
        %7746 = vst [vmem:[%s286 + $0xe0] sm:$0xff] %v7714
        %7747 = vst [vmem:[%s286 + $0xe8] sm:$0xff] %v7715
        %7748 = vst [vmem:[%s286 + $0xf0] sm:$0xff] %v7716
        %7749 = vst [vmem:[%s286 + $0xf8] sm:$0xff] %v7717
        %s7750 = sand.u32 %s182, 1
        %s7751 = scalar_lea.sflag [#allocation5], %s7750
        %s7752 = sand.u32 %s182, 1
        %s7753 = smul.addr %s7752, 256
        %s7754 = scalar_lea.vmem [#allocation6], %s7753
        // Predicated region
        $region53: #{tpu_custom_call.1} parent=47 // pred_check
          %p7755 = pneg %p192
        $region54: #{tpu_custom_call.1} parent=47 // pred_check_branch
          %7757 = sbr.rel (%p7755) target = $region56
        $region55: #{tpu_custom_call.1} parent=47 // pred_region
          %s7759 = ssub.s32 4096, 4096
          %7760 = vsyncadd %s7751, %s7759
          %s7761 = smul.addr %s22, 32
          %s7762 = smul.addr %s7761, 128
          %s7763 = scalar_lea.hbm %s7, %s7762
          %s7764 = sshll.u32 %s7754, 4
          %s7765 = int_to_ptr.vmem [resolvable:$true] %s7764
          %7770 = dma.vmem_to_hbm [thread:$0]  %s7765, 4096, %s7763, %s7751, 128, 128, 8
        $region56: #{tpu_custom_call.1} parent=47 // pred_fallthru
          _
      $region48: #{tpu_custom_call.1} parent=5 // pred_fallthru
        _
      %p7771 = scmp.le.s32.totalorder 2, %s17
      // Predicated region
      $region57: #{tpu_custom_call.1} parent=5 // pred_check
        %p7772 = pneg %p7771
      $region58: #{tpu_custom_call.1} parent=5 // pred_check_branch
        %7774 = sbr.rel (%p7772) target = $region60
      $region59: #{tpu_custom_call.1} parent=5 // pred_region
        %s7775 = ssub.s32 %s17, 2
        // Predicated region
        $region61: #{tpu_custom_call.1} parent=59 // pred_check
          %p7776 = pneg %p198
        $region62: #{tpu_custom_call.1} parent=59 // pred_check_branch
          %7778 = sbr.rel (%p7776) target = $region64
        $region63: #{tpu_custom_call.1} parent=59 // pred_region
          %s7779 = sand.u32 %s183, 1
          %s7780 = scalar_lea.sflag [#allocation5], %s7779
          %s7781 = sand.u32 %s183, 1
          %s7782 = smul.addr %s7781, 256
          %s7783 = scalar_lea.vmem [#allocation6], %s7782
          %7784 = dma.done %s7780, 4096
        $region64: #{tpu_custom_call.1} parent=59 // pred_fallthru
          _
      $region60: #{tpu_custom_call.1} parent=5 // pred_fallthru
        _
    $region6: #{tpu_custom_call.1} parent=1 // loop_footer
      %s21 = sadd.s32 1, %s17
    $region7: #{tpu_custom_call.1} parent=1 // loop_footer_branch
      %16 = sbr.rel target = $region3
    $region8: #{tpu_custom_call.1} parent=1 // loop_exit
      _
    %7785 = vsyncpa [#allocation4], 1
    %s7786 = scalar_lea.sflag [#allocation4], 1
    %7787 = vsyncpa %s7786, 1
    %7788 = vsyncpa [#allocation5], 1
    %s7789 = scalar_lea.sflag [#allocation5], 1
    %7790 = vsyncpa %s7789, 1

</llo_original>
